<compile_context>
chip_gen: v7x
topology: tpu7x:2x2x1
jax: 0.10.0
libtpu: 0.0.40
codegen_flags: <defaults>
</compile_context>

<pallas_src>
import functools

import jax
import jax.numpy as jnp
from jax.experimental import pallas as pl
from jax.experimental.pallas import tpu as pltpu

_LANE = 128


def _round_up(x, m):
    return (x + m - 1) // m * m


def _fold_bn(w_hwio, bn, eps=1e-5):
    """Fold eval-mode BatchNorm into conv weights (all math in f32)."""
    scale = bn["gamma"] / jnp.sqrt(bn["var"] + eps)          # (C_out,)
    w = w_hwio * scale                                       # broadcast on last dim
    b = bn["beta"] - bn["mean"] * scale
    return w, b


def _basic_block_kernel(*refs, has_ds, Ho, Wo):
    if has_ds:
        (x_ref, w1_ref, b1_ref, w2_ref, b2_ref,
         ws_ref, bs_ref, o_ref, mid_ref) = refs
    else:
        (x_ref, w1_ref, b1_ref, w2_ref, b2_ref, o_ref, mid_ref) = refs
        ws_ref = bs_ref = None

    f32 = jnp.float32
    cop = o_ref.shape[-1]

    def im2col(src):
        # src: (Ho+2, Wo+2, C) value.  Pack the 9 taps along the contraction
        # (lane) axis -> one lane-dense (Ho*Wo, 9*C) operand, so each conv is a
        # single MXU matmul (accumulation happens in the MXU result path, not
        # on the VALU).  The dx=1/2 slices are sublane-shifted copies; a
        # pltpu.roll-based shift (XLU slot) is a possible further micro-opt.
        cols = [src[dy:dy + Ho, dx:dx + Wo, :]
                for dy in range(3) for dx in range(3)]
        patch = jnp.concatenate(cols, axis=-1)               # (Ho, Wo, 9*C)
        return patch.reshape(Ho * Wo, patch.shape[-1])

    # ---- conv1 (3x3, pad 1) + folded BN1 + ReLU: one bf16 MXU matmul -------
    x = x_ref[...]                                           # (Ho+2, Wo+2, Cip) bf16
    h1 = jnp.dot(im2col(x), w1_ref[...], preferred_element_type=f32)
    h1 = jnp.maximum(h1 + b1_ref[...], 0.0)                  # f32 bias, f32 acc

    # Stage into the padded VMEM scratch.  Re-zero the 1-pixel border every
    # grid step (NOT only at program_id==0): no cross-iteration scratch
    # dependence, so a "parallel" batch axis sharded across two TensorCores
    # (v7x megacore) stays correct.  Cost ~2*(Ho+Wo+2)*Cop elements.
    mdt = mid_ref.dtype
    mid_ref[1:Ho + 1, 1:Wo + 1, :] = h1.reshape(Ho, Wo, cop).astype(mdt)
    zrow = jnp.zeros((1, Wo + 2, cop), mdt)
    mid_ref[0:1, :, :] = zrow
    mid_ref[Ho + 1:Ho + 2, :, :] = zrow
    zcol = jnp.zeros((Ho + 2, 1, cop), mdt)
    mid_ref[:, 0:1, :] = zcol
    mid_ref[:, Wo + 1:Wo + 2, :] = zcol

    # ---- conv2 (3x3, pad 1, stride 1) + folded BN2: one bf16 MXU matmul ----
    acc2 = jnp.dot(im2col(mid_ref[...]), w2_ref[...], preferred_element_type=f32)
    acc2 = acc2 + b2_ref[...]

    # ---- shortcut (identity, or 1x1 conv + folded BN), add, final ReLU -----
    res_in = x[1:Ho + 1, 1:Wo + 1, :].reshape(Ho * Wo, -1)
    if has_ds:
        res = (jnp.dot(res_in, ws_ref[...], preferred_element_type=f32)
               + bs_ref[...])
    else:
        res = res_in.astype(f32)          # identity: Cin == Cout, stride == 1

    out = jnp.maximum(acc2 + res, 0.0)
    o_ref[...] = out.reshape(Ho, Wo, cop).astype(o_ref.dtype)


def _const_block_spec(shape):
    # Grid-invariant blocks (folded conv weights / biases): constant index_map
    # plus single buffering, so production 256/512-channel stages don't
    # double-buffer megabytes of weights (matters under v7x's 64 MiB VMEM).
    ndims = len(shape)
    return pl.BlockSpec(shape, lambda *_: (0,) * ndims,
                        pipeline_mode=pl.Buffered(1))


@functools.partial(jax.jit, static_argnames=("stride",))
def basic_block_pallas(x_nchw, params, stride=1):
    eps = 1e-5
    if stride != 1:
        # TODO(synk): stride>1 needs a wrapper-side space-to-depth pre-gather
        # (one relayout per image) instead of in-kernel strided reads.
        raise NotImplementedError("BasicBlock Pallas kernel: stride > 1 not implemented")

    N, Cin, H, W = x_nchw.shape
    Cout = params["conv1_w"].shape[0]
    has_ds = "conv_s_w" in params
    Ho, Wo = H, W
    Cip = _round_up(Cin, _LANE)
    Cop = _round_up(Cout, _LANE)
    bf16 = jnp.bfloat16

    # NCHW -> NHWC once at the jit boundary; pad channels to the lane width,
    # pad the spatial border by 1 (conv1 "padding=1"), cast activations to
    # bf16 (MXU operands; accumulation stays f32 inside the kernel).
    x = jnp.transpose(x_nchw, (0, 2, 3, 1))
    x = jnp.pad(x, ((0, 0), (1, 1), (1, 1), (0, Cip - Cin))).astype(bf16)

    def prep_conv3x3(w_oihw, bn, cin_p, cout_p):
        w = jnp.transpose(w_oihw, (2, 3, 1, 0))              # OIHW -> HWIO
        w, b = _fold_bn(w, bn, eps)                          # fold BN in f32
        cout, cin = w_oihw.shape[0], w_oihw.shape[1]
        w = jnp.pad(w, ((0, 0), (0, 0), (0, cin_p - cin), (0, cout_p - cout)))
        # Taps packed along the contraction dim (matches the kernel's im2col
        # concat order: dy-major, dx, then cin): (3,3,Cin_p,Cout_p) -> (9*Cin_p, Cout_p).
        w = w.reshape(9 * cin_p, cout_p).astype(bf16)
        b = jnp.pad(b, (0, cout_p - cout)).reshape(1, cout_p)   # bias stays f32
        return w, b

    w1, b1 = prep_conv3x3(params["conv1_w"], params["bn1"], Cip, Cop)
    w2, b2 = prep_conv3x3(params["conv2_w"], params["bn2"], Cop, Cop)

    inputs = [x, w1, b1, w2, b2]
    in_specs = [
        pl.BlockSpec((None, H + 2, W + 2, Cip), lambda n: (n, 0, 0, 0)),
        _const_block_spec((9 * Cip, Cop)),
        _const_block_spec((1, Cop)),
        _const_block_spec((9 * Cop, Cop)),
        _const_block_spec((1, Cop)),
    ]
    if has_ds:
        ws = jnp.transpose(params["conv_s_w"], (2, 3, 1, 0))     # (1,1,Cin,Cout)
        ws, bs = _fold_bn(ws, params["bn_s"], eps)
        ws = jnp.pad(ws, ((0, 0), (0, 0), (0, Cip - Cin), (0, Cop - Cout)))
        inputs += [ws.reshape(Cip, Cop).astype(bf16),
                   jnp.pad(bs, (0, Cop - Cout)).reshape(1, Cop)]
        in_specs += [_const_block_spec((Cip, Cop)),
                     _const_block_spec((1, Cop))]

    kernel = functools.partial(_basic_block_kernel, has_ds=has_ds, Ho=Ho, Wo=Wo)
    out = pl.pallas_call(
        kernel,
        out_shape=jax.ShapeDtypeStruct((N, Ho, Wo, Cop), x_nchw.dtype),
        grid_spec=pltpu.PrefetchScalarGridSpec(
            num_scalar_prefetch=0,
            grid=(N,),
            in_specs=in_specs,
            out_specs=pl.BlockSpec((None, Ho, Wo, Cop), lambda n: (n, 0, 0, 0)),
            # bf16 staging scratch for the conv1->conv2 activation.
            scratch_shapes=[pltpu.VMEM((Ho + 2, Wo + 2, Cop), jnp.bfloat16)],
        ),
        compiler_params=pltpu.CompilerParams(
            dimension_semantics=("parallel",),
            # Raise for production channel counts / H row-tiling (v5e/v6e have
            # 128 MiB physical VMEM); keep headroom on v7x's 64 MiB.
            vmem_limit_bytes=32 * 1024 * 1024,
        ),
    )(*inputs)

    out = out[..., :Cout]                         # drop lane padding
    return jnp.transpose(out, (0, 3, 1, 2))       # NHWC -> NCHW at the boundary


# ----------------------------- reference & demo -----------------------------

def init_basic_block_params(key, in_channels, out_channels, stride=1):
    ks = jax.random.split(key, 12)

    def conv_w(k, cout, cin, ksz):
        fan_in = cin * ksz * ksz
        return jax.random.normal(k, (cout, cin, ksz, ksz), jnp.float32) / jnp.sqrt(fan_in)

    def bn(k, c):
        kk = jax.random.split(k, 4)
        return dict(
            gamma=jax.random.uniform(kk[0], (c,), jnp.float32, 0.5, 1.5),
            beta=0.1 * jax.random.normal(kk[1], (c,), jnp.float32),
            mean=0.1 * jax.random.normal(kk[2], (c,), jnp.float32),
            var=jax.random.uniform(kk[3], (c,), jnp.float32, 0.5, 1.5),
        )

    p = {
        "conv1_w": conv_w(ks[0], out_channels, in_channels, 3),
        "bn1": bn(ks[1], out_channels),
        "conv2_w": conv_w(ks[2], out_channels, out_channels, 3),
        "bn2": bn(ks[3], out_channels),
    }
    if stride != 1 or in_channels != out_channels:
        p["conv_s_w"] = conv_w(ks[4], out_channels, in_channels, 1)
        p["bn_s"] = bn(ks[5], out_channels)
    return p


def basic_block_reference(x, p, stride=1, eps=1e-5):
    dn = ("NCHW", "OIHW", "NCHW")
    hp = jax.lax.Precision.HIGHEST

    def conv(x, w, s, pad):
        return jax.lax.conv_general_dilated(
            x, w, (s, s), ((pad, pad), (pad, pad)),
            dimension_numbers=dn, precision=hp)

    def bn(x, b):
        rs = lambda a: a[None, :, None, None]
        return (x - rs(b["mean"])) * rs(b["gamma"] / jnp.sqrt(b["var"] + eps)) + rs(b["beta"])

    out = jax.nn.relu(bn(conv(x, p["conv1_w"], stride, 1), p["bn1"]))
    out = bn(conv(out, p["conv2_w"], 1, 1), p["bn2"])
    if "conv_s_w" in p:
        sc = bn(conv(x, p["conv_s_w"], stride, 0), p["bn_s"])
    else:
        sc = x
    return jax.nn.relu(out + sc)


if __name__ == "__main__":
    key = jax.random.PRNGKey(0)
    kx, kp1, kp2 = jax.random.split(key, 3)

    x = jax.random.normal(kx, (2, 4, 16, 16), jnp.float32)

    # Case 1: identity shortcut (in == out, stride == 1).
    p1 = init_basic_block_params(kp1, 4, 4, stride=1)
    y1 = jax.block_until_ready(basic_block_pallas(x, p1, stride=1))
    r1 = jax.block_until_ready(basic_block_reference(x, p1, stride=1))
    assert y1.shape == r1.shape, (y1.shape, r1.shape)
    err1 = float(jnp.max(jnp.abs(y1 - r1)))
    tol1 = 5e-2 * (float(jnp.max(jnp.abs(r1))) + 1.0)   # bf16-operand tolerance

    # Case 2: projection shortcut (channel change -> 1x1 conv + BN residual).
    p2 = init_basic_block_params(kp2, 4, 8, stride=1)
    y2 = jax.block_until_ready(basic_block_pallas(x, p2, stride=1))
    r2 = jax.block_until_ready(basic_block_reference(x, p2, stride=1))
    assert y2.shape == r2.shape, (y2.shape, r2.shape)
    err2 = float(jnp.max(jnp.abs(y2 - r2)))
    tol2 = 5e-2 * (float(jnp.max(jnp.abs(r2))) + 1.0)

    assert err1 < tol1, (err1, tol1)
    assert err2 < tol2, (err2, tol2)
    print("KERNEL_OK")
</pallas_src>

<mosaic_0001>
module attributes {stable_mosaic.version = 11 : i64} {
  func.func @_basic_block_kernel(%arg0: i32, %arg1: memref<1x18x18x128xbf16, #tpu.memory_space<vmem>>, %arg2: memref<1152x128xbf16, #tpu.memory_space<vmem>>, %arg3: memref<1x128xf32, #tpu.memory_space<vmem>>, %arg4: memref<1152x128xbf16, #tpu.memory_space<vmem>>, %arg5: memref<1x128xf32, #tpu.memory_space<vmem>>, %arg6: memref<1x16x16x128xf32, #tpu.memory_space<vmem>>, %arg7: memref<18x18x128xbf16, #tpu.memory_space<vmem>>) attributes {dimension_semantics = [#tpu.dimension_semantics<parallel>], iteration_bounds = array<i64: 2>, scalar_prefetch = 0 : i64, scratch_operands = 1 : i64, tpu.core_type = #tpu.core_type<tc>, window_params = [{transform_indices = @transform_0, window_bounds = array<i64: 1, 18, 18, 128>}, {pipeline_mode = #tpu.pipeline_mode<synchronous>, transform_indices = @transform_1, window_bounds = array<i64: 1152, 128>}, {pipeline_mode = #tpu.pipeline_mode<synchronous>, transform_indices = @transform_2, window_bounds = array<i64: 1, 128>}, {pipeline_mode = #tpu.pipeline_mode<synchronous>, transform_indices = @transform_3, window_bounds = array<i64: 1152, 128>}, {pipeline_mode = #tpu.pipeline_mode<synchronous>, transform_indices = @transform_4, window_bounds = array<i64: 1, 128>}, {transform_indices = @transform_5, window_bounds = array<i64: 1, 16, 16, 128>}]} {
    %c0 = arith.constant 0 : index
    %c0_0 = arith.constant 0 : index
    %c0_1 = arith.constant 0 : index
    %c0_2 = arith.constant 0 : index
    %0 = vector.load %arg1[%c0, %c0_0, %c0_1, %c0_2] : memref<1x18x18x128xbf16, #tpu.memory_space<vmem>>, vector<1x18x18x128xbf16>
    %1 = vector.shape_cast %0 : vector<1x18x18x128xbf16> to vector<18x18x128xbf16>
    %2 = vector.extract_strided_slice %1 {offsets = [0, 0, 0], sizes = [16, 16, 128], strides = [1, 1, 1]} : vector<18x18x128xbf16> to vector<16x16x128xbf16>
    %3 = vector.extract_strided_slice %1 {offsets = [0, 1, 0], sizes = [16, 16, 128], strides = [1, 1, 1]} : vector<18x18x128xbf16> to vector<16x16x128xbf16>
    %4 = vector.extract_strided_slice %1 {offsets = [0, 2, 0], sizes = [16, 16, 128], strides = [1, 1, 1]} : vector<18x18x128xbf16> to vector<16x16x128xbf16>
    %5 = vector.extract_strided_slice %1 {offsets = [1, 0, 0], sizes = [16, 16, 128], strides = [1, 1, 1]} : vector<18x18x128xbf16> to vector<16x16x128xbf16>
    %6 = vector.extract_strided_slice %1 {offsets = [1, 1, 0], sizes = [16, 16, 128], strides = [1, 1, 1]} : vector<18x18x128xbf16> to vector<16x16x128xbf16>
    %7 = vector.extract_strided_slice %1 {offsets = [1, 2, 0], sizes = [16, 16, 128], strides = [1, 1, 1]} : vector<18x18x128xbf16> to vector<16x16x128xbf16>
    %8 = vector.extract_strided_slice %1 {offsets = [2, 0, 0], sizes = [16, 16, 128], strides = [1, 1, 1]} : vector<18x18x128xbf16> to vector<16x16x128xbf16>
    %9 = vector.extract_strided_slice %1 {offsets = [2, 1, 0], sizes = [16, 16, 128], strides = [1, 1, 1]} : vector<18x18x128xbf16> to vector<16x16x128xbf16>
    %10 = vector.extract_strided_slice %1 {offsets = [2, 2, 0], sizes = [16, 16, 128], strides = [1, 1, 1]} : vector<18x18x128xbf16> to vector<16x16x128xbf16>
    %11 = tpu.concatenate %2, %3, %4, %5, %6, %7, %8, %9, %10 in 2 : vector<16x16x128xbf16>, vector<16x16x128xbf16>, vector<16x16x128xbf16>, vector<16x16x128xbf16>, vector<16x16x128xbf16>, vector<16x16x128xbf16>, vector<16x16x128xbf16>, vector<16x16x128xbf16>, vector<16x16x128xbf16> -> vector<16x16x1152xbf16>
    %12 = vector.shape_cast %11 : vector<16x16x1152xbf16> to vector<256x1152xbf16>
    %c0_3 = arith.constant 0 : index
    %c0_4 = arith.constant 0 : index
    %13 = vector.load %arg2[%c0_3, %c0_4] : memref<1152x128xbf16, #tpu.memory_space<vmem>>, vector<1152x128xbf16>
    %cst = arith.constant dense<0.000000e+00> : vector<256x128xf32>
    %14 = tpu.matmul %12, %13, %cst {dimension_numbers = #tpu.dot_dimension_numbers<[1], [0], [0], [1], [0, 0, 1, 1], [], []>} : vector<256x1152xbf16>, vector<1152x128xbf16>, vector<256x128xf32> -> vector<256x128xf32>
    %c0_5 = arith.constant 0 : index
    %c0_6 = arith.constant 0 : index
    %15 = vector.load %arg3[%c0_5, %c0_6] : memref<1x128xf32, #tpu.memory_space<vmem>>, vector<1x128xf32>
    %16 = vector.broadcast %15 : vector<1x128xf32> to vector<256x128xf32>
    %17 = arith.addf %14, %16 : vector<256x128xf32>
    %cst_7 = arith.constant 0.000000e+00 : f32
    %18 = vector.broadcast %cst_7 : f32 to vector<256x128xf32>
    %19 = arith.maximumf %17, %18 : vector<256x128xf32>
    %20 = vector.shape_cast %19 : vector<256x128xf32> to vector<16x16x128xf32>
    %21 = arith.truncf %20 : vector<16x16x128xf32> to vector<16x16x128xbf16>
    %c1 = arith.constant 1 : index
    %c1_8 = arith.constant 1 : index
    %c0_9 = arith.constant 0 : index
    %22 = vector.load %arg7[%c1, %c1_8, %c0_9] : memref<18x18x128xbf16, #tpu.memory_space<vmem>>, vector<16x16x128xbf16>
    tpu.vector_store %arg7[%c1, %c1_8, %c0_9], %21 {strides = array<i32>} : memref<18x18x128xbf16, #tpu.memory_space<vmem>>, vector<16x16x128xbf16>,
    %cst_10 = arith.constant 0.000000e+00 : bf16
    %23 = vector.broadcast %cst_10 : bf16 to vector<1x18x128xbf16>
    %c0_11 = arith.constant 0 : index
    %c0_12 = arith.constant 0 : index
    %c0_13 = arith.constant 0 : index
    %24 = vector.load %arg7[%c0_11, %c0_12, %c0_13] : memref<18x18x128xbf16, #tpu.memory_space<vmem>>, vector<1x18x128xbf16>
    tpu.vector_store %arg7[%c0_11, %c0_12, %c0_13], %23 {strides = array<i32>} : memref<18x18x128xbf16, #tpu.memory_space<vmem>>, vector<1x18x128xbf16>,
    %c17 = arith.constant 17 : index
    %c0_14 = arith.constant 0 : index
    %c0_15 = arith.constant 0 : index
    %25 = vector.load %arg7[%c17, %c0_14, %c0_15] : memref<18x18x128xbf16, #tpu.memory_space<vmem>>, vector<1x18x128xbf16>
    tpu.vector_store %arg7[%c17, %c0_14, %c0_15], %23 {strides = array<i32>} : memref<18x18x128xbf16, #tpu.memory_space<vmem>>, vector<1x18x128xbf16>,
    %cst_16 = arith.constant 0.000000e+00 : bf16
    %26 = vector.broadcast %cst_16 : bf16 to vector<18x1x128xbf16>
    %c0_17 = arith.constant 0 : index
    %c0_18 = arith.constant 0 : index
    %c0_19 = arith.constant 0 : index
    %27 = vector.load %arg7[%c0_17, %c0_18, %c0_19] : memref<18x18x128xbf16, #tpu.memory_space<vmem>>, vector<18x1x128xbf16>
    tpu.vector_store %arg7[%c0_17, %c0_18, %c0_19], %26 {strides = array<i32>} : memref<18x18x128xbf16, #tpu.memory_space<vmem>>, vector<18x1x128xbf16>,
    %c0_20 = arith.constant 0 : index
    %c17_21 = arith.constant 17 : index
    %c0_22 = arith.constant 0 : index
    %28 = vector.load %arg7[%c0_20, %c17_21, %c0_22] : memref<18x18x128xbf16, #tpu.memory_space<vmem>>, vector<18x1x128xbf16>
    tpu.vector_store %arg7[%c0_20, %c17_21, %c0_22], %26 {strides = array<i32>} : memref<18x18x128xbf16, #tpu.memory_space<vmem>>, vector<18x1x128xbf16>,
    %c0_23 = arith.constant 0 : index
    %c0_24 = arith.constant 0 : index
    %c0_25 = arith.constant 0 : index
    %29 = vector.load %arg7[%c0_23, %c0_24, %c0_25] : memref<18x18x128xbf16, #tpu.memory_space<vmem>>, vector<18x18x128xbf16>
    %30 = vector.extract_strided_slice %29 {offsets = [0, 0, 0], sizes = [16, 16, 128], strides = [1, 1, 1]} : vector<18x18x128xbf16> to vector<16x16x128xbf16>
    %31 = vector.extract_strided_slice %29 {offsets = [0, 1, 0], sizes = [16, 16, 128], strides = [1, 1, 1]} : vector<18x18x128xbf16> to vector<16x16x128xbf16>
    %32 = vector.extract_strided_slice %29 {offsets = [0, 2, 0], sizes = [16, 16, 128], strides = [1, 1, 1]} : vector<18x18x128xbf16> to vector<16x16x128xbf16>
    %33 = vector.extract_strided_slice %29 {offsets = [1, 0, 0], sizes = [16, 16, 128], strides = [1, 1, 1]} : vector<18x18x128xbf16> to vector<16x16x128xbf16>
    %34 = vector.extract_strided_slice %29 {offsets = [1, 1, 0], sizes = [16, 16, 128], strides = [1, 1, 1]} : vector<18x18x128xbf16> to vector<16x16x128xbf16>
    %35 = vector.extract_strided_slice %29 {offsets = [1, 2, 0], sizes = [16, 16, 128], strides = [1, 1, 1]} : vector<18x18x128xbf16> to vector<16x16x128xbf16>
    %36 = vector.extract_strided_slice %29 {offsets = [2, 0, 0], sizes = [16, 16, 128], strides = [1, 1, 1]} : vector<18x18x128xbf16> to vector<16x16x128xbf16>
    %37 = vector.extract_strided_slice %29 {offsets = [2, 1, 0], sizes = [16, 16, 128], strides = [1, 1, 1]} : vector<18x18x128xbf16> to vector<16x16x128xbf16>
    %38 = vector.extract_strided_slice %29 {offsets = [2, 2, 0], sizes = [16, 16, 128], strides = [1, 1, 1]} : vector<18x18x128xbf16> to vector<16x16x128xbf16>
    %39 = tpu.concatenate %30, %31, %32, %33, %34, %35, %36, %37, %38 in 2 : vector<16x16x128xbf16>, vector<16x16x128xbf16>, vector<16x16x128xbf16>, vector<16x16x128xbf16>, vector<16x16x128xbf16>, vector<16x16x128xbf16>, vector<16x16x128xbf16>, vector<16x16x128xbf16>, vector<16x16x128xbf16> -> vector<16x16x1152xbf16>
    %40 = vector.shape_cast %39 : vector<16x16x1152xbf16> to vector<256x1152xbf16>
    %c0_26 = arith.constant 0 : index
    %c0_27 = arith.constant 0 : index
    %41 = vector.load %arg4[%c0_26, %c0_27] : memref<1152x128xbf16, #tpu.memory_space<vmem>>, vector<1152x128xbf16>
    %cst_28 = arith.constant dense<0.000000e+00> : vector<256x128xf32>
    %42 = tpu.matmul %40, %41, %cst_28 {dimension_numbers = #tpu.dot_dimension_numbers<[1], [0], [0], [1], [0, 0, 1, 1], [], []>} : vector<256x1152xbf16>, vector<1152x128xbf16>, vector<256x128xf32> -> vector<256x128xf32>
    %c0_29 = arith.constant 0 : index
    %c0_30 = arith.constant 0 : index
    %43 = vector.load %arg5[%c0_29, %c0_30] : memref<1x128xf32, #tpu.memory_space<vmem>>, vector<1x128xf32>
    %44 = vector.broadcast %43 : vector<1x128xf32> to vector<256x128xf32>
    %45 = arith.addf %42, %44 : vector<256x128xf32>
    %46 = vector.extract_strided_slice %1 {offsets = [1, 1, 0], sizes = [16, 16, 128], strides = [1, 1, 1]} : vector<18x18x128xbf16> to vector<16x16x128xbf16>
    %47 = vector.shape_cast %46 : vector<16x16x128xbf16> to vector<256x128xbf16>
    %48 = arith.extf %47 : vector<256x128xbf16> to vector<256x128xf32>
    %49 = arith.addf %45, %48 : vector<256x128xf32>
    %cst_31 = arith.constant 0.000000e+00 : f32
    %50 = vector.broadcast %cst_31 : f32 to vector<256x128xf32>
    %51 = arith.maximumf %49, %50 : vector<256x128xf32>
    %52 = vector.shape_cast %51 : vector<256x128xf32> to vector<16x16x128xf32>
    %c0_32 = arith.constant 0 : index
    %c0_33 = arith.constant 0 : index
    %c0_34 = arith.constant 0 : index
    %c0_35 = arith.constant 0 : index
    %53 = vector.load %arg6[%c0_32, %c0_33, %c0_34, %c0_35] : memref<1x16x16x128xf32, #tpu.memory_space<vmem>>, vector<1x16x16x128xf32>
    %54 = vector.shape_cast %53 : vector<1x16x16x128xf32> to vector<16x16x128xf32>
    %55 = vector.shape_cast %52 : vector<16x16x128xf32> to vector<1x16x16x128xf32>
    tpu.vector_store %arg6[%c0_32, %c0_33, %c0_34, %c0_35], %55 {strides = array<i32>} : memref<1x16x16x128xf32, #tpu.memory_space<vmem>>, vector<1x16x16x128xf32>,
    return
  }
  func.func @transform_0(%arg0: i32) -> (i32, i32, i32, i32) {
    %c0_i32 = arith.constant 0 : i32
    %c0_i32_0 = arith.constant 0 : i32
    %c0_i32_1 = arith.constant 0 : i32
    %c0_i32_2 = arith.constant 0 : i32
    return %arg0, %c0_i32, %c0_i32_0, %c0_i32_1 : i32, i32, i32, i32
  }
  func.func @transform_1(%arg0: i32) -> (i32, i32) {
    %c0_i32 = arith.constant 0 : i32
    %c0_i32_0 = arith.constant 0 : i32
    %c0_i32_1 = arith.constant 0 : i32
    return %c0_i32, %c0_i32_0 : i32, i32
  }
  func.func @transform_2(%arg0: i32) -> (i32, i32) {
    %c0_i32 = arith.constant 0 : i32
    %c0_i32_0 = arith.constant 0 : i32
    %c0_i32_1 = arith.constant 0 : i32
    return %c0_i32, %c0_i32_0 : i32, i32
  }
  func.func @transform_3(%arg0: i32) -> (i32, i32) {
    %c0_i32 = arith.constant 0 : i32
    %c0_i32_0 = arith.constant 0 : i32
    %c0_i32_1 = arith.constant 0 : i32
    return %c0_i32, %c0_i32_0 : i32, i32
  }
  func.func @transform_4(%arg0: i32) -> (i32, i32) {
    %c0_i32 = arith.constant 0 : i32
    %c0_i32_0 = arith.constant 0 : i32
    %c0_i32_1 = arith.constant 0 : i32
    return %c0_i32, %c0_i32_0 : i32, i32
  }
  func.func @transform_5(%arg0: i32) -> (i32, i32, i32, i32) {
    %c0_i32 = arith.constant 0 : i32
    %c0_i32_0 = arith.constant 0 : i32
    %c0_i32_1 = arith.constant 0 : i32
    %c0_i32_2 = arith.constant 0 : i32
    return %arg0, %c0_i32, %c0_i32_0, %c0_i32_1 : i32, i32, i32, i32
  }
}

</mosaic_0001>

<llo_original>
// kernel: basic_block_pallas.1
$region0: #{basic_block_pallas.1}
  #allocation0 [shape = 'u32[]', space=smem, size = 0x4, offset = 0x4, fixed_abs, tag = 'smem constant byte address 0x4 - core index']
  #allocation1 [shape = 'u32[144,128]{1,0:T(1,128)}', space=vmem, size = 0x12000, scoped, tag = 'internal scratch']
  #allocation2 [shape = 'bf16[18,18,128]{2,1,0:T(8,128)(2,1)}', space=vmem, size = 0x1b000, scoped, tag = 'scratch operand']
  %s0 = inlined_call_operand.vmem [shape: bf16[2,18,18,128], index: 0, kind: input, shape index: {}]
  %s1 = inlined_call_operand.vmem [shape: bf16[1152,128], index: 1, kind: input, shape index: {}]
  %s2 = inlined_call_operand.vmem [shape: f32[1,128], index: 2, kind: input, shape index: {}]
  %s3 = inlined_call_operand.vmem [shape: bf16[1152,128], index: 3, kind: input, shape index: {}]
  %s4 = inlined_call_operand.vmem [shape: f32[1,128], index: 4, kind: input, shape index: {}]
  %s5 = inlined_call_operand.vmem [shape: f32[2,16,16,128], index: 5, kind: output, shape index: {}]
  %s6 = sld [smem:[#allocation0]]
  $region53: #{basic_block_pallas.1} parent=0
    _
  %s8 = ssub.s32 1, %s6
  %s9 = scalar_select 0, %s8, %s6
  loop: start=0, step=1, limit=4
  $region2: #{basic_block_pallas.1} parent=0 // loop_pre_header
    _
  $region3: #{basic_block_pallas.1} parent=0 // loop_header
    %s11 = sphi 0, %s15
    %p12 = scmp.ge.s32.totalorder %s11, 4
    %s21 = sphi 0, %s23
    %s24 = sphi 0, %s21
    %s25 = sphi 0, %s24
    %s41 = sphi 0, %s25
    %s45 = sphi 0, %s45
    %s47 = sphi 0, %s45
    %s48 = sphi 0, %s47
    %s62 = sphi 0, %s48
    %s66 = sphi 0, %s66
    %s68 = sphi 0, %s66
    %s69 = sphi 0, %s68
    %s83 = sphi 0, %s69
    %s87 = sphi 0, %s87
    %s89 = sphi 0, %s87
    %s90 = sphi 0, %s89
    %s104 = sphi 0, %s90
    %s108 = sphi 0, %s108
    %s110 = sphi 0, %s108
    %s111 = sphi 0, %s110
    %s125 = sphi 0, %s111
    %s131 = sphi 0, %s133
    %s134 = sphi 0, %s131
    %s135 = sphi 0, %s134
    %s151 = sphi 0, %s135
  $region4: #{basic_block_pallas.1} parent=0 // loop_header_branch
    %14 = sbr.rel (%p12) target = $region8
  $region5: #{basic_block_pallas.1} parent=0 // loop_body
    %s16 = ssub.s32 %s11, 1
    %s17 = ssub.s32 %s11, 2
    %s18 = sadd.s32 %s11, 1
    %s19 = ssub.s32 %s11, %s18
    %p20 = scmp.eq.s32.totalorder %s19, 0
    %s22 = sadd.s32 %s21, 1
    %s23 = scalar_select %p20, %s21, %s22
    %p26 = pneg %p20
    %p27 = scmp.eq.s32.totalorder %s11, 1
    %p28 = por %p26, %p27
    %p29 = scmp.ne.s32.totalorder %s21, %s24
    %p30 = scmp.eq.s32.totalorder %s11, 0
    %p31 = por %p29, %p30
    %p32 = scmp.ne.s32.totalorder %s21, %s24
    %p33 = scmp.eq.s32.totalorder %s16, 1
    %p34 = por %p32, %p33
    %p35 = scmp.ne.s32.totalorder %s24, %s25
    %p36 = scmp.eq.s32.totalorder %s16, 0
    %p37 = por %p35, %p36
    %p38 = scmp.ne.s32.totalorder %s24, %s25
    %p39 = scmp.eq.s32.totalorder %s17, 1
    %p40 = por %p38, %p39
    %p42 = scmp.ne.s32.totalorder %s25, %s41
    %p43 = scmp.eq.s32.totalorder %s17, 0
    %p44 = por %p42, %p43
    %s46 = sadd.s32 %s45, 1
    %p49 = scmp.eq.s32.totalorder %s11, 1
    %p50 = scmp.ne.s32.totalorder %s45, %s47
    %p51 = scmp.eq.s32.totalorder %s11, 0
    %p52 = por %p50, %p51
    %p53 = scmp.ne.s32.totalorder %s45, %s47
    %p54 = scmp.eq.s32.totalorder %s16, 1
    %p55 = por %p53, %p54
    %p56 = scmp.ne.s32.totalorder %s47, %s48
    %p57 = scmp.eq.s32.totalorder %s16, 0
    %p58 = por %p56, %p57
    %p59 = scmp.ne.s32.totalorder %s47, %s48
    %p60 = scmp.eq.s32.totalorder %s17, 1
    %p61 = por %p59, %p60
    %p63 = scmp.ne.s32.totalorder %s48, %s62
    %p64 = scmp.eq.s32.totalorder %s17, 0
    %p65 = por %p63, %p64
    %s67 = sadd.s32 %s66, 1
    %p70 = scmp.eq.s32.totalorder %s11, 1
    %p71 = scmp.ne.s32.totalorder %s66, %s68
    %p72 = scmp.eq.s32.totalorder %s11, 0
    %p73 = por %p71, %p72
    %p74 = scmp.ne.s32.totalorder %s66, %s68
    %p75 = scmp.eq.s32.totalorder %s16, 1
    %p76 = por %p74, %p75
    %p77 = scmp.ne.s32.totalorder %s68, %s69
    %p78 = scmp.eq.s32.totalorder %s16, 0
    %p79 = por %p77, %p78
    %p80 = scmp.ne.s32.totalorder %s68, %s69
    %p81 = scmp.eq.s32.totalorder %s17, 1
    %p82 = por %p80, %p81
    %p84 = scmp.ne.s32.totalorder %s69, %s83
    %p85 = scmp.eq.s32.totalorder %s17, 0
    %p86 = por %p84, %p85
    %s88 = sadd.s32 %s87, 1
    %p91 = scmp.eq.s32.totalorder %s11, 1
    %p92 = scmp.ne.s32.totalorder %s87, %s89
    %p93 = scmp.eq.s32.totalorder %s11, 0
    %p94 = por %p92, %p93
    %p95 = scmp.ne.s32.totalorder %s87, %s89
    %p96 = scmp.eq.s32.totalorder %s16, 1
    %p97 = por %p95, %p96
    %p98 = scmp.ne.s32.totalorder %s89, %s90
    %p99 = scmp.eq.s32.totalorder %s16, 0
    %p100 = por %p98, %p99
    %p101 = scmp.ne.s32.totalorder %s89, %s90
    %p102 = scmp.eq.s32.totalorder %s17, 1
    %p103 = por %p101, %p102
    %p105 = scmp.ne.s32.totalorder %s90, %s104
    %p106 = scmp.eq.s32.totalorder %s17, 0
    %p107 = por %p105, %p106
    %s109 = sadd.s32 %s108, 1
    %p112 = scmp.eq.s32.totalorder %s11, 1
    %p113 = scmp.ne.s32.totalorder %s108, %s110
    %p114 = scmp.eq.s32.totalorder %s11, 0
    %p115 = por %p113, %p114
    %p116 = scmp.ne.s32.totalorder %s108, %s110
    %p117 = scmp.eq.s32.totalorder %s16, 1
    %p118 = por %p116, %p117
    %p119 = scmp.ne.s32.totalorder %s110, %s111
    %p120 = scmp.eq.s32.totalorder %s16, 0
    %p121 = por %p119, %p120
    %p122 = scmp.ne.s32.totalorder %s110, %s111
    %p123 = scmp.eq.s32.totalorder %s17, 1
    %p124 = por %p122, %p123
    %p126 = scmp.ne.s32.totalorder %s111, %s125
    %p127 = scmp.eq.s32.totalorder %s17, 0
    %p128 = por %p126, %p127
    %s129 = ssub.s32 %s11, %s18
    %p130 = scmp.eq.s32.totalorder %s129, 0
    %s132 = sadd.s32 %s131, 1
    %s133 = scalar_select %p130, %s131, %s132
    %p136 = pneg %p130
    %p137 = scmp.eq.s32.totalorder %s11, 1
    %p138 = por %p136, %p137
    %p139 = scmp.ne.s32.totalorder %s131, %s134
    %p140 = scmp.eq.s32.totalorder %s11, 0
    %p141 = por %p139, %p140
    %p142 = scmp.ne.s32.totalorder %s131, %s134
    %p143 = scmp.eq.s32.totalorder %s16, 1
    %p144 = por %p142, %p143
    %p145 = scmp.ne.s32.totalorder %s134, %s135
    %p146 = scmp.eq.s32.totalorder %s16, 0
    %p147 = por %p145, %p146
    %p148 = scmp.ne.s32.totalorder %s134, %s135
    %p149 = scmp.eq.s32.totalorder %s17, 1
    %p150 = por %p148, %p149
    %p152 = scmp.ne.s32.totalorder %s135, %s151
    %p153 = scmp.eq.s32.totalorder %s17, 0
    %p154 = por %p152, %p153
    %p155 = scmp.le.s32.totalorder 1, %s11
    %p156 = scmp.lt.s32.totalorder %s11, 3
    %p157 = pnand %p155, %p156
    %p158 = pneg %p157
    // Predicated region
    $region9: #{basic_block_pallas.1} parent=5 // pred_check
      _
    $region10: #{basic_block_pallas.1} parent=5 // pred_check_branch
      %160 = sbr.rel (%p157) target = $region12
    $region11: #{basic_block_pallas.1} parent=5 // pred_region
      %s161 = ssub.s32 %s11, 1
      // Predicated region
      $region13: #{basic_block_pallas.1} parent=11 // pred_check
        %p162 = pneg %p58
      $region14: #{basic_block_pallas.1} parent=11 // pred_check_branch
        %164 = sbr.rel (%p162) target = $region16
      $region15: #{basic_block_pallas.1} parent=11 // pred_region
        _
      $region16: #{basic_block_pallas.1} parent=11 // pred_fallthru
        _
      // Predicated region
      $region17: #{basic_block_pallas.1} parent=11 // pred_check
        %p165 = pneg %p79
      $region18: #{basic_block_pallas.1} parent=11 // pred_check_branch
        %167 = sbr.rel (%p165) target = $region20
      $region19: #{basic_block_pallas.1} parent=11 // pred_region
        _
      $region20: #{basic_block_pallas.1} parent=11 // pred_fallthru
        _
      // Predicated region
      $region21: #{basic_block_pallas.1} parent=11 // pred_check
        %p168 = pneg %p100
      $region22: #{basic_block_pallas.1} parent=11 // pred_check_branch
        %170 = sbr.rel (%p168) target = $region24
      $region23: #{basic_block_pallas.1} parent=11 // pred_region
        _
      $region24: #{basic_block_pallas.1} parent=11 // pred_fallthru
        _
      // Predicated region
      $region25: #{basic_block_pallas.1} parent=11 // pred_check
        %p171 = pneg %p121
      $region26: #{basic_block_pallas.1} parent=11 // pred_check_branch
        %173 = sbr.rel (%p171) target = $region28
      $region27: #{basic_block_pallas.1} parent=11 // pred_region
        _
      $region28: #{basic_block_pallas.1} parent=11 // pred_fallthru
        _
    $region12: #{basic_block_pallas.1} parent=5 // pred_fallthru
      _
    %p174 = scmp.lt.s32.totalorder %s11, 2
    // Predicated region
    $region29: #{basic_block_pallas.1} parent=5 // pred_check
      %p175 = pneg %p174
    $region30: #{basic_block_pallas.1} parent=5 // pred_check_branch
      %177 = sbr.rel (%p175) target = $region32
    $region31: #{basic_block_pallas.1} parent=5 // pred_region
      // Predicated region
      $region33: #{basic_block_pallas.1} parent=31 // pred_check
        %p178 = pneg %p31
      $region34: #{basic_block_pallas.1} parent=31 // pred_check_branch
        %180 = sbr.rel (%p178) target = $region36
      $region35: #{basic_block_pallas.1} parent=31 // pred_region
        %p181 = scmp.lt.s32.totalorder %s11, 1
        %s182 = scalar_select %p181, %s11, 1
        %s183 = smul.addr %s182, 54
        %s184 = smul.addr %s183, 4
        %s185 = scalar_lea.vmem %s0, %s184
      $region36: #{basic_block_pallas.1} parent=31 // pred_fallthru
        _
    $region32: #{basic_block_pallas.1} parent=5 // pred_fallthru
      _
    %p186 = scmp.le.s32.totalorder 1, %s11
    %p187 = scmp.lt.s32.totalorder %s11, 3
    %p188 = pnand %p186, %p187
    %p189 = pneg %p188
    // Predicated region
    $region37: #{basic_block_pallas.1} parent=5 // pred_check
      _
    $region38: #{basic_block_pallas.1} parent=5 // pred_check_branch
      %191 = sbr.rel (%p188) target = $region40
    $region39: #{basic_block_pallas.1} parent=5 // pred_region
      %s192 = ssub.s32 %s11, 1
      %p193 = scmp.lt.s32.totalorder %s16, 1
      %s194 = scalar_select %p193, %s16, 1
      %s195 = smul.addr %s194, 54
      %s196 = smul.addr %s195, 4
      %s197 = scalar_lea.vmem %s0, %s196
      %p198 = pneg %p37
      %p199 = pneg %p34
      %p200 = pneg %p58
      %p201 = pneg %p55
      %p202 = pneg %p79
      %p203 = pneg %p76
      %p204 = pneg %p100
      %p205 = pneg %p97
      %p206 = pneg %p121
      %p207 = pneg %p118
      %p208 = pneg %p147
      %p209 = pneg %p144
      %p210 = scmp.lt.s32.totalorder %s16, 1
      %s211 = scalar_select %p210, %s16, 1
      %s212 = smul.addr %s211, 32
      %s213 = smul.addr %s212, 8
      %s214 = scalar_lea.vmem %s5, %s213
      %p215 = scmp.lt.s32.totalorder %s16, 1
      %s216 = scalar_select %p215, %s16, 1
      %s217 = smul.addr %s216, 54
      %s218 = smul.addr %s217, 4
      %s219 = scalar_lea.vmem %s0, %s218
      %p220 = scmp.lt.s32.totalorder %s16, 1
      %s221 = scalar_select %p220, %s16, 1
      %s222 = smul.addr %s221, 32
      %s223 = smul.addr %s222, 8
      %s224 = scalar_lea.vmem %s5, %s223
      %v226 = vld [vmem:[%s219] sm:$0xf]
      %v227 = vld [vmem:[%s219 + $0x4] sm:$0xf]
      %v228 = vld [vmem:[%s219 + $0x8] sm:$0x1]
      %v229 = vld [vmem:[%s219 + $0xc] sm:$0xf]
      %v230 = vld [vmem:[%s219 + $0x10] sm:$0xf]
      %v231 = vld [vmem:[%s219 + $0x14] sm:$0x1]
      %v232 = vld [vmem:[%s219 + $0x18] sm:$0xf]
      %v233 = vld [vmem:[%s219 + $0x1c] sm:$0xf]
      %v234 = vld [vmem:[%s219 + $0x20] sm:$0x1]
      %v235 = vld [vmem:[%s219 + $0x24] sm:$0xf]
      %v236 = vld [vmem:[%s219 + $0x28] sm:$0xf]
      %v237 = vld [vmem:[%s219 + $0x2c] sm:$0x1]
      %v238 = vld [vmem:[%s219 + $0x30] sm:$0xf]
      %v239 = vld [vmem:[%s219 + $0x34] sm:$0xf]
      %v240 = vld [vmem:[%s219 + $0x38] sm:$0x1]
      %v241 = vld [vmem:[%s219 + $0x3c] sm:$0xf]
      %v242 = vld [vmem:[%s219 + $0x40] sm:$0xf]
      %v243 = vld [vmem:[%s219 + $0x44] sm:$0x1]
      %v244 = vld [vmem:[%s219 + $0x48] sm:$0xf]
      %v245 = vld [vmem:[%s219 + $0x4c] sm:$0xf]
      %v246 = vld [vmem:[%s219 + $0x50] sm:$0x1]
      %v247 = vld [vmem:[%s219 + $0x54] sm:$0xf]
      %v248 = vld [vmem:[%s219 + $0x58] sm:$0xf]
      %v249 = vld [vmem:[%s219 + $0x5c] sm:$0x1]
      %v250 = vld [vmem:[%s219 + $0x60] sm:$0xf]
      %v251 = vld [vmem:[%s219 + $0x64] sm:$0xf]
      %v252 = vld [vmem:[%s219 + $0x68] sm:$0x1]
      %v253 = vld [vmem:[%s219 + $0x6c] sm:$0xf]
      %v254 = vld [vmem:[%s219 + $0x70] sm:$0xf]
      %v255 = vld [vmem:[%s219 + $0x74] sm:$0x1]
      %v256 = vld [vmem:[%s219 + $0x78] sm:$0xf]
      %v257 = vld [vmem:[%s219 + $0x7c] sm:$0xf]
      %v258 = vld [vmem:[%s219 + $0x80] sm:$0x1]
      %v259 = vld [vmem:[%s219 + $0x84] sm:$0xf]
      %v260 = vld [vmem:[%s219 + $0x88] sm:$0xf]
      %v261 = vld [vmem:[%s219 + $0x8c] sm:$0x1]
      %v262 = vld [vmem:[%s219 + $0x90] sm:$0xf]
      %v263 = vld [vmem:[%s219 + $0x94] sm:$0xf]
      %v264 = vld [vmem:[%s219 + $0x98] sm:$0x1]
      %v265 = vld [vmem:[%s219 + $0x9c] sm:$0xf]
      %v266 = vld [vmem:[%s219 + $0xa0] sm:$0xf]
      %v267 = vld [vmem:[%s219 + $0xa4] sm:$0x1]
      %v268 = vld [vmem:[%s219 + $0xa8] sm:$0xf]
      %v269 = vld [vmem:[%s219 + $0xac] sm:$0xf]
      %v270 = vld [vmem:[%s219 + $0xb0] sm:$0x1]
      %v271 = vld [vmem:[%s219 + $0xb4] sm:$0xf]
      %v272 = vld [vmem:[%s219 + $0xb8] sm:$0xf]
      %v273 = vld [vmem:[%s219 + $0xbc] sm:$0x1]
      %v274 = vld [vmem:[%s219 + $0xc0] sm:$0xf]
      %v275 = vld [vmem:[%s219 + $0xc4] sm:$0xf]
      %v276 = vld [vmem:[%s219 + $0xc8] sm:$0x1]
      %v277 = vld [vmem:[%s219 + $0xcc] sm:$0xf]
      %v278 = vld [vmem:[%s219 + $0xd0] sm:$0xf]
      %v279 = vld [vmem:[%s219 + $0xd4] sm:$0x1]
      %v312 = vunpack.c.l.b16 %v226
      %v313 = vunpack.c.l.b16 %v227
      %v314 = vunpack.c.l.b16 %v229
      %v315 = vunpack.c.l.b16 %v230
      %v316 = vunpack.c.l.b16 %v232
      %v317 = vunpack.c.l.b16 %v233
      %v318 = vunpack.c.l.b16 %v235
      %v319 = vunpack.c.l.b16 %v236
      %v320 = vunpack.c.l.b16 %v238
      %v321 = vunpack.c.l.b16 %v239
      %v322 = vunpack.c.l.b16 %v241
      %v323 = vunpack.c.l.b16 %v242
      %v324 = vunpack.c.l.b16 %v244
      %v325 = vunpack.c.l.b16 %v245
      %v326 = vunpack.c.l.b16 %v247
      %v327 = vunpack.c.l.b16 %v248
      %v328 = vunpack.c.l.b16 %v250
      %v329 = vunpack.c.l.b16 %v251
      %v330 = vunpack.c.l.b16 %v253
      %v331 = vunpack.c.l.b16 %v254
      %v332 = vunpack.c.l.b16 %v256
      %v333 = vunpack.c.l.b16 %v257
      %v334 = vunpack.c.l.b16 %v259
      %v335 = vunpack.c.l.b16 %v260
      %v336 = vunpack.c.l.b16 %v262
      %v337 = vunpack.c.l.b16 %v263
      %v338 = vunpack.c.l.b16 %v265
      %v339 = vunpack.c.l.b16 %v266
      %v340 = vunpack.c.l.b16 %v268
      %v341 = vunpack.c.l.b16 %v269
      %v342 = vunpack.c.l.b16 %v271
      %v343 = vunpack.c.l.b16 %v272
      %v344 = vpack.c.b16 %v313, %v312
      %v345 = vpack.c.b16 %v315, %v314
      %v346 = vpack.c.b16 %v317, %v316
      %v347 = vpack.c.b16 %v319, %v318
      %v348 = vpack.c.b16 %v321, %v320
      %v349 = vpack.c.b16 %v323, %v322
      %v350 = vpack.c.b16 %v325, %v324
      %v351 = vpack.c.b16 %v327, %v326
      %v352 = vpack.c.b16 %v329, %v328
      %v353 = vpack.c.b16 %v331, %v330
      %v354 = vpack.c.b16 %v333, %v332
      %v355 = vpack.c.b16 %v335, %v334
      %v356 = vpack.c.b16 %v337, %v336
      %v357 = vpack.c.b16 %v339, %v338
      %v358 = vpack.c.b16 %v341, %v340
      %v359 = vpack.c.b16 %v343, %v342
      %v392 = vunpack.c.l.b16 %v228
      %v393 = vunpack.c.l.b16 %v231
      %v394 = vunpack.c.l.b16 %v234
      %v395 = vunpack.c.l.b16 %v237
      %v396 = vunpack.c.l.b16 %v240
      %v397 = vunpack.c.l.b16 %v243
      %v398 = vunpack.c.l.b16 %v246
      %v399 = vunpack.c.l.b16 %v249
      %v400 = vunpack.c.l.b16 %v252
      %v401 = vunpack.c.l.b16 %v255
      %v402 = vunpack.c.l.b16 %v258
      %v403 = vunpack.c.l.b16 %v261
      %v404 = vunpack.c.l.b16 %v264
      %v405 = vunpack.c.l.b16 %v267
      %v406 = vunpack.c.l.b16 %v270
      %v407 = vunpack.c.l.b16 %v273
      %v408 = vpack.c.b16 %v392, %v392
      %v409 = vpack.c.b16 %v393, %v393
      %v410 = vpack.c.b16 %v394, %v394
      %v411 = vpack.c.b16 %v395, %v395
      %v412 = vpack.c.b16 %v396, %v396
      %v413 = vpack.c.b16 %v397, %v397
      %v414 = vpack.c.b16 %v398, %v398
      %v415 = vpack.c.b16 %v399, %v399
      %v416 = vpack.c.b16 %v400, %v400
      %v417 = vpack.c.b16 %v401, %v401
      %v418 = vpack.c.b16 %v402, %v402
      %v419 = vpack.c.b16 %v403, %v403
      %v420 = vpack.c.b16 %v404, %v404
      %v421 = vpack.c.b16 %v405, %v405
      %v422 = vpack.c.b16 %v406, %v406
      %v423 = vpack.c.b16 %v407, %v407
      %vm424 = vsmask.f32 7424
      %v426 = vshrl.u32 %v344, 16
      %v428 = vshll.u32 %v344, 16
      %v430 = vrot.slane %v428, 1
      %v431 = vor.u32 %v426, %v430
      %v433 = vshll.u32 %v408, 16
      %v435 = vrot.slane %v433, 1
      %v436 = vsel %vm424, %v431, %v435
      %v438 = vshrl.u32 %v345, 16
      %v440 = vshll.u32 %v345, 16
      %v442 = vrot.slane %v440, 1
      %v443 = vor.u32 %v438, %v442
      %v445 = vshll.u32 %v409, 16
      %v447 = vrot.slane %v445, 1
      %v448 = vsel %vm424, %v443, %v447
      %v450 = vshrl.u32 %v346, 16
      %v452 = vshll.u32 %v346, 16
      %v454 = vrot.slane %v452, 1
      %v455 = vor.u32 %v450, %v454
      %v457 = vshll.u32 %v410, 16
      %v459 = vrot.slane %v457, 1
      %v460 = vsel %vm424, %v455, %v459
      %v462 = vshrl.u32 %v347, 16
      %v464 = vshll.u32 %v347, 16
      %v466 = vrot.slane %v464, 1
      %v467 = vor.u32 %v462, %v466
      %v469 = vshll.u32 %v411, 16
      %v471 = vrot.slane %v469, 1
      %v472 = vsel %vm424, %v467, %v471
      %v474 = vshrl.u32 %v348, 16
      %v476 = vshll.u32 %v348, 16
      %v478 = vrot.slane %v476, 1
      %v479 = vor.u32 %v474, %v478
      %v481 = vshll.u32 %v412, 16
      %v483 = vrot.slane %v481, 1
      %v484 = vsel %vm424, %v479, %v483
      %v486 = vshrl.u32 %v349, 16
      %v488 = vshll.u32 %v349, 16
      %v490 = vrot.slane %v488, 1
      %v491 = vor.u32 %v486, %v490
      %v493 = vshll.u32 %v413, 16
      %v495 = vrot.slane %v493, 1
      %v496 = vsel %vm424, %v491, %v495
      %v498 = vshrl.u32 %v350, 16
      %v500 = vshll.u32 %v350, 16
      %v502 = vrot.slane %v500, 1
      %v503 = vor.u32 %v498, %v502
      %v505 = vshll.u32 %v414, 16
      %v507 = vrot.slane %v505, 1
      %v508 = vsel %vm424, %v503, %v507
      %v510 = vshrl.u32 %v351, 16
      %v512 = vshll.u32 %v351, 16
      %v514 = vrot.slane %v512, 1
      %v515 = vor.u32 %v510, %v514
      %v517 = vshll.u32 %v415, 16
      %v519 = vrot.slane %v517, 1
      %v520 = vsel %vm424, %v515, %v519
      %v522 = vshrl.u32 %v352, 16
      %v524 = vshll.u32 %v352, 16
      %v526 = vrot.slane %v524, 1
      %v527 = vor.u32 %v522, %v526
      %v529 = vshll.u32 %v416, 16
      %v531 = vrot.slane %v529, 1
      %v532 = vsel %vm424, %v527, %v531
      %v534 = vshrl.u32 %v353, 16
      %v536 = vshll.u32 %v353, 16
      %v538 = vrot.slane %v536, 1
      %v539 = vor.u32 %v534, %v538
      %v541 = vshll.u32 %v417, 16
      %v543 = vrot.slane %v541, 1
      %v544 = vsel %vm424, %v539, %v543
      %v546 = vshrl.u32 %v354, 16
      %v548 = vshll.u32 %v354, 16
      %v550 = vrot.slane %v548, 1
      %v551 = vor.u32 %v546, %v550
      %v553 = vshll.u32 %v418, 16
      %v555 = vrot.slane %v553, 1
      %v556 = vsel %vm424, %v551, %v555
      %v558 = vshrl.u32 %v355, 16
      %v560 = vshll.u32 %v355, 16
      %v562 = vrot.slane %v560, 1
      %v563 = vor.u32 %v558, %v562
      %v565 = vshll.u32 %v419, 16
      %v567 = vrot.slane %v565, 1
      %v568 = vsel %vm424, %v563, %v567
      %v570 = vshrl.u32 %v356, 16
      %v572 = vshll.u32 %v356, 16
      %v574 = vrot.slane %v572, 1
      %v575 = vor.u32 %v570, %v574
      %v577 = vshll.u32 %v420, 16
      %v579 = vrot.slane %v577, 1
      %v580 = vsel %vm424, %v575, %v579
      %v582 = vshrl.u32 %v357, 16
      %v584 = vshll.u32 %v357, 16
      %v586 = vrot.slane %v584, 1
      %v587 = vor.u32 %v582, %v586
      %v589 = vshll.u32 %v421, 16
      %v591 = vrot.slane %v589, 1
      %v592 = vsel %vm424, %v587, %v591
      %v594 = vshrl.u32 %v358, 16
      %v596 = vshll.u32 %v358, 16
      %v598 = vrot.slane %v596, 1
      %v599 = vor.u32 %v594, %v598
      %v601 = vshll.u32 %v422, 16
      %v603 = vrot.slane %v601, 1
      %v604 = vsel %vm424, %v599, %v603
      %v606 = vshrl.u32 %v359, 16
      %v608 = vshll.u32 %v359, 16
      %v610 = vrot.slane %v608, 1
      %v611 = vor.u32 %v606, %v610
      %v613 = vshll.u32 %v423, 16
      %v615 = vrot.slane %v613, 1
      %v616 = vsel %vm424, %v611, %v615
      %vm633 = vcmask 1046528
      %v634 = vrot.slane %v344, 1
      %v635 = vrot.slane %v408, 1
      %v636 = vsel %vm633, %v634, %v635
      %v637 = vrot.slane %v345, 1
      %v638 = vrot.slane %v409, 1
      %v639 = vsel %vm633, %v637, %v638
      %v640 = vrot.slane %v346, 1
      %v641 = vrot.slane %v410, 1
      %v642 = vsel %vm633, %v640, %v641
      %v643 = vrot.slane %v347, 1
      %v644 = vrot.slane %v411, 1
      %v645 = vsel %vm633, %v643, %v644
      %v646 = vrot.slane %v348, 1
      %v647 = vrot.slane %v412, 1
      %v648 = vsel %vm633, %v646, %v647
      %v649 = vrot.slane %v349, 1
      %v650 = vrot.slane %v413, 1
      %v651 = vsel %vm633, %v649, %v650
      %v652 = vrot.slane %v350, 1
      %v653 = vrot.slane %v414, 1
      %v654 = vsel %vm633, %v652, %v653
      %v655 = vrot.slane %v351, 1
      %v656 = vrot.slane %v415, 1
      %v657 = vsel %vm633, %v655, %v656
      %v658 = vrot.slane %v352, 1
      %v659 = vrot.slane %v416, 1
      %v660 = vsel %vm633, %v658, %v659
      %v661 = vrot.slane %v353, 1
      %v662 = vrot.slane %v417, 1
      %v663 = vsel %vm633, %v661, %v662
      %v664 = vrot.slane %v354, 1
      %v665 = vrot.slane %v418, 1
      %v666 = vsel %vm633, %v664, %v665
      %v667 = vrot.slane %v355, 1
      %v668 = vrot.slane %v419, 1
      %v669 = vsel %vm633, %v667, %v668
      %v670 = vrot.slane %v356, 1
      %v671 = vrot.slane %v420, 1
      %v672 = vsel %vm633, %v670, %v671
      %v673 = vrot.slane %v357, 1
      %v674 = vrot.slane %v421, 1
      %v675 = vsel %vm633, %v673, %v674
      %v676 = vrot.slane %v358, 1
      %v677 = vrot.slane %v422, 1
      %v678 = vsel %vm633, %v676, %v677
      %v679 = vrot.slane %v359, 1
      %v680 = vrot.slane %v423, 1
      %v681 = vsel %vm633, %v679, %v680
      %v700 = vunpack.c.l.b16 %v274
      %v701 = vunpack.c.l.b16 %v275
      %v702 = vpack.c.b16 %v701, %v700
      %v705 = vunpack.c.l.b16 %v276
      %v706 = vpack.c.b16 %v705, %v705
      %v708 = vshrl.u32 %v702, 16
      %v710 = vshll.u32 %v702, 16
      %v712 = vrot.slane %v710, 1
      %v713 = vor.u32 %v708, %v712
      %v715 = vshll.u32 %v706, 16
      %v717 = vrot.slane %v715, 1
      %v718 = vsel %vm424, %v713, %v717
      %v720 = vrot.slane %v702, 1
      %v721 = vrot.slane %v706, 1
      %v722 = vsel %vm633, %v720, %v721
      %v726 = vunpack.c.l.b16 %v277
      %v727 = vunpack.c.l.b16 %v278
      %v728 = vpack.c.b16 %v727, %v726
      %v731 = vunpack.c.l.b16 %v279
      %v732 = vpack.c.b16 %v731, %v731
      %v734 = vshrl.u32 %v728, 16
      %v736 = vshll.u32 %v728, 16
      %v738 = vrot.slane %v736, 1
      %v739 = vor.u32 %v734, %v738
      %v741 = vshll.u32 %v732, 16
      %v743 = vrot.slane %v741, 1
      %v744 = vsel %vm424, %v739, %v743
      %v746 = vrot.slane %v728, 1
      %v747 = vrot.slane %v732, 1
      %v748 = vsel %vm633, %v746, %v747
      %v750 = vld [vmem:[%s1] sm:$0xf]
      %v751 = vld [vmem:[%s1 + $0x4] sm:$0xf]
      %v752 = vld [vmem:[%s1 + $0x8] sm:$0xf]
      %v753 = vld [vmem:[%s1 + $0xc] sm:$0xf]
      %v754 = vld [vmem:[%s1 + $0x10] sm:$0xf]
      %v755 = vld [vmem:[%s1 + $0x14] sm:$0xf]
      %v756 = vld [vmem:[%s1 + $0x18] sm:$0xf]
      %v757 = vld [vmem:[%s1 + $0x1c] sm:$0xf]
      %v758 = vld [vmem:[%s1 + $0x20] sm:$0xf]
      %v759 = vld [vmem:[%s1 + $0x24] sm:$0xf]
      %v760 = vld [vmem:[%s1 + $0x28] sm:$0xf]
      %v761 = vld [vmem:[%s1 + $0x2c] sm:$0xf]
      %v762 = vld [vmem:[%s1 + $0x30] sm:$0xf]
      %v763 = vld [vmem:[%s1 + $0x34] sm:$0xf]
      %v764 = vld [vmem:[%s1 + $0x38] sm:$0xf]
      %v765 = vld [vmem:[%s1 + $0x3c] sm:$0xf]
      %v766 = vld [vmem:[%s1 + $0x40] sm:$0xf]
      %v767 = vld [vmem:[%s1 + $0x44] sm:$0xf]
      %v768 = vld [vmem:[%s1 + $0x48] sm:$0xf]
      %v769 = vld [vmem:[%s1 + $0x4c] sm:$0xf]
      %v770 = vld [vmem:[%s1 + $0x50] sm:$0xf]
      %v771 = vld [vmem:[%s1 + $0x54] sm:$0xf]
      %v772 = vld [vmem:[%s1 + $0x58] sm:$0xf]
      %v773 = vld [vmem:[%s1 + $0x5c] sm:$0xf]
      %v774 = vld [vmem:[%s1 + $0x60] sm:$0xf]
      %v775 = vld [vmem:[%s1 + $0x64] sm:$0xf]
      %v776 = vld [vmem:[%s1 + $0x68] sm:$0xf]
      %v777 = vld [vmem:[%s1 + $0x6c] sm:$0xf]
      %v778 = vld [vmem:[%s1 + $0x70] sm:$0xf]
      %v779 = vld [vmem:[%s1 + $0x74] sm:$0xf]
      %v780 = vld [vmem:[%s1 + $0x78] sm:$0xf]
      %v781 = vld [vmem:[%s1 + $0x7c] sm:$0xf]
      %v782 = vld [vmem:[%s1 + $0x80] sm:$0xf]
      %v783 = vld [vmem:[%s1 + $0x84] sm:$0xf]
      %v784 = vld [vmem:[%s1 + $0x88] sm:$0xf]
      %v785 = vld [vmem:[%s1 + $0x8c] sm:$0xf]
      %v786 = vld [vmem:[%s1 + $0x90] sm:$0xf]
      %v787 = vld [vmem:[%s1 + $0x94] sm:$0xf]
      %v788 = vld [vmem:[%s1 + $0x98] sm:$0xf]
      %v789 = vld [vmem:[%s1 + $0x9c] sm:$0xf]
      %v790 = vld [vmem:[%s1 + $0xa0] sm:$0xf]
      %v791 = vld [vmem:[%s1 + $0xa4] sm:$0xf]
      %v792 = vld [vmem:[%s1 + $0xa8] sm:$0xf]
      %v793 = vld [vmem:[%s1 + $0xac] sm:$0xf]
      %v794 = vld [vmem:[%s1 + $0xb0] sm:$0xf]
      %v795 = vld [vmem:[%s1 + $0xb4] sm:$0xf]
      %v796 = vld [vmem:[%s1 + $0xb8] sm:$0xf]
      %v797 = vld [vmem:[%s1 + $0xbc] sm:$0xf]
      %v798 = vld [vmem:[%s1 + $0xc0] sm:$0xf]
      %v799 = vld [vmem:[%s1 + $0xc4] sm:$0xf]
      %v800 = vld [vmem:[%s1 + $0xc8] sm:$0xf]
      %v801 = vld [vmem:[%s1 + $0xcc] sm:$0xf]
      %v802 = vld [vmem:[%s1 + $0xd0] sm:$0xf]
      %v803 = vld [vmem:[%s1 + $0xd4] sm:$0xf]
      %v804 = vld [vmem:[%s1 + $0xd8] sm:$0xf]
      %v805 = vld [vmem:[%s1 + $0xdc] sm:$0xf]
      %v806 = vld [vmem:[%s1 + $0xe0] sm:$0xf]
      %v807 = vld [vmem:[%s1 + $0xe4] sm:$0xf]
      %v808 = vld [vmem:[%s1 + $0xe8] sm:$0xf]
      %v809 = vld [vmem:[%s1 + $0xec] sm:$0xf]
      %v810 = vld [vmem:[%s1 + $0xf0] sm:$0xf]
      %v811 = vld [vmem:[%s1 + $0xf4] sm:$0xf]
      %v812 = vld [vmem:[%s1 + $0xf8] sm:$0xf]
      %v813 = vld [vmem:[%s1 + $0xfc] sm:$0xf]
      %v814 = vld [vmem:[%s1 + $0x100] sm:$0xf]
      %v815 = vld [vmem:[%s1 + $0x104] sm:$0xf]
      %v816 = vld [vmem:[%s1 + $0x108] sm:$0xf]
      %v817 = vld [vmem:[%s1 + $0x10c] sm:$0xf]
      %v818 = vld [vmem:[%s1 + $0x110] sm:$0xf]
      %v819 = vld [vmem:[%s1 + $0x114] sm:$0xf]
      %v820 = vld [vmem:[%s1 + $0x118] sm:$0xf]
      %v821 = vld [vmem:[%s1 + $0x11c] sm:$0xf]
      %v822 = vld [vmem:[%s1 + $0x120] sm:$0xf]
      %v823 = vld [vmem:[%s1 + $0x124] sm:$0xf]
      %v824 = vld [vmem:[%s1 + $0x128] sm:$0xf]
      %v825 = vld [vmem:[%s1 + $0x12c] sm:$0xf]
      %v826 = vld [vmem:[%s1 + $0x130] sm:$0xf]
      %v827 = vld [vmem:[%s1 + $0x134] sm:$0xf]
      %v828 = vld [vmem:[%s1 + $0x138] sm:$0xf]
      %v829 = vld [vmem:[%s1 + $0x13c] sm:$0xf]
      %v830 = vld [vmem:[%s1 + $0x140] sm:$0xf]
      %v831 = vld [vmem:[%s1 + $0x144] sm:$0xf]
      %v832 = vld [vmem:[%s1 + $0x148] sm:$0xf]
      %v833 = vld [vmem:[%s1 + $0x14c] sm:$0xf]
      %v834 = vld [vmem:[%s1 + $0x150] sm:$0xf]
      %v835 = vld [vmem:[%s1 + $0x154] sm:$0xf]
      %v836 = vld [vmem:[%s1 + $0x158] sm:$0xf]
      %v837 = vld [vmem:[%s1 + $0x15c] sm:$0xf]
      %v838 = vld [vmem:[%s1 + $0x160] sm:$0xf]
      %v839 = vld [vmem:[%s1 + $0x164] sm:$0xf]
      %v840 = vld [vmem:[%s1 + $0x168] sm:$0xf]
      %v841 = vld [vmem:[%s1 + $0x16c] sm:$0xf]
      %v842 = vld [vmem:[%s1 + $0x170] sm:$0xf]
      %v843 = vld [vmem:[%s1 + $0x174] sm:$0xf]
      %v844 = vld [vmem:[%s1 + $0x178] sm:$0xf]
      %v845 = vld [vmem:[%s1 + $0x17c] sm:$0xf]
      %v846 = vld [vmem:[%s1 + $0x180] sm:$0xf]
      %v847 = vld [vmem:[%s1 + $0x184] sm:$0xf]
      %v848 = vld [vmem:[%s1 + $0x188] sm:$0xf]
      %v849 = vld [vmem:[%s1 + $0x18c] sm:$0xf]
      %v850 = vld [vmem:[%s1 + $0x190] sm:$0xf]
      %v851 = vld [vmem:[%s1 + $0x194] sm:$0xf]
      %v852 = vld [vmem:[%s1 + $0x198] sm:$0xf]
      %v853 = vld [vmem:[%s1 + $0x19c] sm:$0xf]
      %v854 = vld [vmem:[%s1 + $0x1a0] sm:$0xf]
      %v855 = vld [vmem:[%s1 + $0x1a4] sm:$0xf]
      %v856 = vld [vmem:[%s1 + $0x1a8] sm:$0xf]
      %v857 = vld [vmem:[%s1 + $0x1ac] sm:$0xf]
      %v858 = vld [vmem:[%s1 + $0x1b0] sm:$0xf]
      %v859 = vld [vmem:[%s1 + $0x1b4] sm:$0xf]
      %v860 = vld [vmem:[%s1 + $0x1b8] sm:$0xf]
      %v861 = vld [vmem:[%s1 + $0x1bc] sm:$0xf]
      %v862 = vld [vmem:[%s1 + $0x1c0] sm:$0xf]
      %v863 = vld [vmem:[%s1 + $0x1c4] sm:$0xf]
      %v864 = vld [vmem:[%s1 + $0x1c8] sm:$0xf]
      %v865 = vld [vmem:[%s1 + $0x1cc] sm:$0xf]
      %v866 = vld [vmem:[%s1 + $0x1d0] sm:$0xf]
      %v867 = vld [vmem:[%s1 + $0x1d4] sm:$0xf]
      %v868 = vld [vmem:[%s1 + $0x1d8] sm:$0xf]
      %v869 = vld [vmem:[%s1 + $0x1dc] sm:$0xf]
      %v870 = vld [vmem:[%s1 + $0x1e0] sm:$0xf]
      %v871 = vld [vmem:[%s1 + $0x1e4] sm:$0xf]
      %v872 = vld [vmem:[%s1 + $0x1e8] sm:$0xf]
      %v873 = vld [vmem:[%s1 + $0x1ec] sm:$0xf]
      %v874 = vld [vmem:[%s1 + $0x1f0] sm:$0xf]
      %v875 = vld [vmem:[%s1 + $0x1f4] sm:$0xf]
      %v876 = vld [vmem:[%s1 + $0x1f8] sm:$0xf]
      %v877 = vld [vmem:[%s1 + $0x1fc] sm:$0xf]
      %v878 = vld [vmem:[%s1 + $0x200] sm:$0xf]
      %v879 = vld [vmem:[%s1 + $0x204] sm:$0xf]
      %v880 = vld [vmem:[%s1 + $0x208] sm:$0xf]
      %v881 = vld [vmem:[%s1 + $0x20c] sm:$0xf]
      %v882 = vld [vmem:[%s1 + $0x210] sm:$0xf]
      %v883 = vld [vmem:[%s1 + $0x214] sm:$0xf]
      %v884 = vld [vmem:[%s1 + $0x218] sm:$0xf]
      %v885 = vld [vmem:[%s1 + $0x21c] sm:$0xf]
      %v886 = vld [vmem:[%s1 + $0x220] sm:$0xf]
      %v887 = vld [vmem:[%s1 + $0x224] sm:$0xf]
      %v888 = vld [vmem:[%s1 + $0x228] sm:$0xf]
      %v889 = vld [vmem:[%s1 + $0x22c] sm:$0xf]
      %v890 = vld [vmem:[%s1 + $0x230] sm:$0xf]
      %v891 = vld [vmem:[%s1 + $0x234] sm:$0xf]
      %v892 = vld [vmem:[%s1 + $0x238] sm:$0xf]
      %v893 = vld [vmem:[%s1 + $0x23c] sm:$0xf]
      %v894 = vld [vmem:[%s2] sm:$0x1]
      %v896 = vlaneseq
      %v897 = vshrl.u32 %v896, 7
      %v898 = vsub.s32 0, %v897
      %v899 = vrot.slane %v894, %v898
      %v1045 = vunpack.c.l.b16 %v750
      %v1046 = vunpack.c.l.b16 %v751
      %v1047 = vunpack.c.l.b16 %v752
      %v1048 = vunpack.c.l.b16 %v753
      %v1049 = vunpack.c.l.b16 %v754
      %v1050 = vunpack.c.l.b16 %v755
      %v1051 = vunpack.c.l.b16 %v756
      %v1052 = vunpack.c.l.b16 %v757
      %v1053 = vunpack.c.l.b16 %v758
      %v1054 = vunpack.c.l.b16 %v759
      %v1055 = vunpack.c.l.b16 %v760
      %v1056 = vunpack.c.l.b16 %v761
      %v1057 = vunpack.c.l.b16 %v762
      %v1058 = vunpack.c.l.b16 %v763
      %v1059 = vunpack.c.l.b16 %v764
      %v1060 = vunpack.c.l.b16 %v765
      %v1061 = vunpack.c.l.b16 %v766
      %v1062 = vunpack.c.l.b16 %v767
      %v1063 = vunpack.c.l.b16 %v768
      %v1064 = vunpack.c.l.b16 %v769
      %v1065 = vunpack.c.l.b16 %v770
      %v1066 = vunpack.c.l.b16 %v771
      %v1067 = vunpack.c.l.b16 %v772
      %v1068 = vunpack.c.l.b16 %v773
      %v1069 = vunpack.c.l.b16 %v774
      %v1070 = vunpack.c.l.b16 %v775
      %v1071 = vunpack.c.l.b16 %v776
      %v1072 = vunpack.c.l.b16 %v777
      %v1073 = vunpack.c.l.b16 %v778
      %v1074 = vunpack.c.l.b16 %v779
      %v1075 = vunpack.c.l.b16 %v780
      %v1076 = vunpack.c.l.b16 %v781
      %v1077 = vunpack.c.l.b16 %v782
      %v1078 = vunpack.c.l.b16 %v783
      %v1079 = vunpack.c.l.b16 %v784
      %v1080 = vunpack.c.l.b16 %v785
      %v1081 = vunpack.c.l.b16 %v786
      %v1082 = vunpack.c.l.b16 %v787
      %v1083 = vunpack.c.l.b16 %v788
      %v1084 = vunpack.c.l.b16 %v789
      %v1085 = vunpack.c.l.b16 %v790
      %v1086 = vunpack.c.l.b16 %v791
      %v1087 = vunpack.c.l.b16 %v792
      %v1088 = vunpack.c.l.b16 %v793
      %v1089 = vunpack.c.l.b16 %v794
      %v1090 = vunpack.c.l.b16 %v795
      %v1091 = vunpack.c.l.b16 %v796
      %v1092 = vunpack.c.l.b16 %v797
      %v1093 = vunpack.c.l.b16 %v798
      %v1094 = vunpack.c.l.b16 %v799
      %v1095 = vunpack.c.l.b16 %v800
      %v1096 = vunpack.c.l.b16 %v801
      %v1097 = vunpack.c.l.b16 %v802
      %v1098 = vunpack.c.l.b16 %v803
      %v1099 = vunpack.c.l.b16 %v804
      %v1100 = vunpack.c.l.b16 %v805
      %v1101 = vunpack.c.l.b16 %v806
      %v1102 = vunpack.c.l.b16 %v807
      %v1103 = vunpack.c.l.b16 %v808
      %v1104 = vunpack.c.l.b16 %v809
      %v1105 = vunpack.c.l.b16 %v810
      %v1106 = vunpack.c.l.b16 %v811
      %v1107 = vunpack.c.l.b16 %v812
      %v1108 = vunpack.c.l.b16 %v813
      %v1109 = vunpack.c.l.b16 %v814
      %v1110 = vunpack.c.l.b16 %v815
      %v1111 = vunpack.c.l.b16 %v816
      %v1112 = vunpack.c.l.b16 %v817
      %v1113 = vunpack.c.l.b16 %v818
      %v1114 = vunpack.c.l.b16 %v819
      %v1115 = vunpack.c.l.b16 %v820
      %v1116 = vunpack.c.l.b16 %v821
      %v1117 = vunpack.c.l.b16 %v822
      %v1118 = vunpack.c.l.b16 %v823
      %v1119 = vunpack.c.l.b16 %v824
      %v1120 = vunpack.c.l.b16 %v825
      %v1121 = vunpack.c.l.b16 %v826
      %v1122 = vunpack.c.l.b16 %v827
      %v1123 = vunpack.c.l.b16 %v828
      %v1124 = vunpack.c.l.b16 %v829
      %v1125 = vunpack.c.l.b16 %v830
      %v1126 = vunpack.c.l.b16 %v831
      %v1127 = vunpack.c.l.b16 %v832
      %v1128 = vunpack.c.l.b16 %v833
      %v1129 = vunpack.c.l.b16 %v834
      %v1130 = vunpack.c.l.b16 %v835
      %v1131 = vunpack.c.l.b16 %v836
      %v1132 = vunpack.c.l.b16 %v837
      %v1133 = vunpack.c.l.b16 %v838
      %v1134 = vunpack.c.l.b16 %v839
      %v1135 = vunpack.c.l.b16 %v840
      %v1136 = vunpack.c.l.b16 %v841
      %v1137 = vunpack.c.l.b16 %v842
      %v1138 = vunpack.c.l.b16 %v843
      %v1139 = vunpack.c.l.b16 %v844
      %v1140 = vunpack.c.l.b16 %v845
      %v1141 = vunpack.c.l.b16 %v846
      %v1142 = vunpack.c.l.b16 %v847
      %v1143 = vunpack.c.l.b16 %v848
      %v1144 = vunpack.c.l.b16 %v849
      %v1145 = vunpack.c.l.b16 %v850
      %v1146 = vunpack.c.l.b16 %v851
      %v1147 = vunpack.c.l.b16 %v852
      %v1148 = vunpack.c.l.b16 %v853
      %v1149 = vunpack.c.l.b16 %v854
      %v1150 = vunpack.c.l.b16 %v855
      %v1151 = vunpack.c.l.b16 %v856
      %v1152 = vunpack.c.l.b16 %v857
      %v1153 = vunpack.c.l.b16 %v858
      %v1154 = vunpack.c.l.b16 %v859
      %v1155 = vunpack.c.l.b16 %v860
      %v1156 = vunpack.c.l.b16 %v861
      %v1157 = vunpack.c.l.b16 %v862
      %v1158 = vunpack.c.l.b16 %v863
      %v1159 = vunpack.c.l.b16 %v864
      %v1160 = vunpack.c.l.b16 %v865
      %v1161 = vunpack.c.l.b16 %v866
      %v1162 = vunpack.c.l.b16 %v867
      %v1163 = vunpack.c.l.b16 %v868
      %v1164 = vunpack.c.l.b16 %v869
      %v1165 = vunpack.c.l.b16 %v870
      %v1166 = vunpack.c.l.b16 %v871
      %v1167 = vunpack.c.l.b16 %v872
      %v1168 = vunpack.c.l.b16 %v873
      %v1169 = vunpack.c.l.b16 %v874
      %v1170 = vunpack.c.l.b16 %v875
      %v1171 = vunpack.c.l.b16 %v876
      %v1172 = vunpack.c.l.b16 %v877
      %v1173 = vunpack.c.l.b16 %v878
      %v1174 = vunpack.c.l.b16 %v879
      %v1175 = vunpack.c.l.b16 %v880
      %v1176 = vunpack.c.l.b16 %v881
      %v1177 = vunpack.c.l.b16 %v882
      %v1178 = vunpack.c.l.b16 %v883
      %v1179 = vunpack.c.l.b16 %v884
      %v1180 = vunpack.c.l.b16 %v885
      %v1181 = vunpack.c.l.b16 %v886
      %v1182 = vunpack.c.l.b16 %v887
      %v1183 = vunpack.c.l.b16 %v888
      %v1184 = vunpack.c.l.b16 %v889
      %v1185 = vunpack.c.l.b16 %v890
      %v1186 = vunpack.c.l.b16 %v891
      %v1187 = vunpack.c.l.b16 %v892
      %v1188 = vunpack.c.l.b16 %v893
      %v1189 = vpack.c.b16 %v1046, %v1045
      %v1190 = vpack.c.b16 %v1048, %v1047
      %v1191 = vpack.c.b16 %v1050, %v1049
      %v1192 = vpack.c.b16 %v1052, %v1051
      %v1193 = vpack.c.b16 %v1054, %v1053
      %v1194 = vpack.c.b16 %v1056, %v1055
      %v1195 = vpack.c.b16 %v1058, %v1057
      %v1196 = vpack.c.b16 %v1060, %v1059
      %v1197 = vpack.c.b16 %v1062, %v1061
      %v1198 = vpack.c.b16 %v1064, %v1063
      %v1199 = vpack.c.b16 %v1066, %v1065
      %v1200 = vpack.c.b16 %v1068, %v1067
      %v1201 = vpack.c.b16 %v1070, %v1069
      %v1202 = vpack.c.b16 %v1072, %v1071
      %v1203 = vpack.c.b16 %v1074, %v1073
      %v1204 = vpack.c.b16 %v1076, %v1075
      %v1205 = vpack.c.b16 %v1078, %v1077
      %v1206 = vpack.c.b16 %v1080, %v1079
      %v1207 = vpack.c.b16 %v1082, %v1081
      %v1208 = vpack.c.b16 %v1084, %v1083
      %v1209 = vpack.c.b16 %v1086, %v1085
      %v1210 = vpack.c.b16 %v1088, %v1087
      %v1211 = vpack.c.b16 %v1090, %v1089
      %v1212 = vpack.c.b16 %v1092, %v1091
      %v1213 = vpack.c.b16 %v1094, %v1093
      %v1214 = vpack.c.b16 %v1096, %v1095
      %v1215 = vpack.c.b16 %v1098, %v1097
      %v1216 = vpack.c.b16 %v1100, %v1099
      %v1217 = vpack.c.b16 %v1102, %v1101
      %v1218 = vpack.c.b16 %v1104, %v1103
      %v1219 = vpack.c.b16 %v1106, %v1105
      %v1220 = vpack.c.b16 %v1108, %v1107
      %v1221 = vpack.c.b16 %v1110, %v1109
      %v1222 = vpack.c.b16 %v1112, %v1111
      %v1223 = vpack.c.b16 %v1114, %v1113
      %v1224 = vpack.c.b16 %v1116, %v1115
      %v1225 = vpack.c.b16 %v1118, %v1117
      %v1226 = vpack.c.b16 %v1120, %v1119
      %v1227 = vpack.c.b16 %v1122, %v1121
      %v1228 = vpack.c.b16 %v1124, %v1123
      %v1229 = vpack.c.b16 %v1126, %v1125
      %v1230 = vpack.c.b16 %v1128, %v1127
      %v1231 = vpack.c.b16 %v1130, %v1129
      %v1232 = vpack.c.b16 %v1132, %v1131
      %v1233 = vpack.c.b16 %v1134, %v1133
      %v1234 = vpack.c.b16 %v1136, %v1135
      %v1235 = vpack.c.b16 %v1138, %v1137
      %v1236 = vpack.c.b16 %v1140, %v1139
      %v1237 = vpack.c.b16 %v1142, %v1141
      %v1238 = vpack.c.b16 %v1144, %v1143
      %v1239 = vpack.c.b16 %v1146, %v1145
      %v1240 = vpack.c.b16 %v1148, %v1147
      %v1241 = vpack.c.b16 %v1150, %v1149
      %v1242 = vpack.c.b16 %v1152, %v1151
      %v1243 = vpack.c.b16 %v1154, %v1153
      %v1244 = vpack.c.b16 %v1156, %v1155
      %v1245 = vpack.c.b16 %v1158, %v1157
      %v1246 = vpack.c.b16 %v1160, %v1159
      %v1247 = vpack.c.b16 %v1162, %v1161
      %v1248 = vpack.c.b16 %v1164, %v1163
      %v1249 = vpack.c.b16 %v1166, %v1165
      %v1250 = vpack.c.b16 %v1168, %v1167
      %v1251 = vpack.c.b16 %v1170, %v1169
      %v1252 = vpack.c.b16 %v1172, %v1171
      %v1253 = vpack.c.b16 %v1174, %v1173
      %v1254 = vpack.c.b16 %v1176, %v1175
      %v1255 = vpack.c.b16 %v1178, %v1177
      %v1256 = vpack.c.b16 %v1180, %v1179
      %v1257 = vpack.c.b16 %v1182, %v1181
      %v1258 = vpack.c.b16 %v1184, %v1183
      %v1259 = vpack.c.b16 %v1186, %v1185
      %v1260 = vpack.c.b16 %v1188, %v1187
      %1333 = vmatprep.subr.bf16.mxu0 0
      %1334 = vmatpush1.bf16.msra.mxu0 %v1189
      %1335 = vmatprep.subr.bf16.mxu0 0
      %1336 = vmatpush1.bf16.msra.mxu0 %v1190
      %1337 = vmatprep.subr.bf16.mxu0 0
      %1338 = vmatpush1.bf16.msra.mxu0 %v1191
      %1339 = vmatprep.subr.bf16.mxu0 0
      %1340 = vmatpush1.bf16.msra.mxu0 %v1192
      %1341 = vmatprep.subr.bf16.mxu0 0
      %1342 = vmatpush1.bf16.msra.mxu0 %v1193
      %1343 = vmatprep.subr.bf16.mxu0 0
      %1344 = vmatpush1.bf16.msra.mxu0 %v1194
      %1345 = vmatprep.subr.bf16.mxu0 0
      %1346 = vmatpush1.bf16.msra.mxu0 %v1195
      %1347 = vmatprep.subr.bf16.mxu0 0
      %1348 = vmatpush1.bf16.msra.mxu0 %v1196
      %1349 = vmatprep.subr.bf16.mxu0 0
      %1350 = vmatpush1.bf16.msra.mxu0 %v1197
      %1351 = vmatprep.subr.bf16.mxu0 0
      %1352 = vmatpush1.bf16.msra.mxu0 %v1198
      %1353 = vmatprep.subr.bf16.mxu0 0
      %1354 = vmatpush1.bf16.msra.mxu0 %v1199
      %1355 = vmatprep.subr.bf16.mxu0 0
      %1356 = vmatpush1.bf16.msra.mxu0 %v1200
      %1357 = vmatprep.subr.bf16.mxu0 0
      %1358 = vmatpush1.bf16.msra.mxu0 %v1201
      %1359 = vmatprep.subr.bf16.mxu0 0
      %1360 = vmatpush1.bf16.msra.mxu0 %v1202
      %1361 = vmatprep.subr.bf16.mxu0 0
      %1362 = vmatpush1.bf16.msra.mxu0 %v1203
      %1363 = vmatprep.subr.bf16.mxu0 0
      %1364 = vmatpush1.bf16.msra.mxu0 %v1204
      %1365 = vmatprep.mubr.bf16.mxu0 %v436
      %1366 = vmatmul.mubr.bf16.gmra.mrb[0].mxu0 %v344
      %v1367 = vpop.f32.mrb[0].mxu0
      %v1368 = vadd.f32 %v899, %v1367
      %v1369 = vpop.f32.mrb[0].mxu0
      %v1370 = vpop.f32.mrb[0].mxu0
      %v1371 = vadd.f32 %v899, %v1370
      %v1372 = vpop.f32.mrb[0].mxu0
      %1373 = vmatprep.mubr.bf16.mxu0 %v448
      %1374 = vmatmul.mubr.bf16.gmra.mrb[0].mxu0 %v345
      %v1375 = vpop.f32.mrb[0].mxu0
      %v1376 = vadd.f32 %v899, %v1375
      %v1377 = vpop.f32.mrb[0].mxu0
      %v1378 = vpop.f32.mrb[0].mxu0
      %v1379 = vadd.f32 %v899, %v1378
      %v1380 = vpop.f32.mrb[0].mxu0
      %1381 = vmatprep.mubr.bf16.mxu0 %v460
      %1382 = vmatmul.mubr.bf16.gmra.mrb[0].mxu0 %v346
      %v1383 = vpop.f32.mrb[0].mxu0
      %v1384 = vadd.f32 %v899, %v1383
      %v1385 = vpop.f32.mrb[0].mxu0
      %v1386 = vpop.f32.mrb[0].mxu0
      %v1387 = vadd.f32 %v899, %v1386
      %v1388 = vpop.f32.mrb[0].mxu0
      %1389 = vmatprep.mubr.bf16.mxu0 %v472
      %1390 = vmatmul.mubr.bf16.gmra.mrb[0].mxu0 %v347
      %v1391 = vpop.f32.mrb[0].mxu0
      %v1392 = vadd.f32 %v899, %v1391
      %v1393 = vpop.f32.mrb[0].mxu0
      %v1394 = vpop.f32.mrb[0].mxu0
      %v1395 = vadd.f32 %v899, %v1394
      %v1396 = vpop.f32.mrb[0].mxu0
      %1397 = vmatprep.mubr.bf16.mxu0 %v484
      %1398 = vmatmul.mubr.bf16.gmra.mrb[0].mxu0 %v348
      %v1399 = vpop.f32.mrb[0].mxu0
      %v1400 = vadd.f32 %v899, %v1399
      %v1401 = vpop.f32.mrb[0].mxu0
      %v1402 = vpop.f32.mrb[0].mxu0
      %v1403 = vadd.f32 %v899, %v1402
      %v1404 = vpop.f32.mrb[0].mxu0
      %1405 = vmatprep.mubr.bf16.mxu0 %v496
      %1406 = vmatmul.mubr.bf16.gmra.mrb[0].mxu0 %v349
      %v1407 = vpop.f32.mrb[0].mxu0
      %v1408 = vadd.f32 %v899, %v1407
      %v1409 = vpop.f32.mrb[0].mxu0
      %v1410 = vpop.f32.mrb[0].mxu0
      %v1411 = vadd.f32 %v899, %v1410
      %v1412 = vpop.f32.mrb[0].mxu0
      %1413 = vmatprep.mubr.bf16.mxu0 %v508
      %1414 = vmatmul.mubr.bf16.gmra.mrb[0].mxu0 %v350
      %v1415 = vpop.f32.mrb[0].mxu0
      %v1416 = vadd.f32 %v899, %v1415
      %v1417 = vpop.f32.mrb[0].mxu0
      %v1418 = vpop.f32.mrb[0].mxu0
      %v1419 = vadd.f32 %v899, %v1418
      %v1420 = vpop.f32.mrb[0].mxu0
      %1421 = vmatprep.mubr.bf16.mxu0 %v520
      %1422 = vmatmul.mubr.bf16.gmra.mrb[0].mxu0 %v351
      %v1423 = vpop.f32.mrb[0].mxu0
      %v1424 = vadd.f32 %v899, %v1423
      %v1425 = vpop.f32.mrb[0].mxu0
      %v1426 = vpop.f32.mrb[0].mxu0
      %v1427 = vadd.f32 %v899, %v1426
      %v1428 = vpop.f32.mrb[0].mxu0
      %1429 = vmatprep.mubr.bf16.mxu0 %v532
      %1430 = vmatmul.mubr.bf16.gmra.mrb[0].mxu0 %v352
      %v1431 = vpop.f32.mrb[0].mxu0
      %v1432 = vadd.f32 %v899, %v1431
      %v1433 = vpop.f32.mrb[0].mxu0
      %v1434 = vpop.f32.mrb[0].mxu0
      %v1435 = vadd.f32 %v899, %v1434
      %v1436 = vpop.f32.mrb[0].mxu0
      %1437 = vmatprep.mubr.bf16.mxu0 %v544
      %1438 = vmatmul.mubr.bf16.gmra.mrb[0].mxu0 %v353
      %v1439 = vpop.f32.mrb[0].mxu0
      %v1440 = vadd.f32 %v899, %v1439
      %v1441 = vpop.f32.mrb[0].mxu0
      %v1442 = vpop.f32.mrb[0].mxu0
      %v1443 = vadd.f32 %v899, %v1442
      %v1444 = vpop.f32.mrb[0].mxu0
      %1445 = vmatprep.mubr.bf16.mxu0 %v556
      %1446 = vmatmul.mubr.bf16.gmra.mrb[0].mxu0 %v354
      %v1447 = vpop.f32.mrb[0].mxu0
      %v1448 = vadd.f32 %v899, %v1447
      %v1449 = vpop.f32.mrb[0].mxu0
      %v1450 = vpop.f32.mrb[0].mxu0
      %v1451 = vadd.f32 %v899, %v1450
      %v1452 = vpop.f32.mrb[0].mxu0
      %1453 = vmatprep.mubr.bf16.mxu0 %v568
      %1454 = vmatmul.mubr.bf16.gmra.mrb[0].mxu0 %v355
      %v1455 = vpop.f32.mrb[0].mxu0
      %v1456 = vadd.f32 %v899, %v1455
      %v1457 = vpop.f32.mrb[0].mxu0
      %v1458 = vpop.f32.mrb[0].mxu0
      %v1459 = vadd.f32 %v899, %v1458
      %v1460 = vpop.f32.mrb[0].mxu0
      %1461 = vmatprep.mubr.bf16.mxu0 %v580
      %1462 = vmatmul.mubr.bf16.gmra.mrb[0].mxu0 %v356
      %v1463 = vpop.f32.mrb[0].mxu0
      %v1464 = vadd.f32 %v899, %v1463
      %v1465 = vpop.f32.mrb[0].mxu0
      %v1466 = vpop.f32.mrb[0].mxu0
      %v1467 = vadd.f32 %v899, %v1466
      %v1468 = vpop.f32.mrb[0].mxu0
      %1469 = vmatprep.mubr.bf16.mxu0 %v592
      %1470 = vmatmul.mubr.bf16.gmra.mrb[0].mxu0 %v357
      %v1471 = vpop.f32.mrb[0].mxu0
      %v1472 = vadd.f32 %v899, %v1471
      %v1473 = vpop.f32.mrb[0].mxu0
      %v1474 = vpop.f32.mrb[0].mxu0
      %v1475 = vadd.f32 %v899, %v1474
      %v1476 = vpop.f32.mrb[0].mxu0
      %1477 = vmatprep.mubr.bf16.mxu0 %v604
      %1478 = vmatmul.mubr.bf16.gmra.mrb[0].mxu0 %v358
      %v1479 = vpop.f32.mrb[0].mxu0
      %v1480 = vadd.f32 %v899, %v1479
      %v1481 = vpop.f32.mrb[0].mxu0
      %v1482 = vpop.f32.mrb[0].mxu0
      %v1483 = vadd.f32 %v899, %v1482
      %v1484 = vpop.f32.mrb[0].mxu0
      %1485 = vmatprep.mubr.bf16.mxu0 %v616
      %1486 = vmatmul.mubr.bf16.gmra.mrb[0].mxu0 %v359
      %v1487 = vpop.f32.mrb[0].mxu0
      %v1488 = vadd.f32 %v899, %v1487
      %v1489 = vpop.f32.mrb[0].mxu0
      %v1490 = vpop.f32.mrb[0].mxu0
      %v1491 = vadd.f32 %v899, %v1490
      %v1492 = vpop.f32.mrb[0].mxu0
      %1493 = vdwg.mxu0
      %1494 = vmatprep.subr.bf16.mxu0 0
      %1495 = vmatpush1.bf16.msra.mxu0 %v1205
      %1496 = vmatprep.subr.bf16.mxu0 0
      %1497 = vmatpush1.bf16.msra.mxu0 %v1206
      %1498 = vmatprep.subr.bf16.mxu0 0
      %1499 = vmatpush1.bf16.msra.mxu0 %v1207
      %1500 = vmatprep.subr.bf16.mxu0 0
      %1501 = vmatpush1.bf16.msra.mxu0 %v1208
      %1502 = vmatprep.subr.bf16.mxu0 0
      %1503 = vmatpush1.bf16.msra.mxu0 %v1209
      %1504 = vmatprep.subr.bf16.mxu0 0
      %1505 = vmatpush1.bf16.msra.mxu0 %v1210
      %1506 = vmatprep.subr.bf16.mxu0 0
      %1507 = vmatpush1.bf16.msra.mxu0 %v1211
      %1508 = vmatprep.subr.bf16.mxu0 0
      %1509 = vmatpush1.bf16.msra.mxu0 %v1212
      %1510 = vmatprep.subr.bf16.mxu0 0
      %1511 = vmatpush1.bf16.msra.mxu0 %v1213
      %1512 = vmatprep.subr.bf16.mxu0 0
      %1513 = vmatpush1.bf16.msra.mxu0 %v1214
      %1514 = vmatprep.subr.bf16.mxu0 0
      %1515 = vmatpush1.bf16.msra.mxu0 %v1215
      %1516 = vmatprep.subr.bf16.mxu0 0
      %1517 = vmatpush1.bf16.msra.mxu0 %v1216
      %1518 = vmatprep.subr.bf16.mxu0 0
      %1519 = vmatpush1.bf16.msra.mxu0 %v1217
      %1520 = vmatprep.subr.bf16.mxu0 0
      %1521 = vmatpush1.bf16.msra.mxu0 %v1218
      %1522 = vmatprep.subr.bf16.mxu0 0
      %1523 = vmatpush1.bf16.msra.mxu0 %v1219
      %1524 = vmatprep.subr.bf16.mxu0 0
      %1525 = vmatpush1.bf16.msra.mxu0 %v1220
      %1526 = vmatprep.mubr.bf16.mxu0 %v345
      %1527 = vmatmul.mubr.bf16.gmra.mrb[0].mxu0 %v636
      %v1528 = vpop.f32.mrb[0].mxu0
      %v1529 = vadd.f32 %v1368, %v1528
      %v1530 = vpop.f32.mrb[0].mxu0
      %v1531 = vpop.f32.mrb[0].mxu0
      %v1532 = vadd.f32 %v1371, %v1531
      %v1533 = vpop.f32.mrb[0].mxu0
      %1534 = vmatprep.mubr.bf16.mxu0 %v346
      %1535 = vmatmul.mubr.bf16.gmra.mrb[0].mxu0 %v639
      %v1536 = vpop.f32.mrb[0].mxu0
      %v1537 = vadd.f32 %v1376, %v1536
      %v1538 = vpop.f32.mrb[0].mxu0
      %v1539 = vpop.f32.mrb[0].mxu0
      %v1540 = vadd.f32 %v1379, %v1539
      %v1541 = vpop.f32.mrb[0].mxu0
      %1542 = vmatprep.mubr.bf16.mxu0 %v347
      %1543 = vmatmul.mubr.bf16.gmra.mrb[0].mxu0 %v642
      %v1544 = vpop.f32.mrb[0].mxu0
      %v1545 = vadd.f32 %v1384, %v1544
      %v1546 = vpop.f32.mrb[0].mxu0
      %v1547 = vpop.f32.mrb[0].mxu0
      %v1548 = vadd.f32 %v1387, %v1547
      %v1549 = vpop.f32.mrb[0].mxu0
      %1550 = vmatprep.mubr.bf16.mxu0 %v348
      %1551 = vmatmul.mubr.bf16.gmra.mrb[0].mxu0 %v645
      %v1552 = vpop.f32.mrb[0].mxu0
      %v1553 = vadd.f32 %v1392, %v1552
      %v1554 = vpop.f32.mrb[0].mxu0
      %v1555 = vpop.f32.mrb[0].mxu0
      %v1556 = vadd.f32 %v1395, %v1555
      %v1557 = vpop.f32.mrb[0].mxu0
      %1558 = vmatprep.mubr.bf16.mxu0 %v349
      %1559 = vmatmul.mubr.bf16.gmra.mrb[0].mxu0 %v648
      %v1560 = vpop.f32.mrb[0].mxu0
      %v1561 = vadd.f32 %v1400, %v1560
      %v1562 = vpop.f32.mrb[0].mxu0
      %v1563 = vpop.f32.mrb[0].mxu0
      %v1564 = vadd.f32 %v1403, %v1563
      %v1565 = vpop.f32.mrb[0].mxu0
      %1566 = vmatprep.mubr.bf16.mxu0 %v350
      %1567 = vmatmul.mubr.bf16.gmra.mrb[0].mxu0 %v651
      %v1568 = vpop.f32.mrb[0].mxu0
      %v1569 = vadd.f32 %v1408, %v1568
      %v1570 = vpop.f32.mrb[0].mxu0
      %v1571 = vpop.f32.mrb[0].mxu0
      %v1572 = vadd.f32 %v1411, %v1571
      %v1573 = vpop.f32.mrb[0].mxu0
      %1574 = vmatprep.mubr.bf16.mxu0 %v351
      %1575 = vmatmul.mubr.bf16.gmra.mrb[0].mxu0 %v654
      %v1576 = vpop.f32.mrb[0].mxu0
      %v1577 = vadd.f32 %v1416, %v1576
      %v1578 = vpop.f32.mrb[0].mxu0
      %v1579 = vpop.f32.mrb[0].mxu0
      %v1580 = vadd.f32 %v1419, %v1579
      %v1581 = vpop.f32.mrb[0].mxu0
      %1582 = vmatprep.mubr.bf16.mxu0 %v352
      %1583 = vmatmul.mubr.bf16.gmra.mrb[0].mxu0 %v657
      %v1584 = vpop.f32.mrb[0].mxu0
      %v1585 = vadd.f32 %v1424, %v1584
      %v1586 = vpop.f32.mrb[0].mxu0
      %v1587 = vpop.f32.mrb[0].mxu0
      %v1588 = vadd.f32 %v1427, %v1587
      %v1589 = vpop.f32.mrb[0].mxu0
      %1590 = vmatprep.mubr.bf16.mxu0 %v353
      %1591 = vmatmul.mubr.bf16.gmra.mrb[0].mxu0 %v660
      %v1592 = vpop.f32.mrb[0].mxu0
      %v1593 = vadd.f32 %v1432, %v1592
      %v1594 = vpop.f32.mrb[0].mxu0
      %v1595 = vpop.f32.mrb[0].mxu0
      %v1596 = vadd.f32 %v1435, %v1595
      %v1597 = vpop.f32.mrb[0].mxu0
      %1598 = vmatprep.mubr.bf16.mxu0 %v354
      %1599 = vmatmul.mubr.bf16.gmra.mrb[0].mxu0 %v663
      %v1600 = vpop.f32.mrb[0].mxu0
      %v1601 = vadd.f32 %v1440, %v1600
      %v1602 = vpop.f32.mrb[0].mxu0
      %v1603 = vpop.f32.mrb[0].mxu0
      %v1604 = vadd.f32 %v1443, %v1603
      %v1605 = vpop.f32.mrb[0].mxu0
      %1606 = vmatprep.mubr.bf16.mxu0 %v355
      %1607 = vmatmul.mubr.bf16.gmra.mrb[0].mxu0 %v666
      %v1608 = vpop.f32.mrb[0].mxu0
      %v1609 = vadd.f32 %v1448, %v1608
      %v1610 = vpop.f32.mrb[0].mxu0
      %v1611 = vpop.f32.mrb[0].mxu0
      %v1612 = vadd.f32 %v1451, %v1611
      %v1613 = vpop.f32.mrb[0].mxu0
      %1614 = vmatprep.mubr.bf16.mxu0 %v356
      %1615 = vmatmul.mubr.bf16.gmra.mrb[0].mxu0 %v669
      %v1616 = vpop.f32.mrb[0].mxu0
      %v1617 = vadd.f32 %v1456, %v1616
      %v1618 = vpop.f32.mrb[0].mxu0
      %v1619 = vpop.f32.mrb[0].mxu0
      %v1620 = vadd.f32 %v1459, %v1619
      %v1621 = vpop.f32.mrb[0].mxu0
      %1622 = vmatprep.mubr.bf16.mxu0 %v357
      %1623 = vmatmul.mubr.bf16.gmra.mrb[0].mxu0 %v672
      %v1624 = vpop.f32.mrb[0].mxu0
      %v1625 = vadd.f32 %v1464, %v1624
      %v1626 = vpop.f32.mrb[0].mxu0
      %v1627 = vpop.f32.mrb[0].mxu0
      %v1628 = vadd.f32 %v1467, %v1627
      %v1629 = vpop.f32.mrb[0].mxu0
      %1630 = vmatprep.mubr.bf16.mxu0 %v358
      %1631 = vmatmul.mubr.bf16.gmra.mrb[0].mxu0 %v675
      %v1632 = vpop.f32.mrb[0].mxu0
      %v1633 = vadd.f32 %v1472, %v1632
      %v1634 = vpop.f32.mrb[0].mxu0
      %v1635 = vpop.f32.mrb[0].mxu0
      %v1636 = vadd.f32 %v1475, %v1635
      %v1637 = vpop.f32.mrb[0].mxu0
      %1638 = vmatprep.mubr.bf16.mxu0 %v359
      %1639 = vmatmul.mubr.bf16.gmra.mrb[0].mxu0 %v678
      %v1640 = vpop.f32.mrb[0].mxu0
      %v1641 = vadd.f32 %v1480, %v1640
      %v1642 = vpop.f32.mrb[0].mxu0
      %v1643 = vpop.f32.mrb[0].mxu0
      %v1644 = vadd.f32 %v1483, %v1643
      %v1645 = vpop.f32.mrb[0].mxu0
      %1646 = vmatprep.mubr.bf16.mxu0 %v702
      %1647 = vmatmul.mubr.bf16.gmra.mrb[0].mxu0 %v681
      %v1648 = vpop.f32.mrb[0].mxu0
      %v1649 = vadd.f32 %v1488, %v1648
      %v1650 = vpop.f32.mrb[0].mxu0
      %v1651 = vpop.f32.mrb[0].mxu0
      %v1652 = vadd.f32 %v1491, %v1651
      %v1653 = vpop.f32.mrb[0].mxu0
      %1654 = vdwg.mxu0
      %1655 = vmatprep.subr.bf16.mxu0 0
      %1656 = vmatpush1.bf16.msra.mxu0 %v1221
      %1657 = vmatprep.subr.bf16.mxu0 0
      %1658 = vmatpush1.bf16.msra.mxu0 %v1222
      %1659 = vmatprep.subr.bf16.mxu0 0
      %1660 = vmatpush1.bf16.msra.mxu0 %v1223
      %1661 = vmatprep.subr.bf16.mxu0 0
      %1662 = vmatpush1.bf16.msra.mxu0 %v1224
      %1663 = vmatprep.subr.bf16.mxu0 0
      %1664 = vmatpush1.bf16.msra.mxu0 %v1225
      %1665 = vmatprep.subr.bf16.mxu0 0
      %1666 = vmatpush1.bf16.msra.mxu0 %v1226
      %1667 = vmatprep.subr.bf16.mxu0 0
      %1668 = vmatpush1.bf16.msra.mxu0 %v1227
      %1669 = vmatprep.subr.bf16.mxu0 0
      %1670 = vmatpush1.bf16.msra.mxu0 %v1228
      %1671 = vmatprep.subr.bf16.mxu0 0
      %1672 = vmatpush1.bf16.msra.mxu0 %v1229
      %1673 = vmatprep.subr.bf16.mxu0 0
      %1674 = vmatpush1.bf16.msra.mxu0 %v1230
      %1675 = vmatprep.subr.bf16.mxu0 0
      %1676 = vmatpush1.bf16.msra.mxu0 %v1231
      %1677 = vmatprep.subr.bf16.mxu0 0
      %1678 = vmatpush1.bf16.msra.mxu0 %v1232
      %1679 = vmatprep.subr.bf16.mxu0 0
      %1680 = vmatpush1.bf16.msra.mxu0 %v1233
      %1681 = vmatprep.subr.bf16.mxu0 0
      %1682 = vmatpush1.bf16.msra.mxu0 %v1234
      %1683 = vmatprep.subr.bf16.mxu0 0
      %1684 = vmatpush1.bf16.msra.mxu0 %v1235
      %1685 = vmatprep.subr.bf16.mxu0 0
      %1686 = vmatpush1.bf16.msra.mxu0 %v1236
      %1687 = vmatprep.mubr.bf16.mxu0 %v639
      %1688 = vmatmul.mubr.bf16.gmra.mrb[0].mxu0 %v448
      %v1689 = vpop.f32.mrb[0].mxu0
      %v1690 = vadd.f32 %v1529, %v1689
      %v1691 = vpop.f32.mrb[0].mxu0
      %v1692 = vpop.f32.mrb[0].mxu0
      %v1693 = vadd.f32 %v1532, %v1692
      %v1694 = vpop.f32.mrb[0].mxu0
      %1695 = vmatprep.mubr.bf16.mxu0 %v642
      %1696 = vmatmul.mubr.bf16.gmra.mrb[0].mxu0 %v460
      %v1697 = vpop.f32.mrb[0].mxu0
      %v1698 = vadd.f32 %v1537, %v1697
      %v1699 = vpop.f32.mrb[0].mxu0
      %v1700 = vpop.f32.mrb[0].mxu0
      %v1701 = vadd.f32 %v1540, %v1700
      %v1702 = vpop.f32.mrb[0].mxu0
      %1703 = vmatprep.mubr.bf16.mxu0 %v645
      %1704 = vmatmul.mubr.bf16.gmra.mrb[0].mxu0 %v472
      %v1705 = vpop.f32.mrb[0].mxu0
      %v1706 = vadd.f32 %v1545, %v1705
      %v1707 = vpop.f32.mrb[0].mxu0
      %v1708 = vpop.f32.mrb[0].mxu0
      %v1709 = vadd.f32 %v1548, %v1708
      %v1710 = vpop.f32.mrb[0].mxu0
      %1711 = vmatprep.mubr.bf16.mxu0 %v648
      %1712 = vmatmul.mubr.bf16.gmra.mrb[0].mxu0 %v484
      %v1713 = vpop.f32.mrb[0].mxu0
      %v1714 = vadd.f32 %v1553, %v1713
      %v1715 = vpop.f32.mrb[0].mxu0
      %v1716 = vpop.f32.mrb[0].mxu0
      %v1717 = vadd.f32 %v1556, %v1716
      %v1718 = vpop.f32.mrb[0].mxu0
      %1719 = vmatprep.mubr.bf16.mxu0 %v651
      %1720 = vmatmul.mubr.bf16.gmra.mrb[0].mxu0 %v496
      %v1721 = vpop.f32.mrb[0].mxu0
      %v1722 = vadd.f32 %v1561, %v1721
      %v1723 = vpop.f32.mrb[0].mxu0
      %v1724 = vpop.f32.mrb[0].mxu0
      %v1725 = vadd.f32 %v1564, %v1724
      %v1726 = vpop.f32.mrb[0].mxu0
      %1727 = vmatprep.mubr.bf16.mxu0 %v654
      %1728 = vmatmul.mubr.bf16.gmra.mrb[0].mxu0 %v508
      %v1729 = vpop.f32.mrb[0].mxu0
      %v1730 = vadd.f32 %v1569, %v1729
      %v1731 = vpop.f32.mrb[0].mxu0
      %v1732 = vpop.f32.mrb[0].mxu0
      %v1733 = vadd.f32 %v1572, %v1732
      %v1734 = vpop.f32.mrb[0].mxu0
      %1735 = vmatprep.mubr.bf16.mxu0 %v657
      %1736 = vmatmul.mubr.bf16.gmra.mrb[0].mxu0 %v520
      %v1737 = vpop.f32.mrb[0].mxu0
      %v1738 = vadd.f32 %v1577, %v1737
      %v1739 = vpop.f32.mrb[0].mxu0
      %v1740 = vpop.f32.mrb[0].mxu0
      %v1741 = vadd.f32 %v1580, %v1740
      %v1742 = vpop.f32.mrb[0].mxu0
      %1743 = vmatprep.mubr.bf16.mxu0 %v660
      %1744 = vmatmul.mubr.bf16.gmra.mrb[0].mxu0 %v532
      %v1745 = vpop.f32.mrb[0].mxu0
      %v1746 = vadd.f32 %v1585, %v1745
      %v1747 = vpop.f32.mrb[0].mxu0
      %v1748 = vpop.f32.mrb[0].mxu0
      %v1749 = vadd.f32 %v1588, %v1748
      %v1750 = vpop.f32.mrb[0].mxu0
      %1751 = vmatprep.mubr.bf16.mxu0 %v663
      %1752 = vmatmul.mubr.bf16.gmra.mrb[0].mxu0 %v544
      %v1753 = vpop.f32.mrb[0].mxu0
      %v1754 = vadd.f32 %v1593, %v1753
      %v1755 = vpop.f32.mrb[0].mxu0
      %v1756 = vpop.f32.mrb[0].mxu0
      %v1757 = vadd.f32 %v1596, %v1756
      %v1758 = vpop.f32.mrb[0].mxu0
      %1759 = vmatprep.mubr.bf16.mxu0 %v666
      %1760 = vmatmul.mubr.bf16.gmra.mrb[0].mxu0 %v556
      %v1761 = vpop.f32.mrb[0].mxu0
      %v1762 = vadd.f32 %v1601, %v1761
      %v1763 = vpop.f32.mrb[0].mxu0
      %v1764 = vpop.f32.mrb[0].mxu0
      %v1765 = vadd.f32 %v1604, %v1764
      %v1766 = vpop.f32.mrb[0].mxu0
      %1767 = vmatprep.mubr.bf16.mxu0 %v669
      %1768 = vmatmul.mubr.bf16.gmra.mrb[0].mxu0 %v568
      %v1769 = vpop.f32.mrb[0].mxu0
      %v1770 = vadd.f32 %v1609, %v1769
      %v1771 = vpop.f32.mrb[0].mxu0
      %v1772 = vpop.f32.mrb[0].mxu0
      %v1773 = vadd.f32 %v1612, %v1772
      %v1774 = vpop.f32.mrb[0].mxu0
      %1775 = vmatprep.mubr.bf16.mxu0 %v672
      %1776 = vmatmul.mubr.bf16.gmra.mrb[0].mxu0 %v580
      %v1777 = vpop.f32.mrb[0].mxu0
      %v1778 = vadd.f32 %v1617, %v1777
      %v1779 = vpop.f32.mrb[0].mxu0
      %v1780 = vpop.f32.mrb[0].mxu0
      %v1781 = vadd.f32 %v1620, %v1780
      %v1782 = vpop.f32.mrb[0].mxu0
      %1783 = vmatprep.mubr.bf16.mxu0 %v675
      %1784 = vmatmul.mubr.bf16.gmra.mrb[0].mxu0 %v592
      %v1785 = vpop.f32.mrb[0].mxu0
      %v1786 = vadd.f32 %v1625, %v1785
      %v1787 = vpop.f32.mrb[0].mxu0
      %v1788 = vpop.f32.mrb[0].mxu0
      %v1789 = vadd.f32 %v1628, %v1788
      %v1790 = vpop.f32.mrb[0].mxu0
      %1791 = vmatprep.mubr.bf16.mxu0 %v678
      %1792 = vmatmul.mubr.bf16.gmra.mrb[0].mxu0 %v604
      %v1793 = vpop.f32.mrb[0].mxu0
      %v1794 = vadd.f32 %v1633, %v1793
      %v1795 = vpop.f32.mrb[0].mxu0
      %v1796 = vpop.f32.mrb[0].mxu0
      %v1797 = vadd.f32 %v1636, %v1796
      %v1798 = vpop.f32.mrb[0].mxu0
      %1799 = vmatprep.mubr.bf16.mxu0 %v681
      %1800 = vmatmul.mubr.bf16.gmra.mrb[0].mxu0 %v616
      %v1801 = vpop.f32.mrb[0].mxu0
      %v1802 = vadd.f32 %v1641, %v1801
      %v1803 = vpop.f32.mrb[0].mxu0
      %v1804 = vpop.f32.mrb[0].mxu0
      %v1805 = vadd.f32 %v1644, %v1804
      %v1806 = vpop.f32.mrb[0].mxu0
      %1807 = vmatprep.mubr.bf16.mxu0 %v722
      %1808 = vmatmul.mubr.bf16.gmra.mrb[0].mxu0 %v718
      %v1809 = vpop.f32.mrb[0].mxu0
      %v1810 = vadd.f32 %v1649, %v1809
      %v1811 = vpop.f32.mrb[0].mxu0
      %v1812 = vpop.f32.mrb[0].mxu0
      %v1813 = vadd.f32 %v1652, %v1812
      %v1814 = vpop.f32.mrb[0].mxu0
      %1815 = vdwg.mxu0
      %1816 = vmatprep.subr.bf16.mxu0 0
      %1817 = vmatpush1.bf16.msra.mxu0 %v1237
      %1818 = vmatprep.subr.bf16.mxu0 0
      %1819 = vmatpush1.bf16.msra.mxu0 %v1238
      %1820 = vmatprep.subr.bf16.mxu0 0
      %1821 = vmatpush1.bf16.msra.mxu0 %v1239
      %1822 = vmatprep.subr.bf16.mxu0 0
      %1823 = vmatpush1.bf16.msra.mxu0 %v1240
      %1824 = vmatprep.subr.bf16.mxu0 0
      %1825 = vmatpush1.bf16.msra.mxu0 %v1241
      %1826 = vmatprep.subr.bf16.mxu0 0
      %1827 = vmatpush1.bf16.msra.mxu0 %v1242
      %1828 = vmatprep.subr.bf16.mxu0 0
      %1829 = vmatpush1.bf16.msra.mxu0 %v1243
      %1830 = vmatprep.subr.bf16.mxu0 0
      %1831 = vmatpush1.bf16.msra.mxu0 %v1244
      %1832 = vmatprep.subr.bf16.mxu0 0
      %1833 = vmatpush1.bf16.msra.mxu0 %v1245
      %1834 = vmatprep.subr.bf16.mxu0 0
      %1835 = vmatpush1.bf16.msra.mxu0 %v1246
      %1836 = vmatprep.subr.bf16.mxu0 0
      %1837 = vmatpush1.bf16.msra.mxu0 %v1247
      %1838 = vmatprep.subr.bf16.mxu0 0
      %1839 = vmatpush1.bf16.msra.mxu0 %v1248
      %1840 = vmatprep.subr.bf16.mxu0 0
      %1841 = vmatpush1.bf16.msra.mxu0 %v1249
      %1842 = vmatprep.subr.bf16.mxu0 0
      %1843 = vmatpush1.bf16.msra.mxu0 %v1250
      %1844 = vmatprep.subr.bf16.mxu0 0
      %1845 = vmatpush1.bf16.msra.mxu0 %v1251
      %1846 = vmatprep.subr.bf16.mxu0 0
      %1847 = vmatpush1.bf16.msra.mxu0 %v1252
      %1848 = vmatprep.mubr.bf16.mxu0 %v460
      %1849 = vmatmul.mubr.bf16.gmra.mrb[0].mxu0 %v346
      %v1850 = vpop.f32.mrb[0].mxu0
      %v1851 = vadd.f32 %v1690, %v1850
      %v1852 = vpop.f32.mrb[0].mxu0
      %v1853 = vpop.f32.mrb[0].mxu0
      %v1854 = vadd.f32 %v1693, %v1853
      %v1855 = vpop.f32.mrb[0].mxu0
      %1856 = vmatprep.mubr.bf16.mxu0 %v472
      %1857 = vmatmul.mubr.bf16.gmra.mrb[0].mxu0 %v347
      %v1858 = vpop.f32.mrb[0].mxu0
      %v1859 = vadd.f32 %v1698, %v1858
      %v1860 = vpop.f32.mrb[0].mxu0
      %v1861 = vpop.f32.mrb[0].mxu0
      %v1862 = vadd.f32 %v1701, %v1861
      %v1863 = vpop.f32.mrb[0].mxu0
      %1864 = vmatprep.mubr.bf16.mxu0 %v484
      %1865 = vmatmul.mubr.bf16.gmra.mrb[0].mxu0 %v348
      %v1866 = vpop.f32.mrb[0].mxu0
      %v1867 = vadd.f32 %v1706, %v1866
      %v1868 = vpop.f32.mrb[0].mxu0
      %v1869 = vpop.f32.mrb[0].mxu0
      %v1870 = vadd.f32 %v1709, %v1869
      %v1871 = vpop.f32.mrb[0].mxu0
      %1872 = vmatprep.mubr.bf16.mxu0 %v496
      %1873 = vmatmul.mubr.bf16.gmra.mrb[0].mxu0 %v349
      %v1874 = vpop.f32.mrb[0].mxu0
      %v1875 = vadd.f32 %v1714, %v1874
      %v1876 = vpop.f32.mrb[0].mxu0
      %v1877 = vpop.f32.mrb[0].mxu0
      %v1878 = vadd.f32 %v1717, %v1877
      %v1879 = vpop.f32.mrb[0].mxu0
      %1880 = vmatprep.mubr.bf16.mxu0 %v508
      %1881 = vmatmul.mubr.bf16.gmra.mrb[0].mxu0 %v350
      %v1882 = vpop.f32.mrb[0].mxu0
      %v1883 = vadd.f32 %v1722, %v1882
      %v1884 = vpop.f32.mrb[0].mxu0
      %v1885 = vpop.f32.mrb[0].mxu0
      %v1886 = vadd.f32 %v1725, %v1885
      %v1887 = vpop.f32.mrb[0].mxu0
      %1888 = vmatprep.mubr.bf16.mxu0 %v520
      %1889 = vmatmul.mubr.bf16.gmra.mrb[0].mxu0 %v351
      %v1890 = vpop.f32.mrb[0].mxu0
      %v1891 = vadd.f32 %v1730, %v1890
      %v1892 = vpop.f32.mrb[0].mxu0
      %v1893 = vpop.f32.mrb[0].mxu0
      %v1894 = vadd.f32 %v1733, %v1893
      %v1895 = vpop.f32.mrb[0].mxu0
      %1896 = vmatprep.mubr.bf16.mxu0 %v532
      %1897 = vmatmul.mubr.bf16.gmra.mrb[0].mxu0 %v352
      %v1898 = vpop.f32.mrb[0].mxu0
      %v1899 = vadd.f32 %v1738, %v1898
      %v1900 = vpop.f32.mrb[0].mxu0
      %v1901 = vpop.f32.mrb[0].mxu0
      %v1902 = vadd.f32 %v1741, %v1901
      %v1903 = vpop.f32.mrb[0].mxu0
      %1904 = vmatprep.mubr.bf16.mxu0 %v544
      %1905 = vmatmul.mubr.bf16.gmra.mrb[0].mxu0 %v353
      %v1906 = vpop.f32.mrb[0].mxu0
      %v1907 = vadd.f32 %v1746, %v1906
      %v1908 = vpop.f32.mrb[0].mxu0
      %v1909 = vpop.f32.mrb[0].mxu0
      %v1910 = vadd.f32 %v1749, %v1909
      %v1911 = vpop.f32.mrb[0].mxu0
      %1912 = vmatprep.mubr.bf16.mxu0 %v556
      %1913 = vmatmul.mubr.bf16.gmra.mrb[0].mxu0 %v354
      %v1914 = vpop.f32.mrb[0].mxu0
      %v1915 = vadd.f32 %v1754, %v1914
      %v1916 = vpop.f32.mrb[0].mxu0
      %v1917 = vpop.f32.mrb[0].mxu0
      %v1918 = vadd.f32 %v1757, %v1917
      %v1919 = vpop.f32.mrb[0].mxu0
      %1920 = vmatprep.mubr.bf16.mxu0 %v568
      %1921 = vmatmul.mubr.bf16.gmra.mrb[0].mxu0 %v355
      %v1922 = vpop.f32.mrb[0].mxu0
      %v1923 = vadd.f32 %v1762, %v1922
      %v1924 = vpop.f32.mrb[0].mxu0
      %v1925 = vpop.f32.mrb[0].mxu0
      %v1926 = vadd.f32 %v1765, %v1925
      %v1927 = vpop.f32.mrb[0].mxu0
      %1928 = vmatprep.mubr.bf16.mxu0 %v580
      %1929 = vmatmul.mubr.bf16.gmra.mrb[0].mxu0 %v356
      %v1930 = vpop.f32.mrb[0].mxu0
      %v1931 = vadd.f32 %v1770, %v1930
      %v1932 = vpop.f32.mrb[0].mxu0
      %v1933 = vpop.f32.mrb[0].mxu0
      %v1934 = vadd.f32 %v1773, %v1933
      %v1935 = vpop.f32.mrb[0].mxu0
      %1936 = vmatprep.mubr.bf16.mxu0 %v592
      %1937 = vmatmul.mubr.bf16.gmra.mrb[0].mxu0 %v357
      %v1938 = vpop.f32.mrb[0].mxu0
      %v1939 = vadd.f32 %v1778, %v1938
      %v1940 = vpop.f32.mrb[0].mxu0
      %v1941 = vpop.f32.mrb[0].mxu0
      %v1942 = vadd.f32 %v1781, %v1941
      %v1943 = vpop.f32.mrb[0].mxu0
      %1944 = vmatprep.mubr.bf16.mxu0 %v604
      %1945 = vmatmul.mubr.bf16.gmra.mrb[0].mxu0 %v358
      %v1946 = vpop.f32.mrb[0].mxu0
      %v1947 = vadd.f32 %v1786, %v1946
      %v1948 = vpop.f32.mrb[0].mxu0
      %v1949 = vpop.f32.mrb[0].mxu0
      %v1950 = vadd.f32 %v1789, %v1949
      %v1951 = vpop.f32.mrb[0].mxu0
      %1952 = vmatprep.mubr.bf16.mxu0 %v616
      %1953 = vmatmul.mubr.bf16.gmra.mrb[0].mxu0 %v359
      %v1954 = vpop.f32.mrb[0].mxu0
      %v1955 = vadd.f32 %v1794, %v1954
      %v1956 = vpop.f32.mrb[0].mxu0
      %v1957 = vpop.f32.mrb[0].mxu0
      %v1958 = vadd.f32 %v1797, %v1957
      %v1959 = vpop.f32.mrb[0].mxu0
      %1960 = vmatprep.mubr.bf16.mxu0 %v718
      %1961 = vmatmul.mubr.bf16.gmra.mrb[0].mxu0 %v702
      %v1962 = vpop.f32.mrb[0].mxu0
      %v1963 = vadd.f32 %v1802, %v1962
      %v1964 = vpop.f32.mrb[0].mxu0
      %v1965 = vpop.f32.mrb[0].mxu0
      %v1966 = vadd.f32 %v1805, %v1965
      %v1967 = vpop.f32.mrb[0].mxu0
      %1968 = vmatprep.mubr.bf16.mxu0 %v744
      %1969 = vmatmul.mubr.bf16.gmra.mrb[0].mxu0 %v728
      %v1970 = vpop.f32.mrb[0].mxu0
      %v1971 = vadd.f32 %v1810, %v1970
      %v1972 = vpop.f32.mrb[0].mxu0
      %v1973 = vpop.f32.mrb[0].mxu0
      %v1974 = vadd.f32 %v1813, %v1973
      %v1975 = vpop.f32.mrb[0].mxu0
      %1976 = vdwg.mxu0
      %1977 = vmatprep.subr.bf16.mxu0 0
      %1978 = vmatpush1.bf16.msra.mxu0 %v1253
      %1979 = vmatprep.subr.bf16.mxu0 0
      %1980 = vmatpush1.bf16.msra.mxu0 %v1254
      %1981 = vmatprep.subr.bf16.mxu0 0
      %1982 = vmatpush1.bf16.msra.mxu0 %v1255
      %1983 = vmatprep.subr.bf16.mxu0 0
      %1984 = vmatpush1.bf16.msra.mxu0 %v1256
      %1985 = vmatprep.subr.bf16.mxu0 0
      %1986 = vmatpush1.bf16.msra.mxu0 %v1257
      %1987 = vmatprep.subr.bf16.mxu0 0
      %1988 = vmatpush1.bf16.msra.mxu0 %v1258
      %1989 = vmatprep.subr.bf16.mxu0 0
      %1990 = vmatpush1.bf16.msra.mxu0 %v1259
      %1991 = vmatprep.subr.bf16.mxu0 0
      %1992 = vmatpush1.bf16.msra.mxu0 %v1260
      %1993 = vmatprep.subr.bf16.mxu0 0
      %1994 = vmatpush1.bf16.msra.mxu0 0
      %1995 = vmatprep.subr.bf16.mxu0 0
      %1996 = vmatpush1.bf16.msra.mxu0 0
      %1997 = vmatprep.subr.bf16.mxu0 0
      %1998 = vmatpush1.bf16.msra.mxu0 0
      %1999 = vmatprep.subr.bf16.mxu0 0
      %2000 = vmatpush1.bf16.msra.mxu0 0
      %2001 = vmatprep.subr.bf16.mxu0 0
      %2002 = vmatpush1.bf16.msra.mxu0 0
      %2003 = vmatprep.subr.bf16.mxu0 0
      %2004 = vmatpush1.bf16.msra.mxu0 0
      %2005 = vmatprep.subr.bf16.mxu0 0
      %2006 = vmatpush1.bf16.msra.mxu0 0
      %2007 = vmatprep.subr.bf16.mxu0 0
      %2008 = vmatpush1.bf16.msra.mxu0 0
      %2009 = vmatprep.mubr.bf16.mxu0 0
      %2010 = vmatmul.mubr.bf16.gmra.mrb[0].mxu0 %v642
      %v2011 = vpop.f32.mrb[0].mxu0
      %v2012 = vadd.f32 %v1851, %v2011
      %v2013 = vpop.f32.mrb[0].mxu0
      %v2014 = vpop.f32.mrb[0].mxu0
      %v2015 = vadd.f32 %v1854, %v2014
      %v2016 = vpop.f32.mrb[0].mxu0
      %2017 = vmatprep.mubr.bf16.mxu0 0
      %2018 = vmatmul.mubr.bf16.gmra.mrb[0].mxu0 %v645
      %v2019 = vpop.f32.mrb[0].mxu0
      %v2020 = vadd.f32 %v1859, %v2019
      %v2021 = vpop.f32.mrb[0].mxu0
      %v2022 = vpop.f32.mrb[0].mxu0
      %v2023 = vadd.f32 %v1862, %v2022
      %v2024 = vpop.f32.mrb[0].mxu0
      %2025 = vmatprep.mubr.bf16.mxu0 0
      %2026 = vmatmul.mubr.bf16.gmra.mrb[0].mxu0 %v648
      %v2027 = vpop.f32.mrb[0].mxu0
      %v2028 = vadd.f32 %v1867, %v2027
      %v2029 = vpop.f32.mrb[0].mxu0
      %v2030 = vpop.f32.mrb[0].mxu0
      %v2031 = vadd.f32 %v1870, %v2030
      %v2032 = vpop.f32.mrb[0].mxu0
      %2033 = vmatprep.mubr.bf16.mxu0 0
      %2034 = vmatmul.mubr.bf16.gmra.mrb[0].mxu0 %v651
      %v2035 = vpop.f32.mrb[0].mxu0
      %v2036 = vadd.f32 %v1875, %v2035
      %v2037 = vpop.f32.mrb[0].mxu0
      %v2038 = vpop.f32.mrb[0].mxu0
      %v2039 = vadd.f32 %v1878, %v2038
      %v2040 = vpop.f32.mrb[0].mxu0
      %2041 = vmatprep.mubr.bf16.mxu0 0
      %2042 = vmatmul.mubr.bf16.gmra.mrb[0].mxu0 %v654
      %v2043 = vpop.f32.mrb[0].mxu0
      %v2044 = vadd.f32 %v1883, %v2043
      %v2045 = vpop.f32.mrb[0].mxu0
      %v2046 = vpop.f32.mrb[0].mxu0
      %v2047 = vadd.f32 %v1886, %v2046
      %v2048 = vpop.f32.mrb[0].mxu0
      %2049 = vmatprep.mubr.bf16.mxu0 0
      %2050 = vmatmul.mubr.bf16.gmra.mrb[0].mxu0 %v657
      %v2051 = vpop.f32.mrb[0].mxu0
      %v2052 = vadd.f32 %v1891, %v2051
      %v2053 = vpop.f32.mrb[0].mxu0
      %v2054 = vpop.f32.mrb[0].mxu0
      %v2055 = vadd.f32 %v1894, %v2054
      %v2056 = vpop.f32.mrb[0].mxu0
      %2057 = vmatprep.mubr.bf16.mxu0 0
      %2058 = vmatmul.mubr.bf16.gmra.mrb[0].mxu0 %v660
      %v2059 = vpop.f32.mrb[0].mxu0
      %v2060 = vadd.f32 %v1899, %v2059
      %v2061 = vpop.f32.mrb[0].mxu0
      %v2062 = vpop.f32.mrb[0].mxu0
      %v2063 = vadd.f32 %v1902, %v2062
      %v2064 = vpop.f32.mrb[0].mxu0
      %2065 = vmatprep.mubr.bf16.mxu0 0
      %2066 = vmatmul.mubr.bf16.gmra.mrb[0].mxu0 %v663
      %v2067 = vpop.f32.mrb[0].mxu0
      %v2068 = vadd.f32 %v1907, %v2067
      %v2069 = vpop.f32.mrb[0].mxu0
      %v2070 = vpop.f32.mrb[0].mxu0
      %v2071 = vadd.f32 %v1910, %v2070
      %v2072 = vpop.f32.mrb[0].mxu0
      %2073 = vmatprep.mubr.bf16.mxu0 0
      %2074 = vmatmul.mubr.bf16.gmra.mrb[0].mxu0 %v666
      %v2075 = vpop.f32.mrb[0].mxu0
      %v2076 = vadd.f32 %v1915, %v2075
      %v2077 = vpop.f32.mrb[0].mxu0
      %v2078 = vpop.f32.mrb[0].mxu0
      %v2079 = vadd.f32 %v1918, %v2078
      %v2080 = vpop.f32.mrb[0].mxu0
      %2081 = vmatprep.mubr.bf16.mxu0 0
      %2082 = vmatmul.mubr.bf16.gmra.mrb[0].mxu0 %v669
      %v2083 = vpop.f32.mrb[0].mxu0
      %v2084 = vadd.f32 %v1923, %v2083
      %v2085 = vpop.f32.mrb[0].mxu0
      %v2086 = vpop.f32.mrb[0].mxu0
      %v2087 = vadd.f32 %v1926, %v2086
      %v2088 = vpop.f32.mrb[0].mxu0
      %2089 = vmatprep.mubr.bf16.mxu0 0
      %2090 = vmatmul.mubr.bf16.gmra.mrb[0].mxu0 %v672
      %v2091 = vpop.f32.mrb[0].mxu0
      %v2092 = vadd.f32 %v1931, %v2091
      %v2093 = vpop.f32.mrb[0].mxu0
      %v2094 = vpop.f32.mrb[0].mxu0
      %v2095 = vadd.f32 %v1934, %v2094
      %v2096 = vpop.f32.mrb[0].mxu0
      %2097 = vmatprep.mubr.bf16.mxu0 0
      %2098 = vmatmul.mubr.bf16.gmra.mrb[0].mxu0 %v675
      %v2099 = vpop.f32.mrb[0].mxu0
      %v2100 = vadd.f32 %v1939, %v2099
      %v2101 = vpop.f32.mrb[0].mxu0
      %v2102 = vpop.f32.mrb[0].mxu0
      %v2103 = vadd.f32 %v1942, %v2102
      %v2104 = vpop.f32.mrb[0].mxu0
      %2105 = vmatprep.mubr.bf16.mxu0 0
      %2106 = vmatmul.mubr.bf16.gmra.mrb[0].mxu0 %v678
      %v2107 = vpop.f32.mrb[0].mxu0
      %v2108 = vadd.f32 %v1947, %v2107
      %v2109 = vpop.f32.mrb[0].mxu0
      %v2110 = vpop.f32.mrb[0].mxu0
      %v2111 = vadd.f32 %v1950, %v2110
      %v2112 = vpop.f32.mrb[0].mxu0
      %2113 = vmatprep.mubr.bf16.mxu0 0
      %2114 = vmatmul.mubr.bf16.gmra.mrb[0].mxu0 %v681
      %v2115 = vpop.f32.mrb[0].mxu0
      %v2116 = vadd.f32 %v1955, %v2115
      %v2117 = vpop.f32.mrb[0].mxu0
      %v2118 = vpop.f32.mrb[0].mxu0
      %v2119 = vadd.f32 %v1958, %v2118
      %v2120 = vpop.f32.mrb[0].mxu0
      %2121 = vmatprep.mubr.bf16.mxu0 0
      %2122 = vmatmul.mubr.bf16.gmra.mrb[0].mxu0 %v722
      %v2123 = vpop.f32.mrb[0].mxu0
      %v2124 = vadd.f32 %v1963, %v2123
      %v2125 = vpop.f32.mrb[0].mxu0
      %v2126 = vpop.f32.mrb[0].mxu0
      %v2127 = vadd.f32 %v1966, %v2126
      %v2128 = vpop.f32.mrb[0].mxu0
      %2129 = vmatprep.mubr.bf16.mxu0 0
      %2130 = vmatmul.mubr.bf16.gmra.mrb[0].mxu0 %v748
      %v2131 = vpop.f32.mrb[0].mxu0
      %v2132 = vadd.f32 %v1971, %v2131
      %v2133 = vpop.f32.mrb[0].mxu0
      %v2134 = vpop.f32.mrb[0].mxu0
      %v2135 = vadd.f32 %v1974, %v2134
      %v2136 = vpop.f32.mrb[0].mxu0
      %2137 = vdwg.mxu0
      %v2138 = vmax.f32 %v2012, 0.0
      %v2139 = vmax.f32 %v2015, 0.0
      %v2140 = vmax.f32 %v2020, 0.0
      %v2141 = vmax.f32 %v2023, 0.0
      %v2142 = vmax.f32 %v2028, 0.0
      %v2143 = vmax.f32 %v2031, 0.0
      %v2144 = vmax.f32 %v2036, 0.0
      %v2145 = vmax.f32 %v2039, 0.0
      %v2146 = vmax.f32 %v2044, 0.0
      %v2147 = vmax.f32 %v2047, 0.0
      %v2148 = vmax.f32 %v2052, 0.0
      %v2149 = vmax.f32 %v2055, 0.0
      %v2150 = vmax.f32 %v2060, 0.0
      %v2151 = vmax.f32 %v2063, 0.0
      %v2152 = vmax.f32 %v2068, 0.0
      %v2153 = vmax.f32 %v2071, 0.0
      %v2154 = vmax.f32 %v2076, 0.0
      %v2155 = vmax.f32 %v2079, 0.0
      %v2156 = vmax.f32 %v2084, 0.0
      %v2157 = vmax.f32 %v2087, 0.0
      %v2158 = vmax.f32 %v2092, 0.0
      %v2159 = vmax.f32 %v2095, 0.0
      %v2160 = vmax.f32 %v2100, 0.0
      %v2161 = vmax.f32 %v2103, 0.0
      %v2162 = vmax.f32 %v2108, 0.0
      %v2163 = vmax.f32 %v2111, 0.0
      %v2164 = vmax.f32 %v2116, 0.0
      %v2165 = vmax.f32 %v2119, 0.0
      %v2166 = vmax.f32 %v2124, 0.0
      %v2167 = vmax.f32 %v2127, 0.0
      %v2168 = vmax.f32 %v2132, 0.0
      %v2169 = vmax.f32 %v2135, 0.0
      %v2170 = vpack.c.bf16 %v2139, %v2138
      %v2171 = vpack.c.bf16 %v2141, %v2140
      %v2172 = vpack.c.bf16 %v2143, %v2142
      %v2173 = vpack.c.bf16 %v2145, %v2144
      %v2174 = vpack.c.bf16 %v2147, %v2146
      %v2175 = vpack.c.bf16 %v2149, %v2148
      %v2176 = vpack.c.bf16 %v2151, %v2150
      %v2177 = vpack.c.bf16 %v2153, %v2152
      %v2178 = vpack.c.bf16 %v2155, %v2154
      %v2179 = vpack.c.bf16 %v2157, %v2156
      %v2180 = vpack.c.bf16 %v2159, %v2158
      %v2181 = vpack.c.bf16 %v2161, %v2160
      %v2182 = vpack.c.bf16 %v2163, %v2162
      %v2183 = vpack.c.bf16 %v2165, %v2164
      %v2184 = vpack.c.bf16 %v2167, %v2166
      %v2185 = vpack.c.bf16 %v2169, %v2168
      %v2202 = vunpack.c.l.b16 %v2170
      %v2203 = vunpack.c.h.b16 %v2170
      %v2204 = vunpack.c.l.b16 %v2171
      %v2205 = vunpack.c.h.b16 %v2171
      %v2206 = vunpack.c.l.b16 %v2172
      %v2207 = vunpack.c.h.b16 %v2172
      %v2208 = vunpack.c.l.b16 %v2173
      %v2209 = vunpack.c.h.b16 %v2173
      %v2210 = vunpack.c.l.b16 %v2174
      %v2211 = vunpack.c.h.b16 %v2174
      %v2212 = vunpack.c.l.b16 %v2175
      %v2213 = vunpack.c.h.b16 %v2175
      %v2214 = vunpack.c.l.b16 %v2176
      %v2215 = vunpack.c.h.b16 %v2176
      %v2216 = vunpack.c.l.b16 %v2177
      %v2217 = vunpack.c.h.b16 %v2177
      %v2218 = vunpack.c.l.b16 %v2178
      %v2219 = vunpack.c.h.b16 %v2178
      %v2220 = vunpack.c.l.b16 %v2179
      %v2221 = vunpack.c.h.b16 %v2179
      %v2222 = vunpack.c.l.b16 %v2180
      %v2223 = vunpack.c.h.b16 %v2180
      %v2224 = vunpack.c.l.b16 %v2181
      %v2225 = vunpack.c.h.b16 %v2181
      %v2226 = vunpack.c.l.b16 %v2182
      %v2227 = vunpack.c.h.b16 %v2182
      %v2228 = vunpack.c.l.b16 %v2183
      %v2229 = vunpack.c.h.b16 %v2183
      %v2230 = vunpack.c.l.b16 %v2184
      %v2231 = vunpack.c.h.b16 %v2184
      %v2232 = vunpack.c.l.b16 %v2185
      %v2233 = vunpack.c.h.b16 %v2185
      %v2234 = vpack.c.b16 %v2202, %v2202
      %v2235 = vpack.c.b16 %v2203, %v2203
      %v2236 = vpack.c.b16 %v2204, %v2204
      %v2237 = vpack.c.b16 %v2205, %v2205
      %v2238 = vpack.c.b16 %v2206, %v2206
      %v2239 = vpack.c.b16 %v2207, %v2207
      %v2240 = vpack.c.b16 %v2208, %v2208
      %v2241 = vpack.c.b16 %v2209, %v2209
      %v2242 = vpack.c.b16 %v2210, %v2210
      %v2243 = vpack.c.b16 %v2211, %v2211
      %v2244 = vpack.c.b16 %v2212, %v2212
      %v2245 = vpack.c.b16 %v2213, %v2213
      %v2246 = vpack.c.b16 %v2214, %v2214
      %v2247 = vpack.c.b16 %v2215, %v2215
      %v2248 = vpack.c.b16 %v2216, %v2216
      %v2249 = vpack.c.b16 %v2217, %v2217
      %v2250 = vpack.c.b16 %v2218, %v2218
      %v2251 = vpack.c.b16 %v2219, %v2219
      %v2252 = vpack.c.b16 %v2220, %v2220
      %v2253 = vpack.c.b16 %v2221, %v2221
      %v2254 = vpack.c.b16 %v2222, %v2222
      %v2255 = vpack.c.b16 %v2223, %v2223
      %v2256 = vpack.c.b16 %v2224, %v2224
      %v2257 = vpack.c.b16 %v2225, %v2225
      %v2258 = vpack.c.b16 %v2226, %v2226
      %v2259 = vpack.c.b16 %v2227, %v2227
      %v2260 = vpack.c.b16 %v2228, %v2228
      %v2261 = vpack.c.b16 %v2229, %v2229
      %v2262 = vpack.c.b16 %v2230, %v2230
      %v2263 = vpack.c.b16 %v2231, %v2231
      %v2264 = vpack.c.b16 %v2232, %v2232
      %v2265 = vpack.c.b16 %v2233, %v2233
      %vm2266 = vsmask.f32 256
      %vm2267 = vsmask.f32 4368
      %vm2268 = vmor %vm2266, %vm2267
      %v2270 = vshrl.u32 %v2234, 16
      %v2272 = vrot.slane %v2270, 7
      %v2273 = vshll.u32 %v2234, 16
      %v2275 = vor.u32 %v2272, %v2273
      %v2276 = vrot.slane %v2272, 4
      %v2278 = vshrl.u32 %v2235, 16
      %v2280 = vrot.slane %v2278, 7
      %v2281 = vshll.u32 %v2235, 16
      %v2283 = vor.u32 %v2280, %v2281
      %v2284 = vsel %vm2268, %v2276, %v2283
      %v2285 = vrot.slane %v2280, 4
      %v2287 = vshrl.u32 %v2236, 16
      %v2289 = vrot.slane %v2287, 7
      %v2290 = vshll.u32 %v2236, 16
      %v2292 = vor.u32 %v2289, %v2290
      %v2293 = vrot.slane %v2289, 4
      %v2295 = vshrl.u32 %v2237, 16
      %v2297 = vrot.slane %v2295, 7
      %v2298 = vshll.u32 %v2237, 16
      %v2300 = vor.u32 %v2297, %v2298
      %v2301 = vsel %vm2268, %v2293, %v2300
      %v2302 = vrot.slane %v2297, 4
      %v2304 = vshrl.u32 %v2238, 16
      %v2306 = vrot.slane %v2304, 7
      %v2307 = vshll.u32 %v2238, 16
      %v2309 = vor.u32 %v2306, %v2307
      %v2310 = vrot.slane %v2306, 4
      %v2312 = vshrl.u32 %v2239, 16
      %v2314 = vrot.slane %v2312, 7
      %v2315 = vshll.u32 %v2239, 16
      %v2317 = vor.u32 %v2314, %v2315
      %v2318 = vsel %vm2268, %v2310, %v2317
      %v2319 = vrot.slane %v2314, 4
      %v2321 = vshrl.u32 %v2240, 16
      %v2323 = vrot.slane %v2321, 7
      %v2324 = vshll.u32 %v2240, 16
      %v2326 = vor.u32 %v2323, %v2324
      %v2327 = vrot.slane %v2323, 4
      %v2329 = vshrl.u32 %v2241, 16
      %v2331 = vrot.slane %v2329, 7
      %v2332 = vshll.u32 %v2241, 16
      %v2334 = vor.u32 %v2331, %v2332
      %v2335 = vsel %vm2268, %v2327, %v2334
      %v2336 = vrot.slane %v2331, 4
      %v2338 = vshrl.u32 %v2242, 16
      %v2340 = vrot.slane %v2338, 7
      %v2341 = vshll.u32 %v2242, 16
      %v2343 = vor.u32 %v2340, %v2341
      %v2344 = vrot.slane %v2340, 4
      %v2346 = vshrl.u32 %v2243, 16
      %v2348 = vrot.slane %v2346, 7
      %v2349 = vshll.u32 %v2243, 16
      %v2351 = vor.u32 %v2348, %v2349
      %v2352 = vsel %vm2268, %v2344, %v2351
      %v2353 = vrot.slane %v2348, 4
      %v2355 = vshrl.u32 %v2244, 16
      %v2357 = vrot.slane %v2355, 7
      %v2358 = vshll.u32 %v2244, 16
      %v2360 = vor.u32 %v2357, %v2358
      %v2361 = vrot.slane %v2357, 4
      %v2363 = vshrl.u32 %v2245, 16
      %v2365 = vrot.slane %v2363, 7
      %v2366 = vshll.u32 %v2245, 16
      %v2368 = vor.u32 %v2365, %v2366
      %v2369 = vsel %vm2268, %v2361, %v2368
      %v2370 = vrot.slane %v2365, 4
      %v2372 = vshrl.u32 %v2246, 16
      %v2374 = vrot.slane %v2372, 7
      %v2375 = vshll.u32 %v2246, 16
      %v2377 = vor.u32 %v2374, %v2375
      %v2378 = vrot.slane %v2374, 4
      %v2380 = vshrl.u32 %v2247, 16
      %v2382 = vrot.slane %v2380, 7
      %v2383 = vshll.u32 %v2247, 16
      %v2385 = vor.u32 %v2382, %v2383
      %v2386 = vsel %vm2268, %v2378, %v2385
      %v2387 = vrot.slane %v2382, 4
      %v2389 = vshrl.u32 %v2248, 16
      %v2391 = vrot.slane %v2389, 7
      %v2392 = vshll.u32 %v2248, 16
      %v2394 = vor.u32 %v2391, %v2392
      %v2395 = vrot.slane %v2391, 4
      %v2397 = vshrl.u32 %v2249, 16
      %v2399 = vrot.slane %v2397, 7
      %v2400 = vshll.u32 %v2249, 16
      %v2402 = vor.u32 %v2399, %v2400
      %v2403 = vsel %vm2268, %v2395, %v2402
      %v2404 = vrot.slane %v2399, 4
      %v2406 = vshrl.u32 %v2250, 16
      %v2408 = vrot.slane %v2406, 7
      %v2409 = vshll.u32 %v2250, 16
      %v2411 = vor.u32 %v2408, %v2409
      %v2412 = vrot.slane %v2408, 4
      %v2414 = vshrl.u32 %v2251, 16
      %v2416 = vrot.slane %v2414, 7
      %v2417 = vshll.u32 %v2251, 16
      %v2419 = vor.u32 %v2416, %v2417
      %v2420 = vsel %vm2268, %v2412, %v2419
      %v2421 = vrot.slane %v2416, 4
      %v2423 = vshrl.u32 %v2252, 16
      %v2425 = vrot.slane %v2423, 7
      %v2426 = vshll.u32 %v2252, 16
      %v2428 = vor.u32 %v2425, %v2426
      %v2429 = vrot.slane %v2425, 4
      %v2431 = vshrl.u32 %v2253, 16
      %v2433 = vrot.slane %v2431, 7
      %v2434 = vshll.u32 %v2253, 16
      %v2436 = vor.u32 %v2433, %v2434
      %v2437 = vsel %vm2268, %v2429, %v2436
      %v2438 = vrot.slane %v2433, 4
      %v2440 = vshrl.u32 %v2254, 16
      %v2442 = vrot.slane %v2440, 7
      %v2443 = vshll.u32 %v2254, 16
      %v2445 = vor.u32 %v2442, %v2443
      %v2446 = vrot.slane %v2442, 4
      %v2448 = vshrl.u32 %v2255, 16
      %v2450 = vrot.slane %v2448, 7
      %v2451 = vshll.u32 %v2255, 16
      %v2453 = vor.u32 %v2450, %v2451
      %v2454 = vsel %vm2268, %v2446, %v2453
      %v2455 = vrot.slane %v2450, 4
      %v2457 = vshrl.u32 %v2256, 16
      %v2459 = vrot.slane %v2457, 7
      %v2460 = vshll.u32 %v2256, 16
      %v2462 = vor.u32 %v2459, %v2460
      %v2463 = vrot.slane %v2459, 4
      %v2465 = vshrl.u32 %v2257, 16
      %v2467 = vrot.slane %v2465, 7
      %v2468 = vshll.u32 %v2257, 16
      %v2470 = vor.u32 %v2467, %v2468
      %v2471 = vsel %vm2268, %v2463, %v2470
      %v2472 = vrot.slane %v2467, 4
      %v2474 = vshrl.u32 %v2258, 16
      %v2476 = vrot.slane %v2474, 7
      %v2477 = vshll.u32 %v2258, 16
      %v2479 = vor.u32 %v2476, %v2477
      %v2480 = vrot.slane %v2476, 4
      %v2482 = vshrl.u32 %v2259, 16
      %v2484 = vrot.slane %v2482, 7
      %v2485 = vshll.u32 %v2259, 16
      %v2487 = vor.u32 %v2484, %v2485
      %v2488 = vsel %vm2268, %v2480, %v2487
      %v2489 = vrot.slane %v2484, 4
      %v2491 = vshrl.u32 %v2260, 16
      %v2493 = vrot.slane %v2491, 7
      %v2494 = vshll.u32 %v2260, 16
      %v2496 = vor.u32 %v2493, %v2494
      %v2497 = vrot.slane %v2493, 4
      %v2499 = vshrl.u32 %v2261, 16
      %v2501 = vrot.slane %v2499, 7
      %v2502 = vshll.u32 %v2261, 16
      %v2504 = vor.u32 %v2501, %v2502
      %v2505 = vsel %vm2268, %v2497, %v2504
      %v2506 = vrot.slane %v2501, 4
      %v2508 = vshrl.u32 %v2262, 16
      %v2510 = vrot.slane %v2508, 7
      %v2511 = vshll.u32 %v2262, 16
      %v2513 = vor.u32 %v2510, %v2511
      %v2514 = vrot.slane %v2510, 4
      %v2516 = vshrl.u32 %v2263, 16
      %v2518 = vrot.slane %v2516, 7
      %v2519 = vshll.u32 %v2263, 16
      %v2521 = vor.u32 %v2518, %v2519
      %v2522 = vsel %vm2268, %v2514, %v2521
      %v2523 = vrot.slane %v2518, 4
      %v2525 = vshrl.u32 %v2264, 16
      %v2527 = vrot.slane %v2525, 7
      %v2528 = vshll.u32 %v2264, 16
      %v2530 = vor.u32 %v2527, %v2528
      %v2531 = vrot.slane %v2527, 4
      %v2533 = vshrl.u32 %v2265, 16
      %v2535 = vrot.slane %v2533, 7
      %v2536 = vshll.u32 %v2265, 16
      %v2538 = vor.u32 %v2535, %v2536
      %v2539 = vsel %vm2268, %v2531, %v2538
      %v2540 = vrot.slane %v2535, 4
      %s2589 = scalar_lea.vmem [#allocation2], 12
      %vm2590 = vcmask 1043456
      %vm2591 = vsmask.f32 7938
      %vm2592 = vmand %vm2590, %vm2591
      %v2593 = vld [vmem:[%s2589] sm:$0xf]
      %v2594 = vsel %vm2592, %v2275, %v2593
      %2595 = vst [vmem:[%s2589] sm:$0xf] %v2594
      %2596 = vst [vmem:[%s2589 + $0x4] sm:$0xf] %v2284
      %vm2597 = vcmask 1040384
      %vm2598 = vmand %vm2597, %vm2266
      %v2599 = vld [vmem:[%s2589 + $0x8] sm:$0x1]
      %v2600 = vsel %vm2598, %v2285, %v2599
      %2601 = vst [vmem:[%s2589 + $0x8] sm:$0x1] %v2600
      %v2602 = vld [vmem:[%s2589 + $0xc] sm:$0xf]
      %v2603 = vsel %vm2592, %v2292, %v2602
      %2604 = vst [vmem:[%s2589 + $0xc] sm:$0xf] %v2603
      %2605 = vst [vmem:[%s2589 + $0x10] sm:$0xf] %v2301
      %v2606 = vld [vmem:[%s2589 + $0x14] sm:$0x1]
      %v2607 = vsel %vm2598, %v2302, %v2606
      %2608 = vst [vmem:[%s2589 + $0x14] sm:$0x1] %v2607
      %v2609 = vld [vmem:[%s2589 + $0x18] sm:$0xf]
      %v2610 = vsel %vm2592, %v2309, %v2609
      %2611 = vst [vmem:[%s2589 + $0x18] sm:$0xf] %v2610
      %2612 = vst [vmem:[%s2589 + $0x1c] sm:$0xf] %v2318
      %v2613 = vld [vmem:[%s2589 + $0x20] sm:$0x1]
      %v2614 = vsel %vm2598, %v2319, %v2613
      %2615 = vst [vmem:[%s2589 + $0x20] sm:$0x1] %v2614
      %v2616 = vld [vmem:[%s2589 + $0x24] sm:$0xf]
      %v2617 = vsel %vm2592, %v2326, %v2616
      %2618 = vst [vmem:[%s2589 + $0x24] sm:$0xf] %v2617
      %2619 = vst [vmem:[%s2589 + $0x28] sm:$0xf] %v2335
      %v2620 = vld [vmem:[%s2589 + $0x2c] sm:$0x1]
      %v2621 = vsel %vm2598, %v2336, %v2620
      %2622 = vst [vmem:[%s2589 + $0x2c] sm:$0x1] %v2621
      %v2623 = vld [vmem:[%s2589 + $0x30] sm:$0xf]
      %v2624 = vsel %vm2592, %v2343, %v2623
      %2625 = vst [vmem:[%s2589 + $0x30] sm:$0xf] %v2624
      %2626 = vst [vmem:[%s2589 + $0x34] sm:$0xf] %v2352
      %v2627 = vld [vmem:[%s2589 + $0x38] sm:$0x1]
      %v2628 = vsel %vm2598, %v2353, %v2627
      %2629 = vst [vmem:[%s2589 + $0x38] sm:$0x1] %v2628
      %v2630 = vld [vmem:[%s2589 + $0x3c] sm:$0xf]
      %v2631 = vsel %vm2592, %v2360, %v2630
      %2632 = vst [vmem:[%s2589 + $0x3c] sm:$0xf] %v2631
      %2633 = vst [vmem:[%s2589 + $0x40] sm:$0xf] %v2369
      %v2634 = vld [vmem:[%s2589 + $0x44] sm:$0x1]
      %v2635 = vsel %vm2598, %v2370, %v2634
      %2636 = vst [vmem:[%s2589 + $0x44] sm:$0x1] %v2635
      %v2637 = vld [vmem:[%s2589 + $0x48] sm:$0xf]
      %v2638 = vsel %vm2592, %v2377, %v2637
      %2639 = vst [vmem:[%s2589 + $0x48] sm:$0xf] %v2638
      %2640 = vst [vmem:[%s2589 + $0x4c] sm:$0xf] %v2386
      %v2641 = vld [vmem:[%s2589 + $0x50] sm:$0x1]
      %v2642 = vsel %vm2598, %v2387, %v2641
      %2643 = vst [vmem:[%s2589 + $0x50] sm:$0x1] %v2642
      %v2644 = vld [vmem:[%s2589 + $0x54] sm:$0xf]
      %v2645 = vsel %vm2592, %v2394, %v2644
      %2646 = vst [vmem:[%s2589 + $0x54] sm:$0xf] %v2645
      %2647 = vst [vmem:[%s2589 + $0x58] sm:$0xf] %v2403
      %v2648 = vld [vmem:[%s2589 + $0x5c] sm:$0x1]
      %v2649 = vsel %vm2598, %v2404, %v2648
      %2650 = vst [vmem:[%s2589 + $0x5c] sm:$0x1] %v2649
      %v2651 = vld [vmem:[%s2589 + $0x60] sm:$0xf]
      %v2652 = vsel %vm2592, %v2411, %v2651
      %2653 = vst [vmem:[%s2589 + $0x60] sm:$0xf] %v2652
      %2654 = vst [vmem:[%s2589 + $0x64] sm:$0xf] %v2420
      %v2655 = vld [vmem:[%s2589 + $0x68] sm:$0x1]
      %v2656 = vsel %vm2598, %v2421, %v2655
      %2657 = vst [vmem:[%s2589 + $0x68] sm:$0x1] %v2656
      %v2658 = vld [vmem:[%s2589 + $0x6c] sm:$0xf]
      %v2659 = vsel %vm2592, %v2428, %v2658
      %2660 = vst [vmem:[%s2589 + $0x6c] sm:$0xf] %v2659
      %2661 = vst [vmem:[%s2589 + $0x70] sm:$0xf] %v2437
      %v2662 = vld [vmem:[%s2589 + $0x74] sm:$0x1]
      %v2663 = vsel %vm2598, %v2438, %v2662
      %2664 = vst [vmem:[%s2589 + $0x74] sm:$0x1] %v2663
      %v2665 = vld [vmem:[%s2589 + $0x78] sm:$0xf]
      %v2666 = vsel %vm2592, %v2445, %v2665
      %2667 = vst [vmem:[%s2589 + $0x78] sm:$0xf] %v2666
      %2668 = vst [vmem:[%s2589 + $0x7c] sm:$0xf] %v2454
      %v2669 = vld [vmem:[%s2589 + $0x80] sm:$0x1]
      %v2670 = vsel %vm2598, %v2455, %v2669
      %2671 = vst [vmem:[%s2589 + $0x80] sm:$0x1] %v2670
      %v2672 = vld [vmem:[%s2589 + $0x84] sm:$0xf]
      %v2673 = vsel %vm2592, %v2462, %v2672
      %2674 = vst [vmem:[%s2589 + $0x84] sm:$0xf] %v2673
      %2675 = vst [vmem:[%s2589 + $0x88] sm:$0xf] %v2471
      %v2676 = vld [vmem:[%s2589 + $0x8c] sm:$0x1]
      %v2677 = vsel %vm2598, %v2472, %v2676
      %2678 = vst [vmem:[%s2589 + $0x8c] sm:$0x1] %v2677
      %v2679 = vld [vmem:[%s2589 + $0x90] sm:$0xf]
      %v2680 = vsel %vm2592, %v2479, %v2679
      %2681 = vst [vmem:[%s2589 + $0x90] sm:$0xf] %v2680
      %2682 = vst [vmem:[%s2589 + $0x94] sm:$0xf] %v2488
      %v2683 = vld [vmem:[%s2589 + $0x98] sm:$0x1]
      %v2684 = vsel %vm2598, %v2489, %v2683
      %2685 = vst [vmem:[%s2589 + $0x98] sm:$0x1] %v2684
      %v2686 = vld [vmem:[%s2589 + $0x9c] sm:$0xf]
      %v2687 = vsel %vm2592, %v2496, %v2686
      %2688 = vst [vmem:[%s2589 + $0x9c] sm:$0xf] %v2687
      %2689 = vst [vmem:[%s2589 + $0xa0] sm:$0xf] %v2505
      %v2690 = vld [vmem:[%s2589 + $0xa4] sm:$0x1]
      %v2691 = vsel %vm2598, %v2506, %v2690
      %2692 = vst [vmem:[%s2589 + $0xa4] sm:$0x1] %v2691
      %v2693 = vld [vmem:[%s2589 + $0xa8] sm:$0xf]
      %v2694 = vsel %vm2592, %v2513, %v2693
      %2695 = vst [vmem:[%s2589 + $0xa8] sm:$0xf] %v2694
      %2696 = vst [vmem:[%s2589 + $0xac] sm:$0xf] %v2522
      %v2697 = vld [vmem:[%s2589 + $0xb0] sm:$0x1]
      %v2698 = vsel %vm2598, %v2523, %v2697
      %2699 = vst [vmem:[%s2589 + $0xb0] sm:$0x1] %v2698
      %v2700 = vld [vmem:[%s2589 + $0xb4] sm:$0xf]
      %v2701 = vsel %vm2592, %v2530, %v2700
      %2702 = vst [vmem:[%s2589 + $0xb4] sm:$0xf] %v2701
      %2703 = vst [vmem:[%s2589 + $0xb8] sm:$0xf] %v2539
      %v2704 = vld [vmem:[%s2589 + $0xbc] sm:$0x1]
      %v2705 = vsel %vm2598, %v2540, %v2704
      %2706 = vst [vmem:[%s2589 + $0xbc] sm:$0x1] %v2705
      %2707 = vst [vmem:[#allocation2] sm:$0xf] 0
      %2708 = vst [vmem:[#allocation2 + $0x4] sm:$0xf] 0
      %2709 = vst [vmem:[#allocation2 + $0x8] sm:$0x1] 0
      %s2710 = scalar_lea.vmem [#allocation2], 204
      %2711 = vst [vmem:[%s2710] sm:$0xf] 0
      %2712 = vst [vmem:[%s2710 + $0x4] sm:$0xf] 0
      %2713 = vst [vmem:[%s2710 + $0x8] sm:$0x1] 0
      %v2714 = vld [vmem:[#allocation2] sm:$0x1]
      %v2715 = vsel %vm2598, 0, %v2714
      %2716 = vst [vmem:[#allocation2] sm:$0x1] %v2715
      %v2717 = vld [vmem:[#allocation2 + $0xc] sm:$0x1]
      %v2718 = vsel %vm2598, 0, %v2717
      %2719 = vst [vmem:[#allocation2 + $0xc] sm:$0x1] %v2718
      %v2720 = vld [vmem:[#allocation2 + $0x18] sm:$0x1]
      %v2721 = vsel %vm2598, 0, %v2720
      %2722 = vst [vmem:[#allocation2 + $0x18] sm:$0x1] %v2721
      %v2723 = vld [vmem:[#allocation2 + $0x24] sm:$0x1]
      %v2724 = vsel %vm2598, 0, %v2723
      %2725 = vst [vmem:[#allocation2 + $0x24] sm:$0x1] %v2724
      %v2726 = vld [vmem:[#allocation2 + $0x30] sm:$0x1]
      %v2727 = vsel %vm2598, 0, %v2726
      %2728 = vst [vmem:[#allocation2 + $0x30] sm:$0x1] %v2727
      %v2729 = vld [vmem:[#allocation2 + $0x3c] sm:$0x1]
      %v2730 = vsel %vm2598, 0, %v2729
      %2731 = vst [vmem:[#allocation2 + $0x3c] sm:$0x1] %v2730
      %v2732 = vld [vmem:[#allocation2 + $0x48] sm:$0x1]
      %v2733 = vsel %vm2598, 0, %v2732
      %2734 = vst [vmem:[#allocation2 + $0x48] sm:$0x1] %v2733
      %v2735 = vld [vmem:[#allocation2 + $0x54] sm:$0x1]
      %v2736 = vsel %vm2598, 0, %v2735
      %2737 = vst [vmem:[#allocation2 + $0x54] sm:$0x1] %v2736
      %v2738 = vld [vmem:[#allocation2 + $0x60] sm:$0x1]
      %v2739 = vsel %vm2598, 0, %v2738
      %2740 = vst [vmem:[#allocation2 + $0x60] sm:$0x1] %v2739
      %v2741 = vld [vmem:[#allocation2 + $0x6c] sm:$0x1]
      %v2742 = vsel %vm2598, 0, %v2741
      %2743 = vst [vmem:[#allocation2 + $0x6c] sm:$0x1] %v2742
      %v2744 = vld [vmem:[#allocation2 + $0x78] sm:$0x1]
      %v2745 = vsel %vm2598, 0, %v2744
      %2746 = vst [vmem:[#allocation2 + $0x78] sm:$0x1] %v2745
      %v2747 = vld [vmem:[#allocation2 + $0x84] sm:$0x1]
      %v2748 = vsel %vm2598, 0, %v2747
      %2749 = vst [vmem:[#allocation2 + $0x84] sm:$0x1] %v2748
      %v2750 = vld [vmem:[#allocation2 + $0x90] sm:$0x1]
      %v2751 = vsel %vm2598, 0, %v2750
      %2752 = vst [vmem:[#allocation2 + $0x90] sm:$0x1] %v2751
      %v2753 = vld [vmem:[#allocation2 + $0x9c] sm:$0x1]
      %v2754 = vsel %vm2598, 0, %v2753
      %2755 = vst [vmem:[#allocation2 + $0x9c] sm:$0x1] %v2754
      %v2756 = vld [vmem:[#allocation2 + $0xa8] sm:$0x1]
      %v2757 = vsel %vm2598, 0, %v2756
      %2758 = vst [vmem:[#allocation2 + $0xa8] sm:$0x1] %v2757
      %v2759 = vld [vmem:[#allocation2 + $0xb4] sm:$0x1]
      %v2760 = vsel %vm2598, 0, %v2759
      %2761 = vst [vmem:[#allocation2 + $0xb4] sm:$0x1] %v2760
      %v2762 = vld [vmem:[#allocation2 + $0xc0] sm:$0x1]
      %v2763 = vsel %vm2598, 0, %v2762
      %2764 = vst [vmem:[#allocation2 + $0xc0] sm:$0x1] %v2763
      %v2765 = vld [vmem:[#allocation2 + $0xcc] sm:$0x1]
      %v2766 = vsel %vm2598, 0, %v2765
      %2767 = vst [vmem:[#allocation2 + $0xcc] sm:$0x1] %v2766
      %vm2768 = vmand %vm2597, %vm2591
      %v2769 = vld [vmem:[#allocation2 + $0x8] sm:$0x1]
      %v2770 = vsel %vm2768, 0, %v2769
      %2771 = vst [vmem:[#allocation2 + $0x8] sm:$0x1] %v2770
      %v2772 = vld [vmem:[#allocation2 + $0x14] sm:$0x1]
      %v2773 = vsel %vm2768, 0, %v2772
      %2774 = vst [vmem:[#allocation2 + $0x14] sm:$0x1] %v2773
      %v2775 = vld [vmem:[#allocation2 + $0x20] sm:$0x1]
      %v2776 = vsel %vm2768, 0, %v2775
      %2777 = vst [vmem:[#allocation2 + $0x20] sm:$0x1] %v2776
      %v2778 = vld [vmem:[#allocation2 + $0x2c] sm:$0x1]
      %v2779 = vsel %vm2768, 0, %v2778
      %2780 = vst [vmem:[#allocation2 + $0x2c] sm:$0x1] %v2779
      %v2781 = vld [vmem:[#allocation2 + $0x38] sm:$0x1]
      %v2782 = vsel %vm2768, 0, %v2781
      %2783 = vst [vmem:[#allocation2 + $0x38] sm:$0x1] %v2782
      %v2784 = vld [vmem:[#allocation2 + $0x44] sm:$0x1]
      %v2785 = vsel %vm2768, 0, %v2784
      %2786 = vst [vmem:[#allocation2 + $0x44] sm:$0x1] %v2785
      %v2787 = vld [vmem:[#allocation2 + $0x50] sm:$0x1]
      %v2788 = vsel %vm2768, 0, %v2787
      %2789 = vst [vmem:[#allocation2 + $0x50] sm:$0x1] %v2788
      %v2790 = vld [vmem:[#allocation2 + $0x5c] sm:$0x1]
      %v2791 = vsel %vm2768, 0, %v2790
      %2792 = vst [vmem:[#allocation2 + $0x5c] sm:$0x1] %v2791
      %v2793 = vld [vmem:[#allocation2 + $0x68] sm:$0x1]
      %v2794 = vsel %vm2768, 0, %v2793
      %2795 = vst [vmem:[#allocation2 + $0x68] sm:$0x1] %v2794
      %v2796 = vld [vmem:[#allocation2 + $0x74] sm:$0x1]
      %v2797 = vsel %vm2768, 0, %v2796
      %2798 = vst [vmem:[#allocation2 + $0x74] sm:$0x1] %v2797
      %v2799 = vld [vmem:[#allocation2 + $0x80] sm:$0x1]
      %v2800 = vsel %vm2768, 0, %v2799
      %2801 = vst [vmem:[#allocation2 + $0x80] sm:$0x1] %v2800
      %v2802 = vld [vmem:[#allocation2 + $0x8c] sm:$0x1]
      %v2803 = vsel %vm2768, 0, %v2802
      %2804 = vst [vmem:[#allocation2 + $0x8c] sm:$0x1] %v2803
      %v2805 = vld [vmem:[#allocation2 + $0x98] sm:$0x1]
      %v2806 = vsel %vm2768, 0, %v2805
      %2807 = vst [vmem:[#allocation2 + $0x98] sm:$0x1] %v2806
      %v2808 = vld [vmem:[#allocation2 + $0xa4] sm:$0x1]
      %v2809 = vsel %vm2768, 0, %v2808
      %2810 = vst [vmem:[#allocation2 + $0xa4] sm:$0x1] %v2809
      %v2811 = vld [vmem:[#allocation2 + $0xb0] sm:$0x1]
      %v2812 = vsel %vm2768, 0, %v2811
      %2813 = vst [vmem:[#allocation2 + $0xb0] sm:$0x1] %v2812
      %v2814 = vld [vmem:[#allocation2 + $0xbc] sm:$0x1]
      %v2815 = vsel %vm2768, 0, %v2814
      %2816 = vst [vmem:[#allocation2 + $0xbc] sm:$0x1] %v2815
      %v2817 = vld [vmem:[#allocation2 + $0xc8] sm:$0x1]
      %v2818 = vsel %vm2768, 0, %v2817
      %2819 = vst [vmem:[#allocation2 + $0xc8] sm:$0x1] %v2818
      %v2820 = vld [vmem:[#allocation2 + $0xd4] sm:$0x1]
      %v2821 = vsel %vm2768, 0, %v2820
      %2822 = vst [vmem:[#allocation2 + $0xd4] sm:$0x1] %v2821
      %v2823 = vld [vmem:[#allocation2] sm:$0xf]
      %v2824 = vld [vmem:[#allocation2 + $0x4] sm:$0xf]
      %v2825 = vld [vmem:[#allocation2 + $0x8] sm:$0x1]
      %v2826 = vld [vmem:[#allocation2 + $0xc] sm:$0xf]
      %v2827 = vld [vmem:[#allocation2 + $0x10] sm:$0xf]
      %v2828 = vld [vmem:[#allocation2 + $0x14] sm:$0x1]
      %v2829 = vld [vmem:[#allocation2 + $0x18] sm:$0xf]
      %v2830 = vld [vmem:[#allocation2 + $0x1c] sm:$0xf]
      %v2831 = vld [vmem:[#allocation2 + $0x20] sm:$0x1]
      %v2832 = vld [vmem:[#allocation2 + $0x24] sm:$0xf]
      %v2833 = vld [vmem:[#allocation2 + $0x28] sm:$0xf]
      %v2834 = vld [vmem:[#allocation2 + $0x2c] sm:$0x1]
      %v2835 = vld [vmem:[#allocation2 + $0x30] sm:$0xf]
      %v2836 = vld [vmem:[#allocation2 + $0x34] sm:$0xf]
      %v2837 = vld [vmem:[#allocation2 + $0x38] sm:$0x1]
      %v2838 = vld [vmem:[#allocation2 + $0x3c] sm:$0xf]
      %v2839 = vld [vmem:[#allocation2 + $0x40] sm:$0xf]
      %v2840 = vld [vmem:[#allocation2 + $0x44] sm:$0x1]
      %v2841 = vld [vmem:[#allocation2 + $0x48] sm:$0xf]
      %v2842 = vld [vmem:[#allocation2 + $0x4c] sm:$0xf]
      %v2843 = vld [vmem:[#allocation2 + $0x50] sm:$0x1]
      %v2844 = vld [vmem:[#allocation2 + $0x54] sm:$0xf]
      %v2845 = vld [vmem:[#allocation2 + $0x58] sm:$0xf]
      %v2846 = vld [vmem:[#allocation2 + $0x5c] sm:$0x1]
      %v2847 = vld [vmem:[#allocation2 + $0x60] sm:$0xf]
      %v2848 = vld [vmem:[#allocation2 + $0x64] sm:$0xf]
      %v2849 = vld [vmem:[#allocation2 + $0x68] sm:$0x1]
      %v2850 = vld [vmem:[#allocation2 + $0x6c] sm:$0xf]
      %v2851 = vld [vmem:[#allocation2 + $0x70] sm:$0xf]
      %v2852 = vld [vmem:[#allocation2 + $0x74] sm:$0x1]
      %v2853 = vld [vmem:[#allocation2 + $0x78] sm:$0xf]
      %v2854 = vld [vmem:[#allocation2 + $0x7c] sm:$0xf]
      %v2855 = vld [vmem:[#allocation2 + $0x80] sm:$0x1]
      %v2856 = vld [vmem:[#allocation2 + $0x84] sm:$0xf]
      %v2857 = vld [vmem:[#allocation2 + $0x88] sm:$0xf]
      %v2858 = vld [vmem:[#allocation2 + $0x8c] sm:$0x1]
      %v2859 = vld [vmem:[#allocation2 + $0x90] sm:$0xf]
      %v2860 = vld [vmem:[#allocation2 + $0x94] sm:$0xf]
      %v2861 = vld [vmem:[#allocation2 + $0x98] sm:$0x1]
      %v2862 = vld [vmem:[#allocation2 + $0x9c] sm:$0xf]
      %v2863 = vld [vmem:[#allocation2 + $0xa0] sm:$0xf]
      %v2864 = vld [vmem:[#allocation2 + $0xa4] sm:$0x1]
      %v2865 = vld [vmem:[#allocation2 + $0xa8] sm:$0xf]
      %v2866 = vld [vmem:[#allocation2 + $0xac] sm:$0xf]
      %v2867 = vld [vmem:[#allocation2 + $0xb0] sm:$0x1]
      %v2868 = vld [vmem:[#allocation2 + $0xb4] sm:$0xf]
      %v2869 = vld [vmem:[#allocation2 + $0xb8] sm:$0xf]
      %v2870 = vld [vmem:[#allocation2 + $0xbc] sm:$0x1]
      %v2871 = vld [vmem:[#allocation2 + $0xc0] sm:$0xf]
      %v2872 = vld [vmem:[#allocation2 + $0xc4] sm:$0xf]
      %v2873 = vld [vmem:[#allocation2 + $0xc8] sm:$0x1]
      %v2874 = vld [vmem:[#allocation2 + $0xcc] sm:$0xf]
      %v2875 = vld [vmem:[#allocation2 + $0xd0] sm:$0xf]
      %v2876 = vld [vmem:[#allocation2 + $0xd4] sm:$0x1]
      %v2909 = vunpack.c.l.b16 %v2823
      %v2910 = vunpack.c.l.b16 %v2824
      %v2911 = vunpack.c.l.b16 %v2826
      %v2912 = vunpack.c.l.b16 %v2827
      %v2913 = vunpack.c.l.b16 %v2829
      %v2914 = vunpack.c.l.b16 %v2830
      %v2915 = vunpack.c.l.b16 %v2832
      %v2916 = vunpack.c.l.b16 %v2833
      %v2917 = vunpack.c.l.b16 %v2835
      %v2918 = vunpack.c.l.b16 %v2836
      %v2919 = vunpack.c.l.b16 %v2838
      %v2920 = vunpack.c.l.b16 %v2839
      %v2921 = vunpack.c.l.b16 %v2841
      %v2922 = vunpack.c.l.b16 %v2842
      %v2923 = vunpack.c.l.b16 %v2844
      %v2924 = vunpack.c.l.b16 %v2845
      %v2925 = vunpack.c.l.b16 %v2847
      %v2926 = vunpack.c.l.b16 %v2848
      %v2927 = vunpack.c.l.b16 %v2850
      %v2928 = vunpack.c.l.b16 %v2851
      %v2929 = vunpack.c.l.b16 %v2853
      %v2930 = vunpack.c.l.b16 %v2854
      %v2931 = vunpack.c.l.b16 %v2856
      %v2932 = vunpack.c.l.b16 %v2857
      %v2933 = vunpack.c.l.b16 %v2859
      %v2934 = vunpack.c.l.b16 %v2860
      %v2935 = vunpack.c.l.b16 %v2862
      %v2936 = vunpack.c.l.b16 %v2863
      %v2937 = vunpack.c.l.b16 %v2865
      %v2938 = vunpack.c.l.b16 %v2866
      %v2939 = vunpack.c.l.b16 %v2868
      %v2940 = vunpack.c.l.b16 %v2869
      %v2941 = vpack.c.b16 %v2910, %v2909
      %v2942 = vpack.c.b16 %v2912, %v2911
      %v2943 = vpack.c.b16 %v2914, %v2913
      %v2944 = vpack.c.b16 %v2916, %v2915
      %v2945 = vpack.c.b16 %v2918, %v2917
      %v2946 = vpack.c.b16 %v2920, %v2919
      %v2947 = vpack.c.b16 %v2922, %v2921
      %v2948 = vpack.c.b16 %v2924, %v2923
      %v2949 = vpack.c.b16 %v2926, %v2925
      %v2950 = vpack.c.b16 %v2928, %v2927
      %v2951 = vpack.c.b16 %v2930, %v2929
      %v2952 = vpack.c.b16 %v2932, %v2931
      %v2953 = vpack.c.b16 %v2934, %v2933
      %v2954 = vpack.c.b16 %v2936, %v2935
      %v2955 = vpack.c.b16 %v2938, %v2937
      %v2956 = vpack.c.b16 %v2940, %v2939
      %v2989 = vunpack.c.l.b16 %v2825
      %v2990 = vunpack.c.l.b16 %v2828
      %v2991 = vunpack.c.l.b16 %v2831
      %v2992 = vunpack.c.l.b16 %v2834
      %v2993 = vunpack.c.l.b16 %v2837
      %v2994 = vunpack.c.l.b16 %v2840
      %v2995 = vunpack.c.l.b16 %v2843
      %v2996 = vunpack.c.l.b16 %v2846
      %v2997 = vunpack.c.l.b16 %v2849
      %v2998 = vunpack.c.l.b16 %v2852
      %v2999 = vunpack.c.l.b16 %v2855
      %v3000 = vunpack.c.l.b16 %v2858
      %v3001 = vunpack.c.l.b16 %v2861
      %v3002 = vunpack.c.l.b16 %v2864
      %v3003 = vunpack.c.l.b16 %v2867
      %v3004 = vunpack.c.l.b16 %v2870
      %v3005 = vpack.c.b16 %v2989, %v2989
      %v3006 = vpack.c.b16 %v2990, %v2990
      %v3007 = vpack.c.b16 %v2991, %v2991
      %v3008 = vpack.c.b16 %v2992, %v2992
      %v3009 = vpack.c.b16 %v2993, %v2993
      %v3010 = vpack.c.b16 %v2994, %v2994
      %v3011 = vpack.c.b16 %v2995, %v2995
      %v3012 = vpack.c.b16 %v2996, %v2996
      %v3013 = vpack.c.b16 %v2997, %v2997
      %v3014 = vpack.c.b16 %v2998, %v2998
      %v3015 = vpack.c.b16 %v2999, %v2999
      %v3016 = vpack.c.b16 %v3000, %v3000
      %v3017 = vpack.c.b16 %v3001, %v3001
      %v3018 = vpack.c.b16 %v3002, %v3002
      %v3019 = vpack.c.b16 %v3003, %v3003
      %v3020 = vpack.c.b16 %v3004, %v3004
      %v3022 = vshrl.u32 %v2941, 16
      %v3024 = vshll.u32 %v2941, 16
      %v3026 = vrot.slane %v3024, 1
      %v3027 = vor.u32 %v3022, %v3026
      %v3029 = vshll.u32 %v3005, 16
      %v3031 = vrot.slane %v3029, 1
      %v3032 = vsel %vm424, %v3027, %v3031
      %v3034 = vshrl.u32 %v2942, 16
      %v3036 = vshll.u32 %v2942, 16
      %v3038 = vrot.slane %v3036, 1
      %v3039 = vor.u32 %v3034, %v3038
      %v3041 = vshll.u32 %v3006, 16
      %v3043 = vrot.slane %v3041, 1
      %v3044 = vsel %vm424, %v3039, %v3043
      %v3046 = vshrl.u32 %v2943, 16
      %v3048 = vshll.u32 %v2943, 16
      %v3050 = vrot.slane %v3048, 1
      %v3051 = vor.u32 %v3046, %v3050
      %v3053 = vshll.u32 %v3007, 16
      %v3055 = vrot.slane %v3053, 1
      %v3056 = vsel %vm424, %v3051, %v3055
      %v3058 = vshrl.u32 %v2944, 16
      %v3060 = vshll.u32 %v2944, 16
      %v3062 = vrot.slane %v3060, 1
      %v3063 = vor.u32 %v3058, %v3062
      %v3065 = vshll.u32 %v3008, 16
      %v3067 = vrot.slane %v3065, 1
      %v3068 = vsel %vm424, %v3063, %v3067
      %v3070 = vshrl.u32 %v2945, 16
      %v3072 = vshll.u32 %v2945, 16
      %v3074 = vrot.slane %v3072, 1
      %v3075 = vor.u32 %v3070, %v3074
      %v3077 = vshll.u32 %v3009, 16
      %v3079 = vrot.slane %v3077, 1
      %v3080 = vsel %vm424, %v3075, %v3079
      %v3082 = vshrl.u32 %v2946, 16
      %v3084 = vshll.u32 %v2946, 16
      %v3086 = vrot.slane %v3084, 1
      %v3087 = vor.u32 %v3082, %v3086
      %v3089 = vshll.u32 %v3010, 16
      %v3091 = vrot.slane %v3089, 1
      %v3092 = vsel %vm424, %v3087, %v3091
      %v3094 = vshrl.u32 %v2947, 16
      %v3096 = vshll.u32 %v2947, 16
      %v3098 = vrot.slane %v3096, 1
      %v3099 = vor.u32 %v3094, %v3098
      %v3101 = vshll.u32 %v3011, 16
      %v3103 = vrot.slane %v3101, 1
      %v3104 = vsel %vm424, %v3099, %v3103
      %v3106 = vshrl.u32 %v2948, 16
      %v3108 = vshll.u32 %v2948, 16
      %v3110 = vrot.slane %v3108, 1
      %v3111 = vor.u32 %v3106, %v3110
      %v3113 = vshll.u32 %v3012, 16
      %v3115 = vrot.slane %v3113, 1
      %v3116 = vsel %vm424, %v3111, %v3115
      %v3118 = vshrl.u32 %v2949, 16
      %v3120 = vshll.u32 %v2949, 16
      %v3122 = vrot.slane %v3120, 1
      %v3123 = vor.u32 %v3118, %v3122
      %v3125 = vshll.u32 %v3013, 16
      %v3127 = vrot.slane %v3125, 1
      %v3128 = vsel %vm424, %v3123, %v3127
      %v3130 = vshrl.u32 %v2950, 16
      %v3132 = vshll.u32 %v2950, 16
      %v3134 = vrot.slane %v3132, 1
      %v3135 = vor.u32 %v3130, %v3134
      %v3137 = vshll.u32 %v3014, 16
      %v3139 = vrot.slane %v3137, 1
      %v3140 = vsel %vm424, %v3135, %v3139
      %v3142 = vshrl.u32 %v2951, 16
      %v3144 = vshll.u32 %v2951, 16
      %v3146 = vrot.slane %v3144, 1
      %v3147 = vor.u32 %v3142, %v3146
      %v3149 = vshll.u32 %v3015, 16
      %v3151 = vrot.slane %v3149, 1
      %v3152 = vsel %vm424, %v3147, %v3151
      %v3154 = vshrl.u32 %v2952, 16
      %v3156 = vshll.u32 %v2952, 16
      %v3158 = vrot.slane %v3156, 1
      %v3159 = vor.u32 %v3154, %v3158
      %v3161 = vshll.u32 %v3016, 16
      %v3163 = vrot.slane %v3161, 1
      %v3164 = vsel %vm424, %v3159, %v3163
      %v3166 = vshrl.u32 %v2953, 16
      %v3168 = vshll.u32 %v2953, 16
      %v3170 = vrot.slane %v3168, 1
      %v3171 = vor.u32 %v3166, %v3170
      %v3173 = vshll.u32 %v3017, 16
      %v3175 = vrot.slane %v3173, 1
      %v3176 = vsel %vm424, %v3171, %v3175
      %v3178 = vshrl.u32 %v2954, 16
      %v3180 = vshll.u32 %v2954, 16
      %v3182 = vrot.slane %v3180, 1
      %v3183 = vor.u32 %v3178, %v3182
      %v3185 = vshll.u32 %v3018, 16
      %v3187 = vrot.slane %v3185, 1
      %v3188 = vsel %vm424, %v3183, %v3187
      %v3190 = vshrl.u32 %v2955, 16
      %v3192 = vshll.u32 %v2955, 16
      %v3194 = vrot.slane %v3192, 1
      %v3195 = vor.u32 %v3190, %v3194
      %v3197 = vshll.u32 %v3019, 16
      %v3199 = vrot.slane %v3197, 1
      %v3200 = vsel %vm424, %v3195, %v3199
      %v3202 = vshrl.u32 %v2956, 16
      %v3204 = vshll.u32 %v2956, 16
      %v3206 = vrot.slane %v3204, 1
      %v3207 = vor.u32 %v3202, %v3206
      %v3209 = vshll.u32 %v3020, 16
      %v3211 = vrot.slane %v3209, 1
      %v3212 = vsel %vm424, %v3207, %v3211
      %v3229 = vrot.slane %v2941, 1
      %v3230 = vrot.slane %v3005, 1
      %v3231 = vsel %vm633, %v3229, %v3230
      %v3232 = vrot.slane %v2942, 1
      %v3233 = vrot.slane %v3006, 1
      %v3234 = vsel %vm633, %v3232, %v3233
      %v3235 = vrot.slane %v2943, 1
      %v3236 = vrot.slane %v3007, 1
      %v3237 = vsel %vm633, %v3235, %v3236
      %v3238 = vrot.slane %v2944, 1
      %v3239 = vrot.slane %v3008, 1
      %v3240 = vsel %vm633, %v3238, %v3239
      %v3241 = vrot.slane %v2945, 1
      %v3242 = vrot.slane %v3009, 1
      %v3243 = vsel %vm633, %v3241, %v3242
      %v3244 = vrot.slane %v2946, 1
      %v3245 = vrot.slane %v3010, 1
      %v3246 = vsel %vm633, %v3244, %v3245
      %v3247 = vrot.slane %v2947, 1
      %v3248 = vrot.slane %v3011, 1
      %v3249 = vsel %vm633, %v3247, %v3248
      %v3250 = vrot.slane %v2948, 1
      %v3251 = vrot.slane %v3012, 1
      %v3252 = vsel %vm633, %v3250, %v3251
      %v3253 = vrot.slane %v2949, 1
      %v3254 = vrot.slane %v3013, 1
      %v3255 = vsel %vm633, %v3253, %v3254
      %v3256 = vrot.slane %v2950, 1
      %v3257 = vrot.slane %v3014, 1
      %v3258 = vsel %vm633, %v3256, %v3257
      %v3259 = vrot.slane %v2951, 1
      %v3260 = vrot.slane %v3015, 1
      %v3261 = vsel %vm633, %v3259, %v3260
      %v3262 = vrot.slane %v2952, 1
      %v3263 = vrot.slane %v3016, 1
      %v3264 = vsel %vm633, %v3262, %v3263
      %v3265 = vrot.slane %v2953, 1
      %v3266 = vrot.slane %v3017, 1
      %v3267 = vsel %vm633, %v3265, %v3266
      %v3268 = vrot.slane %v2954, 1
      %v3269 = vrot.slane %v3018, 1
      %v3270 = vsel %vm633, %v3268, %v3269
      %v3271 = vrot.slane %v2955, 1
      %v3272 = vrot.slane %v3019, 1
      %v3273 = vsel %vm633, %v3271, %v3272
      %v3274 = vrot.slane %v2956, 1
      %v3275 = vrot.slane %v3020, 1
      %v3276 = vsel %vm633, %v3274, %v3275
      %v3295 = vunpack.c.l.b16 %v2871
      %v3296 = vunpack.c.l.b16 %v2872
      %v3297 = vpack.c.b16 %v3296, %v3295
      %v3300 = vunpack.c.l.b16 %v2873
      %v3301 = vpack.c.b16 %v3300, %v3300
      %v3303 = vshrl.u32 %v3297, 16
      %v3305 = vshll.u32 %v3297, 16
      %v3307 = vrot.slane %v3305, 1
      %v3308 = vor.u32 %v3303, %v3307
      %v3310 = vshll.u32 %v3301, 16
      %v3312 = vrot.slane %v3310, 1
      %v3313 = vsel %vm424, %v3308, %v3312
      %v3315 = vrot.slane %v3297, 1
      %v3316 = vrot.slane %v3301, 1
      %v3317 = vsel %vm633, %v3315, %v3316
      %v3321 = vunpack.c.l.b16 %v2874
      %v3322 = vunpack.c.l.b16 %v2875
      %v3323 = vpack.c.b16 %v3322, %v3321
      %v3326 = vunpack.c.l.b16 %v2876
      %v3327 = vpack.c.b16 %v3326, %v3326
      %v3329 = vshrl.u32 %v3323, 16
      %v3331 = vshll.u32 %v3323, 16
      %v3333 = vrot.slane %v3331, 1
      %v3334 = vor.u32 %v3329, %v3333
      %v3336 = vshll.u32 %v3327, 16
      %v3338 = vrot.slane %v3336, 1
      %v3339 = vsel %vm424, %v3334, %v3338
      %v3341 = vrot.slane %v3323, 1
      %v3342 = vrot.slane %v3327, 1
      %v3343 = vsel %vm633, %v3341, %v3342
      %v3345 = vld [vmem:[%s3] sm:$0xf]
      %v3346 = vld [vmem:[%s3 + $0x4] sm:$0xf]
      %v3347 = vld [vmem:[%s3 + $0x8] sm:$0xf]
      %v3348 = vld [vmem:[%s3 + $0xc] sm:$0xf]
      %v3349 = vld [vmem:[%s3 + $0x10] sm:$0xf]
      %v3350 = vld [vmem:[%s3 + $0x14] sm:$0xf]
      %v3351 = vld [vmem:[%s3 + $0x18] sm:$0xf]
      %v3352 = vld [vmem:[%s3 + $0x1c] sm:$0xf]
      %v3353 = vld [vmem:[%s3 + $0x20] sm:$0xf]
      %v3354 = vld [vmem:[%s3 + $0x24] sm:$0xf]
      %v3355 = vld [vmem:[%s3 + $0x28] sm:$0xf]
      %v3356 = vld [vmem:[%s3 + $0x2c] sm:$0xf]
      %v3357 = vld [vmem:[%s3 + $0x30] sm:$0xf]
      %v3358 = vld [vmem:[%s3 + $0x34] sm:$0xf]
      %v3359 = vld [vmem:[%s3 + $0x38] sm:$0xf]
      %v3360 = vld [vmem:[%s3 + $0x3c] sm:$0xf]
      %v3361 = vld [vmem:[%s3 + $0x40] sm:$0xf]
      %v3362 = vld [vmem:[%s3 + $0x44] sm:$0xf]
      %v3363 = vld [vmem:[%s3 + $0x48] sm:$0xf]
      %v3364 = vld [vmem:[%s3 + $0x4c] sm:$0xf]
      %v3365 = vld [vmem:[%s3 + $0x50] sm:$0xf]
      %v3366 = vld [vmem:[%s3 + $0x54] sm:$0xf]
      %v3367 = vld [vmem:[%s3 + $0x58] sm:$0xf]
      %v3368 = vld [vmem:[%s3 + $0x5c] sm:$0xf]
      %v3369 = vld [vmem:[%s3 + $0x60] sm:$0xf]
      %v3370 = vld [vmem:[%s3 + $0x64] sm:$0xf]
      %v3371 = vld [vmem:[%s3 + $0x68] sm:$0xf]
      %v3372 = vld [vmem:[%s3 + $0x6c] sm:$0xf]
      %v3373 = vld [vmem:[%s3 + $0x70] sm:$0xf]
      %v3374 = vld [vmem:[%s3 + $0x74] sm:$0xf]
      %v3375 = vld [vmem:[%s3 + $0x78] sm:$0xf]
      %v3376 = vld [vmem:[%s3 + $0x7c] sm:$0xf]
      %v3377 = vld [vmem:[%s3 + $0x80] sm:$0xf]
      %v3378 = vld [vmem:[%s3 + $0x84] sm:$0xf]
      %v3379 = vld [vmem:[%s3 + $0x88] sm:$0xf]
      %v3380 = vld [vmem:[%s3 + $0x8c] sm:$0xf]
      %v3381 = vld [vmem:[%s3 + $0x90] sm:$0xf]
      %v3382 = vld [vmem:[%s3 + $0x94] sm:$0xf]
      %v3383 = vld [vmem:[%s3 + $0x98] sm:$0xf]
      %v3384 = vld [vmem:[%s3 + $0x9c] sm:$0xf]
      %v3385 = vld [vmem:[%s3 + $0xa0] sm:$0xf]
      %v3386 = vld [vmem:[%s3 + $0xa4] sm:$0xf]
      %v3387 = vld [vmem:[%s3 + $0xa8] sm:$0xf]
      %v3388 = vld [vmem:[%s3 + $0xac] sm:$0xf]
      %v3389 = vld [vmem:[%s3 + $0xb0] sm:$0xf]
      %v3390 = vld [vmem:[%s3 + $0xb4] sm:$0xf]
      %v3391 = vld [vmem:[%s3 + $0xb8] sm:$0xf]
      %v3392 = vld [vmem:[%s3 + $0xbc] sm:$0xf]
      %v3393 = vld [vmem:[%s3 + $0xc0] sm:$0xf]
      %v3394 = vld [vmem:[%s3 + $0xc4] sm:$0xf]
      %v3395 = vld [vmem:[%s3 + $0xc8] sm:$0xf]
      %v3396 = vld [vmem:[%s3 + $0xcc] sm:$0xf]
      %v3397 = vld [vmem:[%s3 + $0xd0] sm:$0xf]
      %v3398 = vld [vmem:[%s3 + $0xd4] sm:$0xf]
      %v3399 = vld [vmem:[%s3 + $0xd8] sm:$0xf]
      %v3400 = vld [vmem:[%s3 + $0xdc] sm:$0xf]
      %v3401 = vld [vmem:[%s3 + $0xe0] sm:$0xf]
      %v3402 = vld [vmem:[%s3 + $0xe4] sm:$0xf]
      %v3403 = vld [vmem:[%s3 + $0xe8] sm:$0xf]
      %v3404 = vld [vmem:[%s3 + $0xec] sm:$0xf]
      %v3405 = vld [vmem:[%s3 + $0xf0] sm:$0xf]
      %v3406 = vld [vmem:[%s3 + $0xf4] sm:$0xf]
      %v3407 = vld [vmem:[%s3 + $0xf8] sm:$0xf]
      %v3408 = vld [vmem:[%s3 + $0xfc] sm:$0xf]
      %v3409 = vld [vmem:[%s3 + $0x100] sm:$0xf]
      %v3410 = vld [vmem:[%s3 + $0x104] sm:$0xf]
      %v3411 = vld [vmem:[%s3 + $0x108] sm:$0xf]
      %v3412 = vld [vmem:[%s3 + $0x10c] sm:$0xf]
      %v3413 = vld [vmem:[%s3 + $0x110] sm:$0xf]
      %v3414 = vld [vmem:[%s3 + $0x114] sm:$0xf]
      %v3415 = vld [vmem:[%s3 + $0x118] sm:$0xf]
      %v3416 = vld [vmem:[%s3 + $0x11c] sm:$0xf]
      %v3417 = vld [vmem:[%s3 + $0x120] sm:$0xf]
      %v3418 = vld [vmem:[%s3 + $0x124] sm:$0xf]
      %v3419 = vld [vmem:[%s3 + $0x128] sm:$0xf]
      %v3420 = vld [vmem:[%s3 + $0x12c] sm:$0xf]
      %v3421 = vld [vmem:[%s3 + $0x130] sm:$0xf]
      %v3422 = vld [vmem:[%s3 + $0x134] sm:$0xf]
      %v3423 = vld [vmem:[%s3 + $0x138] sm:$0xf]
      %v3424 = vld [vmem:[%s3 + $0x13c] sm:$0xf]
      %v3425 = vld [vmem:[%s3 + $0x140] sm:$0xf]
      %v3426 = vld [vmem:[%s3 + $0x144] sm:$0xf]
      %v3427 = vld [vmem:[%s3 + $0x148] sm:$0xf]
      %v3428 = vld [vmem:[%s3 + $0x14c] sm:$0xf]
      %v3429 = vld [vmem:[%s3 + $0x150] sm:$0xf]
      %v3430 = vld [vmem:[%s3 + $0x154] sm:$0xf]
      %v3431 = vld [vmem:[%s3 + $0x158] sm:$0xf]
      %v3432 = vld [vmem:[%s3 + $0x15c] sm:$0xf]
      %v3433 = vld [vmem:[%s3 + $0x160] sm:$0xf]
      %v3434 = vld [vmem:[%s3 + $0x164] sm:$0xf]
      %v3435 = vld [vmem:[%s3 + $0x168] sm:$0xf]
      %v3436 = vld [vmem:[%s3 + $0x16c] sm:$0xf]
      %v3437 = vld [vmem:[%s3 + $0x170] sm:$0xf]
      %v3438 = vld [vmem:[%s3 + $0x174] sm:$0xf]
      %v3439 = vld [vmem:[%s3 + $0x178] sm:$0xf]
      %v3440 = vld [vmem:[%s3 + $0x17c] sm:$0xf]
      %v3441 = vld [vmem:[%s3 + $0x180] sm:$0xf]
      %v3442 = vld [vmem:[%s3 + $0x184] sm:$0xf]
      %v3443 = vld [vmem:[%s3 + $0x188] sm:$0xf]
      %v3444 = vld [vmem:[%s3 + $0x18c] sm:$0xf]
      %v3445 = vld [vmem:[%s3 + $0x190] sm:$0xf]
      %v3446 = vld [vmem:[%s3 + $0x194] sm:$0xf]
      %v3447 = vld [vmem:[%s3 + $0x198] sm:$0xf]
      %v3448 = vld [vmem:[%s3 + $0x19c] sm:$0xf]
      %v3449 = vld [vmem:[%s3 + $0x1a0] sm:$0xf]
      %v3450 = vld [vmem:[%s3 + $0x1a4] sm:$0xf]
      %v3451 = vld [vmem:[%s3 + $0x1a8] sm:$0xf]
      %v3452 = vld [vmem:[%s3 + $0x1ac] sm:$0xf]
      %v3453 = vld [vmem:[%s3 + $0x1b0] sm:$0xf]
      %v3454 = vld [vmem:[%s3 + $0x1b4] sm:$0xf]
      %v3455 = vld [vmem:[%s3 + $0x1b8] sm:$0xf]
      %v3456 = vld [vmem:[%s3 + $0x1bc] sm:$0xf]
      %v3457 = vld [vmem:[%s3 + $0x1c0] sm:$0xf]
      %v3458 = vld [vmem:[%s3 + $0x1c4] sm:$0xf]
      %v3459 = vld [vmem:[%s3 + $0x1c8] sm:$0xf]
      %v3460 = vld [vmem:[%s3 + $0x1cc] sm:$0xf]
      %v3461 = vld [vmem:[%s3 + $0x1d0] sm:$0xf]
      %v3462 = vld [vmem:[%s3 + $0x1d4] sm:$0xf]
      %v3463 = vld [vmem:[%s3 + $0x1d8] sm:$0xf]
      %v3464 = vld [vmem:[%s3 + $0x1dc] sm:$0xf]
      %v3465 = vld [vmem:[%s3 + $0x1e0] sm:$0xf]
      %v3466 = vld [vmem:[%s3 + $0x1e4] sm:$0xf]
      %v3467 = vld [vmem:[%s3 + $0x1e8] sm:$0xf]
      %v3468 = vld [vmem:[%s3 + $0x1ec] sm:$0xf]
      %v3469 = vld [vmem:[%s3 + $0x1f0] sm:$0xf]
      %v3470 = vld [vmem:[%s3 + $0x1f4] sm:$0xf]
      %v3471 = vld [vmem:[%s3 + $0x1f8] sm:$0xf]
      %v3472 = vld [vmem:[%s3 + $0x1fc] sm:$0xf]
      %v3473 = vld [vmem:[%s3 + $0x200] sm:$0xf]
      %v3474 = vld [vmem:[%s3 + $0x204] sm:$0xf]
      %v3475 = vld [vmem:[%s3 + $0x208] sm:$0xf]
      %v3476 = vld [vmem:[%s3 + $0x20c] sm:$0xf]
      %v3477 = vld [vmem:[%s3 + $0x210] sm:$0xf]
      %v3478 = vld [vmem:[%s3 + $0x214] sm:$0xf]
      %v3479 = vld [vmem:[%s3 + $0x218] sm:$0xf]
      %v3480 = vld [vmem:[%s3 + $0x21c] sm:$0xf]
      %v3481 = vld [vmem:[%s3 + $0x220] sm:$0xf]
      %v3482 = vld [vmem:[%s3 + $0x224] sm:$0xf]
      %v3483 = vld [vmem:[%s3 + $0x228] sm:$0xf]
      %v3484 = vld [vmem:[%s3 + $0x22c] sm:$0xf]
      %v3485 = vld [vmem:[%s3 + $0x230] sm:$0xf]
      %v3486 = vld [vmem:[%s3 + $0x234] sm:$0xf]
      %v3487 = vld [vmem:[%s3 + $0x238] sm:$0xf]
      %v3488 = vld [vmem:[%s3 + $0x23c] sm:$0xf]
      %v3489 = vld [vmem:[%s4] sm:$0x1]
      %v3491 = vlaneseq
      %v3492 = vshrl.u32 %v3491, 7
      %v3493 = vsub.s32 0, %v3492
      %v3494 = vrot.slane %v3489, %v3493
      %v3640 = vunpack.c.l.b16 %v3345
      %v3641 = vunpack.c.l.b16 %v3346
      %v3642 = vunpack.c.l.b16 %v3347
      %v3643 = vunpack.c.l.b16 %v3348
      %v3644 = vunpack.c.l.b16 %v3349
      %v3645 = vunpack.c.l.b16 %v3350
      %v3646 = vunpack.c.l.b16 %v3351
      %v3647 = vunpack.c.l.b16 %v3352
      %v3648 = vunpack.c.l.b16 %v3353
      %v3649 = vunpack.c.l.b16 %v3354
      %v3650 = vunpack.c.l.b16 %v3355
      %v3651 = vunpack.c.l.b16 %v3356
      %v3652 = vunpack.c.l.b16 %v3357
      %v3653 = vunpack.c.l.b16 %v3358
      %v3654 = vunpack.c.l.b16 %v3359
      %v3655 = vunpack.c.l.b16 %v3360
      %v3656 = vunpack.c.l.b16 %v3361
      %v3657 = vunpack.c.l.b16 %v3362
      %v3658 = vunpack.c.l.b16 %v3363
      %v3659 = vunpack.c.l.b16 %v3364
      %v3660 = vunpack.c.l.b16 %v3365
      %v3661 = vunpack.c.l.b16 %v3366
      %v3662 = vunpack.c.l.b16 %v3367
      %v3663 = vunpack.c.l.b16 %v3368
      %v3664 = vunpack.c.l.b16 %v3369
      %v3665 = vunpack.c.l.b16 %v3370
      %v3666 = vunpack.c.l.b16 %v3371
      %v3667 = vunpack.c.l.b16 %v3372
      %v3668 = vunpack.c.l.b16 %v3373
      %v3669 = vunpack.c.l.b16 %v3374
      %v3670 = vunpack.c.l.b16 %v3375
      %v3671 = vunpack.c.l.b16 %v3376
      %v3672 = vunpack.c.l.b16 %v3377
      %v3673 = vunpack.c.l.b16 %v3378
      %v3674 = vunpack.c.l.b16 %v3379
      %v3675 = vunpack.c.l.b16 %v3380
      %v3676 = vunpack.c.l.b16 %v3381
      %v3677 = vunpack.c.l.b16 %v3382
      %v3678 = vunpack.c.l.b16 %v3383
      %v3679 = vunpack.c.l.b16 %v3384
      %v3680 = vunpack.c.l.b16 %v3385
      %v3681 = vunpack.c.l.b16 %v3386
      %v3682 = vunpack.c.l.b16 %v3387
      %v3683 = vunpack.c.l.b16 %v3388
      %v3684 = vunpack.c.l.b16 %v3389
      %v3685 = vunpack.c.l.b16 %v3390
      %v3686 = vunpack.c.l.b16 %v3391
      %v3687 = vunpack.c.l.b16 %v3392
      %v3688 = vunpack.c.l.b16 %v3393
      %v3689 = vunpack.c.l.b16 %v3394
      %v3690 = vunpack.c.l.b16 %v3395
      %v3691 = vunpack.c.l.b16 %v3396
      %v3692 = vunpack.c.l.b16 %v3397
      %v3693 = vunpack.c.l.b16 %v3398
      %v3694 = vunpack.c.l.b16 %v3399
      %v3695 = vunpack.c.l.b16 %v3400
      %v3696 = vunpack.c.l.b16 %v3401
      %v3697 = vunpack.c.l.b16 %v3402
      %v3698 = vunpack.c.l.b16 %v3403
      %v3699 = vunpack.c.l.b16 %v3404
      %v3700 = vunpack.c.l.b16 %v3405
      %v3701 = vunpack.c.l.b16 %v3406
      %v3702 = vunpack.c.l.b16 %v3407
      %v3703 = vunpack.c.l.b16 %v3408
      %v3704 = vunpack.c.l.b16 %v3409
      %v3705 = vunpack.c.l.b16 %v3410
      %v3706 = vunpack.c.l.b16 %v3411
      %v3707 = vunpack.c.l.b16 %v3412
      %v3708 = vunpack.c.l.b16 %v3413
      %v3709 = vunpack.c.l.b16 %v3414
      %v3710 = vunpack.c.l.b16 %v3415
      %v3711 = vunpack.c.l.b16 %v3416
      %v3712 = vunpack.c.l.b16 %v3417
      %v3713 = vunpack.c.l.b16 %v3418
      %v3714 = vunpack.c.l.b16 %v3419
      %v3715 = vunpack.c.l.b16 %v3420
      %v3716 = vunpack.c.l.b16 %v3421
      %v3717 = vunpack.c.l.b16 %v3422
      %v3718 = vunpack.c.l.b16 %v3423
      %v3719 = vunpack.c.l.b16 %v3424
      %v3720 = vunpack.c.l.b16 %v3425
      %v3721 = vunpack.c.l.b16 %v3426
      %v3722 = vunpack.c.l.b16 %v3427
      %v3723 = vunpack.c.l.b16 %v3428
      %v3724 = vunpack.c.l.b16 %v3429
      %v3725 = vunpack.c.l.b16 %v3430
      %v3726 = vunpack.c.l.b16 %v3431
      %v3727 = vunpack.c.l.b16 %v3432
      %v3728 = vunpack.c.l.b16 %v3433
      %v3729 = vunpack.c.l.b16 %v3434
      %v3730 = vunpack.c.l.b16 %v3435
      %v3731 = vunpack.c.l.b16 %v3436
      %v3732 = vunpack.c.l.b16 %v3437
      %v3733 = vunpack.c.l.b16 %v3438
      %v3734 = vunpack.c.l.b16 %v3439
      %v3735 = vunpack.c.l.b16 %v3440
      %v3736 = vunpack.c.l.b16 %v3441
      %v3737 = vunpack.c.l.b16 %v3442
      %v3738 = vunpack.c.l.b16 %v3443
      %v3739 = vunpack.c.l.b16 %v3444
      %v3740 = vunpack.c.l.b16 %v3445
      %v3741 = vunpack.c.l.b16 %v3446
      %v3742 = vunpack.c.l.b16 %v3447
      %v3743 = vunpack.c.l.b16 %v3448
      %v3744 = vunpack.c.l.b16 %v3449
      %v3745 = vunpack.c.l.b16 %v3450
      %v3746 = vunpack.c.l.b16 %v3451
      %v3747 = vunpack.c.l.b16 %v3452
      %v3748 = vunpack.c.l.b16 %v3453
      %v3749 = vunpack.c.l.b16 %v3454
      %v3750 = vunpack.c.l.b16 %v3455
      %v3751 = vunpack.c.l.b16 %v3456
      %v3752 = vunpack.c.l.b16 %v3457
      %v3753 = vunpack.c.l.b16 %v3458
      %v3754 = vunpack.c.l.b16 %v3459
      %v3755 = vunpack.c.l.b16 %v3460
      %v3756 = vunpack.c.l.b16 %v3461
      %v3757 = vunpack.c.l.b16 %v3462
      %v3758 = vunpack.c.l.b16 %v3463
      %v3759 = vunpack.c.l.b16 %v3464
      %v3760 = vunpack.c.l.b16 %v3465
      %v3761 = vunpack.c.l.b16 %v3466
      %v3762 = vunpack.c.l.b16 %v3467
      %v3763 = vunpack.c.l.b16 %v3468
      %v3764 = vunpack.c.l.b16 %v3469
      %v3765 = vunpack.c.l.b16 %v3470
      %v3766 = vunpack.c.l.b16 %v3471
      %v3767 = vunpack.c.l.b16 %v3472
      %v3768 = vunpack.c.l.b16 %v3473
      %v3769 = vunpack.c.l.b16 %v3474
      %v3770 = vunpack.c.l.b16 %v3475
      %v3771 = vunpack.c.l.b16 %v3476
      %v3772 = vunpack.c.l.b16 %v3477
      %v3773 = vunpack.c.l.b16 %v3478
      %v3774 = vunpack.c.l.b16 %v3479
      %v3775 = vunpack.c.l.b16 %v3480
      %v3776 = vunpack.c.l.b16 %v3481
      %v3777 = vunpack.c.l.b16 %v3482
      %v3778 = vunpack.c.l.b16 %v3483
      %v3779 = vunpack.c.l.b16 %v3484
      %v3780 = vunpack.c.l.b16 %v3485
      %v3781 = vunpack.c.l.b16 %v3486
      %v3782 = vunpack.c.l.b16 %v3487
      %v3783 = vunpack.c.l.b16 %v3488
      %v3784 = vpack.c.b16 %v3641, %v3640
      %v3785 = vpack.c.b16 %v3643, %v3642
      %v3786 = vpack.c.b16 %v3645, %v3644
      %v3787 = vpack.c.b16 %v3647, %v3646
      %v3788 = vpack.c.b16 %v3649, %v3648
      %v3789 = vpack.c.b16 %v3651, %v3650
      %v3790 = vpack.c.b16 %v3653, %v3652
      %v3791 = vpack.c.b16 %v3655, %v3654
      %v3792 = vpack.c.b16 %v3657, %v3656
      %v3793 = vpack.c.b16 %v3659, %v3658
      %v3794 = vpack.c.b16 %v3661, %v3660
      %v3795 = vpack.c.b16 %v3663, %v3662
      %v3796 = vpack.c.b16 %v3665, %v3664
      %v3797 = vpack.c.b16 %v3667, %v3666
      %v3798 = vpack.c.b16 %v3669, %v3668
      %v3799 = vpack.c.b16 %v3671, %v3670
      %v3800 = vpack.c.b16 %v3673, %v3672
      %v3801 = vpack.c.b16 %v3675, %v3674
      %v3802 = vpack.c.b16 %v3677, %v3676
      %v3803 = vpack.c.b16 %v3679, %v3678
      %v3804 = vpack.c.b16 %v3681, %v3680
      %v3805 = vpack.c.b16 %v3683, %v3682
      %v3806 = vpack.c.b16 %v3685, %v3684
      %v3807 = vpack.c.b16 %v3687, %v3686
      %v3808 = vpack.c.b16 %v3689, %v3688
      %v3809 = vpack.c.b16 %v3691, %v3690
      %v3810 = vpack.c.b16 %v3693, %v3692
      %v3811 = vpack.c.b16 %v3695, %v3694
      %v3812 = vpack.c.b16 %v3697, %v3696
      %v3813 = vpack.c.b16 %v3699, %v3698
      %v3814 = vpack.c.b16 %v3701, %v3700
      %v3815 = vpack.c.b16 %v3703, %v3702
      %v3816 = vpack.c.b16 %v3705, %v3704
      %v3817 = vpack.c.b16 %v3707, %v3706
      %v3818 = vpack.c.b16 %v3709, %v3708
      %v3819 = vpack.c.b16 %v3711, %v3710
      %v3820 = vpack.c.b16 %v3713, %v3712
      %v3821 = vpack.c.b16 %v3715, %v3714
      %v3822 = vpack.c.b16 %v3717, %v3716
      %v3823 = vpack.c.b16 %v3719, %v3718
      %v3824 = vpack.c.b16 %v3721, %v3720
      %v3825 = vpack.c.b16 %v3723, %v3722
      %v3826 = vpack.c.b16 %v3725, %v3724
      %v3827 = vpack.c.b16 %v3727, %v3726
      %v3828 = vpack.c.b16 %v3729, %v3728
      %v3829 = vpack.c.b16 %v3731, %v3730
      %v3830 = vpack.c.b16 %v3733, %v3732
      %v3831 = vpack.c.b16 %v3735, %v3734
      %v3832 = vpack.c.b16 %v3737, %v3736
      %v3833 = vpack.c.b16 %v3739, %v3738
      %v3834 = vpack.c.b16 %v3741, %v3740
      %v3835 = vpack.c.b16 %v3743, %v3742
      %v3836 = vpack.c.b16 %v3745, %v3744
      %v3837 = vpack.c.b16 %v3747, %v3746
      %v3838 = vpack.c.b16 %v3749, %v3748
      %v3839 = vpack.c.b16 %v3751, %v3750
      %v3840 = vpack.c.b16 %v3753, %v3752
      %v3841 = vpack.c.b16 %v3755, %v3754
      %v3842 = vpack.c.b16 %v3757, %v3756
      %v3843 = vpack.c.b16 %v3759, %v3758
      %v3844 = vpack.c.b16 %v3761, %v3760
      %v3845 = vpack.c.b16 %v3763, %v3762
      %v3846 = vpack.c.b16 %v3765, %v3764
      %v3847 = vpack.c.b16 %v3767, %v3766
      %v3848 = vpack.c.b16 %v3769, %v3768
      %v3849 = vpack.c.b16 %v3771, %v3770
      %v3850 = vpack.c.b16 %v3773, %v3772
      %v3851 = vpack.c.b16 %v3775, %v3774
      %v3852 = vpack.c.b16 %v3777, %v3776
      %v3853 = vpack.c.b16 %v3779, %v3778
      %v3854 = vpack.c.b16 %v3781, %v3780
      %v3855 = vpack.c.b16 %v3783, %v3782
      %3928 = vmatprep.subr.bf16.mxu0 0
      %3929 = vmatpush1.bf16.msra.mxu0 %v3784
      %3930 = vmatprep.subr.bf16.mxu0 0
      %3931 = vmatpush1.bf16.msra.mxu0 %v3785
      %3932 = vmatprep.subr.bf16.mxu0 0
      %3933 = vmatpush1.bf16.msra.mxu0 %v3786
      %3934 = vmatprep.subr.bf16.mxu0 0
      %3935 = vmatpush1.bf16.msra.mxu0 %v3787
      %3936 = vmatprep.subr.bf16.mxu0 0
      %3937 = vmatpush1.bf16.msra.mxu0 %v3788
      %3938 = vmatprep.subr.bf16.mxu0 0
      %3939 = vmatpush1.bf16.msra.mxu0 %v3789
      %3940 = vmatprep.subr.bf16.mxu0 0
      %3941 = vmatpush1.bf16.msra.mxu0 %v3790
      %3942 = vmatprep.subr.bf16.mxu0 0
      %3943 = vmatpush1.bf16.msra.mxu0 %v3791
      %3944 = vmatprep.subr.bf16.mxu0 0
      %3945 = vmatpush1.bf16.msra.mxu0 %v3792
      %3946 = vmatprep.subr.bf16.mxu0 0
      %3947 = vmatpush1.bf16.msra.mxu0 %v3793
      %3948 = vmatprep.subr.bf16.mxu0 0
      %3949 = vmatpush1.bf16.msra.mxu0 %v3794
      %3950 = vmatprep.subr.bf16.mxu0 0
      %3951 = vmatpush1.bf16.msra.mxu0 %v3795
      %3952 = vmatprep.subr.bf16.mxu0 0
      %3953 = vmatpush1.bf16.msra.mxu0 %v3796
      %3954 = vmatprep.subr.bf16.mxu0 0
      %3955 = vmatpush1.bf16.msra.mxu0 %v3797
      %3956 = vmatprep.subr.bf16.mxu0 0
      %3957 = vmatpush1.bf16.msra.mxu0 %v3798
      %3958 = vmatprep.subr.bf16.mxu0 0
      %3959 = vmatpush1.bf16.msra.mxu0 %v3799
      %3960 = vmatprep.mubr.bf16.mxu0 %v3032
      %3961 = vmatmul.mubr.bf16.gmra.mrb[0].mxu0 %v2941
      %v3962 = vpop.f32.mrb[0].mxu0
      %v3963 = vadd.f32 %v3494, %v3962
      %v3964 = vpop.f32.mrb[0].mxu0
      %v3965 = vpop.f32.mrb[0].mxu0
      %v3966 = vadd.f32 %v3494, %v3965
      %v3967 = vpop.f32.mrb[0].mxu0
      %3968 = vmatprep.mubr.bf16.mxu0 %v3044
      %3969 = vmatmul.mubr.bf16.gmra.mrb[0].mxu0 %v2942
      %v3970 = vpop.f32.mrb[0].mxu0
      %v3971 = vadd.f32 %v3494, %v3970
      %v3972 = vpop.f32.mrb[0].mxu0
      %v3973 = vpop.f32.mrb[0].mxu0
      %v3974 = vadd.f32 %v3494, %v3973
      %v3975 = vpop.f32.mrb[0].mxu0
      %3976 = vmatprep.mubr.bf16.mxu0 %v3056
      %3977 = vmatmul.mubr.bf16.gmra.mrb[0].mxu0 %v2943
      %v3978 = vpop.f32.mrb[0].mxu0
      %v3979 = vadd.f32 %v3494, %v3978
      %v3980 = vpop.f32.mrb[0].mxu0
      %v3981 = vpop.f32.mrb[0].mxu0
      %v3982 = vadd.f32 %v3494, %v3981
      %v3983 = vpop.f32.mrb[0].mxu0
      %3984 = vmatprep.mubr.bf16.mxu0 %v3068
      %3985 = vmatmul.mubr.bf16.gmra.mrb[0].mxu0 %v2944
      %v3986 = vpop.f32.mrb[0].mxu0
      %v3987 = vadd.f32 %v3494, %v3986
      %v3988 = vpop.f32.mrb[0].mxu0
      %v3989 = vpop.f32.mrb[0].mxu0
      %v3990 = vadd.f32 %v3494, %v3989
      %v3991 = vpop.f32.mrb[0].mxu0
      %3992 = vmatprep.mubr.bf16.mxu0 %v3080
      %3993 = vmatmul.mubr.bf16.gmra.mrb[0].mxu0 %v2945
      %v3994 = vpop.f32.mrb[0].mxu0
      %v3995 = vadd.f32 %v3494, %v3994
      %v3996 = vpop.f32.mrb[0].mxu0
      %v3997 = vpop.f32.mrb[0].mxu0
      %v3998 = vadd.f32 %v3494, %v3997
      %v3999 = vpop.f32.mrb[0].mxu0
      %4000 = vmatprep.mubr.bf16.mxu0 %v3092
      %4001 = vmatmul.mubr.bf16.gmra.mrb[0].mxu0 %v2946
      %v4002 = vpop.f32.mrb[0].mxu0
      %v4003 = vadd.f32 %v3494, %v4002
      %v4004 = vpop.f32.mrb[0].mxu0
      %v4005 = vpop.f32.mrb[0].mxu0
      %v4006 = vadd.f32 %v3494, %v4005
      %v4007 = vpop.f32.mrb[0].mxu0
      %4008 = vmatprep.mubr.bf16.mxu0 %v3104
      %4009 = vmatmul.mubr.bf16.gmra.mrb[0].mxu0 %v2947
      %v4010 = vpop.f32.mrb[0].mxu0
      %v4011 = vadd.f32 %v3494, %v4010
      %v4012 = vpop.f32.mrb[0].mxu0
      %v4013 = vpop.f32.mrb[0].mxu0
      %v4014 = vadd.f32 %v3494, %v4013
      %v4015 = vpop.f32.mrb[0].mxu0
      %4016 = vmatprep.mubr.bf16.mxu0 %v3116
      %4017 = vmatmul.mubr.bf16.gmra.mrb[0].mxu0 %v2948
      %v4018 = vpop.f32.mrb[0].mxu0
      %v4019 = vadd.f32 %v3494, %v4018
      %v4020 = vpop.f32.mrb[0].mxu0
      %v4021 = vpop.f32.mrb[0].mxu0
      %v4022 = vadd.f32 %v3494, %v4021
      %v4023 = vpop.f32.mrb[0].mxu0
      %4024 = vmatprep.mubr.bf16.mxu0 %v3128
      %4025 = vmatmul.mubr.bf16.gmra.mrb[0].mxu0 %v2949
      %v4026 = vpop.f32.mrb[0].mxu0
      %v4027 = vadd.f32 %v3494, %v4026
      %v4028 = vpop.f32.mrb[0].mxu0
      %v4029 = vpop.f32.mrb[0].mxu0
      %v4030 = vadd.f32 %v3494, %v4029
      %v4031 = vpop.f32.mrb[0].mxu0
      %4032 = vmatprep.mubr.bf16.mxu0 %v3140
      %4033 = vmatmul.mubr.bf16.gmra.mrb[0].mxu0 %v2950
      %v4034 = vpop.f32.mrb[0].mxu0
      %v4035 = vadd.f32 %v3494, %v4034
      %v4036 = vpop.f32.mrb[0].mxu0
      %v4037 = vpop.f32.mrb[0].mxu0
      %v4038 = vadd.f32 %v3494, %v4037
      %v4039 = vpop.f32.mrb[0].mxu0
      %4040 = vmatprep.mubr.bf16.mxu0 %v3152
      %4041 = vmatmul.mubr.bf16.gmra.mrb[0].mxu0 %v2951
      %v4042 = vpop.f32.mrb[0].mxu0
      %v4043 = vadd.f32 %v3494, %v4042
      %v4044 = vpop.f32.mrb[0].mxu0
      %v4045 = vpop.f32.mrb[0].mxu0
      %v4046 = vadd.f32 %v3494, %v4045
      %v4047 = vpop.f32.mrb[0].mxu0
      %4048 = vmatprep.mubr.bf16.mxu0 %v3164
      %4049 = vmatmul.mubr.bf16.gmra.mrb[0].mxu0 %v2952
      %v4050 = vpop.f32.mrb[0].mxu0
      %v4051 = vadd.f32 %v3494, %v4050
      %v4052 = vpop.f32.mrb[0].mxu0
      %v4053 = vpop.f32.mrb[0].mxu0
      %v4054 = vadd.f32 %v3494, %v4053
      %v4055 = vpop.f32.mrb[0].mxu0
      %4056 = vmatprep.mubr.bf16.mxu0 %v3176
      %4057 = vmatmul.mubr.bf16.gmra.mrb[0].mxu0 %v2953
      %v4058 = vpop.f32.mrb[0].mxu0
      %v4059 = vadd.f32 %v3494, %v4058
      %v4060 = vpop.f32.mrb[0].mxu0
      %v4061 = vpop.f32.mrb[0].mxu0
      %v4062 = vadd.f32 %v3494, %v4061
      %v4063 = vpop.f32.mrb[0].mxu0
      %4064 = vmatprep.mubr.bf16.mxu0 %v3188
      %4065 = vmatmul.mubr.bf16.gmra.mrb[0].mxu0 %v2954
      %v4066 = vpop.f32.mrb[0].mxu0
      %v4067 = vadd.f32 %v3494, %v4066
      %v4068 = vpop.f32.mrb[0].mxu0
      %v4069 = vpop.f32.mrb[0].mxu0
      %v4070 = vadd.f32 %v3494, %v4069
      %v4071 = vpop.f32.mrb[0].mxu0
      %4072 = vmatprep.mubr.bf16.mxu0 %v3200
      %4073 = vmatmul.mubr.bf16.gmra.mrb[0].mxu0 %v2955
      %v4074 = vpop.f32.mrb[0].mxu0
      %v4075 = vadd.f32 %v3494, %v4074
      %v4076 = vpop.f32.mrb[0].mxu0
      %v4077 = vpop.f32.mrb[0].mxu0
      %v4078 = vadd.f32 %v3494, %v4077
      %v4079 = vpop.f32.mrb[0].mxu0
      %4080 = vmatprep.mubr.bf16.mxu0 %v3212
      %4081 = vmatmul.mubr.bf16.gmra.mrb[0].mxu0 %v2956
      %v4082 = vpop.f32.mrb[0].mxu0
      %v4083 = vadd.f32 %v3494, %v4082
      %v4084 = vpop.f32.mrb[0].mxu0
      %v4085 = vpop.f32.mrb[0].mxu0
      %v4086 = vadd.f32 %v3494, %v4085
      %v4087 = vpop.f32.mrb[0].mxu0
      %4088 = vdwg.mxu0
      %4089 = vmatprep.subr.bf16.mxu0 0
      %4090 = vmatpush1.bf16.msra.mxu0 %v3800
      %4091 = vmatprep.subr.bf16.mxu0 0
      %4092 = vmatpush1.bf16.msra.mxu0 %v3801
      %4093 = vmatprep.subr.bf16.mxu0 0
      %4094 = vmatpush1.bf16.msra.mxu0 %v3802
      %4095 = vmatprep.subr.bf16.mxu0 0
      %4096 = vmatpush1.bf16.msra.mxu0 %v3803
      %4097 = vmatprep.subr.bf16.mxu0 0
      %4098 = vmatpush1.bf16.msra.mxu0 %v3804
      %4099 = vmatprep.subr.bf16.mxu0 0
      %4100 = vmatpush1.bf16.msra.mxu0 %v3805
      %4101 = vmatprep.subr.bf16.mxu0 0
      %4102 = vmatpush1.bf16.msra.mxu0 %v3806
      %4103 = vmatprep.subr.bf16.mxu0 0
      %4104 = vmatpush1.bf16.msra.mxu0 %v3807
      %4105 = vmatprep.subr.bf16.mxu0 0
      %4106 = vmatpush1.bf16.msra.mxu0 %v3808
      %4107 = vmatprep.subr.bf16.mxu0 0
      %4108 = vmatpush1.bf16.msra.mxu0 %v3809
      %4109 = vmatprep.subr.bf16.mxu0 0
      %4110 = vmatpush1.bf16.msra.mxu0 %v3810
      %4111 = vmatprep.subr.bf16.mxu0 0
      %4112 = vmatpush1.bf16.msra.mxu0 %v3811
      %4113 = vmatprep.subr.bf16.mxu0 0
      %4114 = vmatpush1.bf16.msra.mxu0 %v3812
      %4115 = vmatprep.subr.bf16.mxu0 0
      %4116 = vmatpush1.bf16.msra.mxu0 %v3813
      %4117 = vmatprep.subr.bf16.mxu0 0
      %4118 = vmatpush1.bf16.msra.mxu0 %v3814
      %4119 = vmatprep.subr.bf16.mxu0 0
      %4120 = vmatpush1.bf16.msra.mxu0 %v3815
      %4121 = vmatprep.mubr.bf16.mxu0 %v2942
      %4122 = vmatmul.mubr.bf16.gmra.mrb[0].mxu0 %v3231
      %v4123 = vpop.f32.mrb[0].mxu0
      %v4124 = vadd.f32 %v3963, %v4123
      %v4125 = vpop.f32.mrb[0].mxu0
      %v4126 = vpop.f32.mrb[0].mxu0
      %v4127 = vadd.f32 %v3966, %v4126
      %v4128 = vpop.f32.mrb[0].mxu0
      %4129 = vmatprep.mubr.bf16.mxu0 %v2943
      %4130 = vmatmul.mubr.bf16.gmra.mrb[0].mxu0 %v3234
      %v4131 = vpop.f32.mrb[0].mxu0
      %v4132 = vadd.f32 %v3971, %v4131
      %v4133 = vpop.f32.mrb[0].mxu0
      %v4134 = vpop.f32.mrb[0].mxu0
      %v4135 = vadd.f32 %v3974, %v4134
      %v4136 = vpop.f32.mrb[0].mxu0
      %4137 = vmatprep.mubr.bf16.mxu0 %v2944
      %4138 = vmatmul.mubr.bf16.gmra.mrb[0].mxu0 %v3237
      %v4139 = vpop.f32.mrb[0].mxu0
      %v4140 = vadd.f32 %v3979, %v4139
      %v4141 = vpop.f32.mrb[0].mxu0
      %v4142 = vpop.f32.mrb[0].mxu0
      %v4143 = vadd.f32 %v3982, %v4142
      %v4144 = vpop.f32.mrb[0].mxu0
      %4145 = vmatprep.mubr.bf16.mxu0 %v2945
      %4146 = vmatmul.mubr.bf16.gmra.mrb[0].mxu0 %v3240
      %v4147 = vpop.f32.mrb[0].mxu0
      %v4148 = vadd.f32 %v3987, %v4147
      %v4149 = vpop.f32.mrb[0].mxu0
      %v4150 = vpop.f32.mrb[0].mxu0
      %v4151 = vadd.f32 %v3990, %v4150
      %v4152 = vpop.f32.mrb[0].mxu0
      %4153 = vmatprep.mubr.bf16.mxu0 %v2946
      %4154 = vmatmul.mubr.bf16.gmra.mrb[0].mxu0 %v3243
      %v4155 = vpop.f32.mrb[0].mxu0
      %v4156 = vadd.f32 %v3995, %v4155
      %v4157 = vpop.f32.mrb[0].mxu0
      %v4158 = vpop.f32.mrb[0].mxu0
      %v4159 = vadd.f32 %v3998, %v4158
      %v4160 = vpop.f32.mrb[0].mxu0
      %4161 = vmatprep.mubr.bf16.mxu0 %v2947
      %4162 = vmatmul.mubr.bf16.gmra.mrb[0].mxu0 %v3246
      %v4163 = vpop.f32.mrb[0].mxu0
      %v4164 = vadd.f32 %v4003, %v4163
      %v4165 = vpop.f32.mrb[0].mxu0
      %v4166 = vpop.f32.mrb[0].mxu0
      %v4167 = vadd.f32 %v4006, %v4166
      %v4168 = vpop.f32.mrb[0].mxu0
      %4169 = vmatprep.mubr.bf16.mxu0 %v2948
      %4170 = vmatmul.mubr.bf16.gmra.mrb[0].mxu0 %v3249
      %v4171 = vpop.f32.mrb[0].mxu0
      %v4172 = vadd.f32 %v4011, %v4171
      %v4173 = vpop.f32.mrb[0].mxu0
      %v4174 = vpop.f32.mrb[0].mxu0
      %v4175 = vadd.f32 %v4014, %v4174
      %v4176 = vpop.f32.mrb[0].mxu0
      %4177 = vmatprep.mubr.bf16.mxu0 %v2949
      %4178 = vmatmul.mubr.bf16.gmra.mrb[0].mxu0 %v3252
      %v4179 = vpop.f32.mrb[0].mxu0
      %v4180 = vadd.f32 %v4019, %v4179
      %v4181 = vpop.f32.mrb[0].mxu0
      %v4182 = vpop.f32.mrb[0].mxu0
      %v4183 = vadd.f32 %v4022, %v4182
      %v4184 = vpop.f32.mrb[0].mxu0
      %4185 = vmatprep.mubr.bf16.mxu0 %v2950
      %4186 = vmatmul.mubr.bf16.gmra.mrb[0].mxu0 %v3255
      %v4187 = vpop.f32.mrb[0].mxu0
      %v4188 = vadd.f32 %v4027, %v4187
      %v4189 = vpop.f32.mrb[0].mxu0
      %v4190 = vpop.f32.mrb[0].mxu0
      %v4191 = vadd.f32 %v4030, %v4190
      %v4192 = vpop.f32.mrb[0].mxu0
      %4193 = vmatprep.mubr.bf16.mxu0 %v2951
      %4194 = vmatmul.mubr.bf16.gmra.mrb[0].mxu0 %v3258
      %v4195 = vpop.f32.mrb[0].mxu0
      %v4196 = vadd.f32 %v4035, %v4195
      %v4197 = vpop.f32.mrb[0].mxu0
      %v4198 = vpop.f32.mrb[0].mxu0
      %v4199 = vadd.f32 %v4038, %v4198
      %v4200 = vpop.f32.mrb[0].mxu0
      %4201 = vmatprep.mubr.bf16.mxu0 %v2952
      %4202 = vmatmul.mubr.bf16.gmra.mrb[0].mxu0 %v3261
      %v4203 = vpop.f32.mrb[0].mxu0
      %v4204 = vadd.f32 %v4043, %v4203
      %v4205 = vpop.f32.mrb[0].mxu0
      %v4206 = vpop.f32.mrb[0].mxu0
      %v4207 = vadd.f32 %v4046, %v4206
      %v4208 = vpop.f32.mrb[0].mxu0
      %4209 = vmatprep.mubr.bf16.mxu0 %v2953
      %4210 = vmatmul.mubr.bf16.gmra.mrb[0].mxu0 %v3264
      %v4211 = vpop.f32.mrb[0].mxu0
      %v4212 = vadd.f32 %v4051, %v4211
      %v4213 = vpop.f32.mrb[0].mxu0
      %v4214 = vpop.f32.mrb[0].mxu0
      %v4215 = vadd.f32 %v4054, %v4214
      %v4216 = vpop.f32.mrb[0].mxu0
      %4217 = vmatprep.mubr.bf16.mxu0 %v2954
      %4218 = vmatmul.mubr.bf16.gmra.mrb[0].mxu0 %v3267
      %v4219 = vpop.f32.mrb[0].mxu0
      %v4220 = vadd.f32 %v4059, %v4219
      %v4221 = vpop.f32.mrb[0].mxu0
      %v4222 = vpop.f32.mrb[0].mxu0
      %v4223 = vadd.f32 %v4062, %v4222
      %v4224 = vpop.f32.mrb[0].mxu0
      %4225 = vmatprep.mubr.bf16.mxu0 %v2955
      %4226 = vmatmul.mubr.bf16.gmra.mrb[0].mxu0 %v3270
      %v4227 = vpop.f32.mrb[0].mxu0
      %v4228 = vadd.f32 %v4067, %v4227
      %v4229 = vpop.f32.mrb[0].mxu0
      %v4230 = vpop.f32.mrb[0].mxu0
      %v4231 = vadd.f32 %v4070, %v4230
      %v4232 = vpop.f32.mrb[0].mxu0
      %4233 = vmatprep.mubr.bf16.mxu0 %v2956
      %4234 = vmatmul.mubr.bf16.gmra.mrb[0].mxu0 %v3273
      %v4235 = vpop.f32.mrb[0].mxu0
      %v4236 = vadd.f32 %v4075, %v4235
      %v4237 = vpop.f32.mrb[0].mxu0
      %v4238 = vpop.f32.mrb[0].mxu0
      %v4239 = vadd.f32 %v4078, %v4238
      %v4240 = vpop.f32.mrb[0].mxu0
      %4241 = vmatprep.mubr.bf16.mxu0 %v3297
      %4242 = vmatmul.mubr.bf16.gmra.mrb[0].mxu0 %v3276
      %v4243 = vpop.f32.mrb[0].mxu0
      %v4244 = vadd.f32 %v4083, %v4243
      %v4245 = vpop.f32.mrb[0].mxu0
      %v4246 = vpop.f32.mrb[0].mxu0
      %v4247 = vadd.f32 %v4086, %v4246
      %v4248 = vpop.f32.mrb[0].mxu0
      %4249 = vdwg.mxu0
      %4250 = vmatprep.subr.bf16.mxu0 0
      %4251 = vmatpush1.bf16.msra.mxu0 %v3816
      %4252 = vmatprep.subr.bf16.mxu0 0
      %4253 = vmatpush1.bf16.msra.mxu0 %v3817
      %4254 = vmatprep.subr.bf16.mxu0 0
      %4255 = vmatpush1.bf16.msra.mxu0 %v3818
      %4256 = vmatprep.subr.bf16.mxu0 0
      %4257 = vmatpush1.bf16.msra.mxu0 %v3819
      %4258 = vmatprep.subr.bf16.mxu0 0
      %4259 = vmatpush1.bf16.msra.mxu0 %v3820
      %4260 = vmatprep.subr.bf16.mxu0 0
      %4261 = vmatpush1.bf16.msra.mxu0 %v3821
      %4262 = vmatprep.subr.bf16.mxu0 0
      %4263 = vmatpush1.bf16.msra.mxu0 %v3822
      %4264 = vmatprep.subr.bf16.mxu0 0
      %4265 = vmatpush1.bf16.msra.mxu0 %v3823
      %4266 = vmatprep.subr.bf16.mxu0 0
      %4267 = vmatpush1.bf16.msra.mxu0 %v3824
      %4268 = vmatprep.subr.bf16.mxu0 0
      %4269 = vmatpush1.bf16.msra.mxu0 %v3825
      %4270 = vmatprep.subr.bf16.mxu0 0
      %4271 = vmatpush1.bf16.msra.mxu0 %v3826
      %4272 = vmatprep.subr.bf16.mxu0 0
      %4273 = vmatpush1.bf16.msra.mxu0 %v3827
      %4274 = vmatprep.subr.bf16.mxu0 0
      %4275 = vmatpush1.bf16.msra.mxu0 %v3828
      %4276 = vmatprep.subr.bf16.mxu0 0
      %4277 = vmatpush1.bf16.msra.mxu0 %v3829
      %4278 = vmatprep.subr.bf16.mxu0 0
      %4279 = vmatpush1.bf16.msra.mxu0 %v3830
      %4280 = vmatprep.subr.bf16.mxu0 0
      %4281 = vmatpush1.bf16.msra.mxu0 %v3831
      %4282 = vmatprep.mubr.bf16.mxu0 %v3234
      %4283 = vmatmul.mubr.bf16.gmra.mrb[0].mxu0 %v3044
      %v4284 = vpop.f32.mrb[0].mxu0
      %v4285 = vadd.f32 %v4124, %v4284
      %v4286 = vpop.f32.mrb[0].mxu0
      %v4287 = vpop.f32.mrb[0].mxu0
      %v4288 = vadd.f32 %v4127, %v4287
      %v4289 = vpop.f32.mrb[0].mxu0
      %4290 = vmatprep.mubr.bf16.mxu0 %v3237
      %4291 = vmatmul.mubr.bf16.gmra.mrb[0].mxu0 %v3056
      %v4292 = vpop.f32.mrb[0].mxu0
      %v4293 = vadd.f32 %v4132, %v4292
      %v4294 = vpop.f32.mrb[0].mxu0
      %v4295 = vpop.f32.mrb[0].mxu0
      %v4296 = vadd.f32 %v4135, %v4295
      %v4297 = vpop.f32.mrb[0].mxu0
      %4298 = vmatprep.mubr.bf16.mxu0 %v3240
      %4299 = vmatmul.mubr.bf16.gmra.mrb[0].mxu0 %v3068
      %v4300 = vpop.f32.mrb[0].mxu0
      %v4301 = vadd.f32 %v4140, %v4300
      %v4302 = vpop.f32.mrb[0].mxu0
      %v4303 = vpop.f32.mrb[0].mxu0
      %v4304 = vadd.f32 %v4143, %v4303
      %v4305 = vpop.f32.mrb[0].mxu0
      %4306 = vmatprep.mubr.bf16.mxu0 %v3243
      %4307 = vmatmul.mubr.bf16.gmra.mrb[0].mxu0 %v3080
      %v4308 = vpop.f32.mrb[0].mxu0
      %v4309 = vadd.f32 %v4148, %v4308
      %v4310 = vpop.f32.mrb[0].mxu0
      %v4311 = vpop.f32.mrb[0].mxu0
      %v4312 = vadd.f32 %v4151, %v4311
      %v4313 = vpop.f32.mrb[0].mxu0
      %4314 = vmatprep.mubr.bf16.mxu0 %v3246
      %4315 = vmatmul.mubr.bf16.gmra.mrb[0].mxu0 %v3092
      %v4316 = vpop.f32.mrb[0].mxu0
      %v4317 = vadd.f32 %v4156, %v4316
      %v4318 = vpop.f32.mrb[0].mxu0
      %v4319 = vpop.f32.mrb[0].mxu0
      %v4320 = vadd.f32 %v4159, %v4319
      %v4321 = vpop.f32.mrb[0].mxu0
      %4322 = vmatprep.mubr.bf16.mxu0 %v3249
      %4323 = vmatmul.mubr.bf16.gmra.mrb[0].mxu0 %v3104
      %v4324 = vpop.f32.mrb[0].mxu0
      %v4325 = vadd.f32 %v4164, %v4324
      %v4326 = vpop.f32.mrb[0].mxu0
      %v4327 = vpop.f32.mrb[0].mxu0
      %v4328 = vadd.f32 %v4167, %v4327
      %v4329 = vpop.f32.mrb[0].mxu0
      %4330 = vmatprep.mubr.bf16.mxu0 %v3252
      %4331 = vmatmul.mubr.bf16.gmra.mrb[0].mxu0 %v3116
      %v4332 = vpop.f32.mrb[0].mxu0
      %v4333 = vadd.f32 %v4172, %v4332
      %v4334 = vpop.f32.mrb[0].mxu0
      %v4335 = vpop.f32.mrb[0].mxu0
      %v4336 = vadd.f32 %v4175, %v4335
      %v4337 = vpop.f32.mrb[0].mxu0
      %4338 = vmatprep.mubr.bf16.mxu0 %v3255
      %4339 = vmatmul.mubr.bf16.gmra.mrb[0].mxu0 %v3128
      %v4340 = vpop.f32.mrb[0].mxu0
      %v4341 = vadd.f32 %v4180, %v4340
      %v4342 = vpop.f32.mrb[0].mxu0
      %v4343 = vpop.f32.mrb[0].mxu0
      %v4344 = vadd.f32 %v4183, %v4343
      %v4345 = vpop.f32.mrb[0].mxu0
      %4346 = vmatprep.mubr.bf16.mxu0 %v3258
      %4347 = vmatmul.mubr.bf16.gmra.mrb[0].mxu0 %v3140
      %v4348 = vpop.f32.mrb[0].mxu0
      %v4349 = vadd.f32 %v4188, %v4348
      %v4350 = vpop.f32.mrb[0].mxu0
      %v4351 = vpop.f32.mrb[0].mxu0
      %v4352 = vadd.f32 %v4191, %v4351
      %v4353 = vpop.f32.mrb[0].mxu0
      %4354 = vmatprep.mubr.bf16.mxu0 %v3261
      %4355 = vmatmul.mubr.bf16.gmra.mrb[0].mxu0 %v3152
      %v4356 = vpop.f32.mrb[0].mxu0
      %v4357 = vadd.f32 %v4196, %v4356
      %v4358 = vpop.f32.mrb[0].mxu0
      %v4359 = vpop.f32.mrb[0].mxu0
      %v4360 = vadd.f32 %v4199, %v4359
      %v4361 = vpop.f32.mrb[0].mxu0
      %4362 = vmatprep.mubr.bf16.mxu0 %v3264
      %4363 = vmatmul.mubr.bf16.gmra.mrb[0].mxu0 %v3164
      %v4364 = vpop.f32.mrb[0].mxu0
      %v4365 = vadd.f32 %v4204, %v4364
      %v4366 = vpop.f32.mrb[0].mxu0
      %v4367 = vpop.f32.mrb[0].mxu0
      %v4368 = vadd.f32 %v4207, %v4367
      %v4369 = vpop.f32.mrb[0].mxu0
      %4370 = vmatprep.mubr.bf16.mxu0 %v3267
      %4371 = vmatmul.mubr.bf16.gmra.mrb[0].mxu0 %v3176
      %v4372 = vpop.f32.mrb[0].mxu0
      %v4373 = vadd.f32 %v4212, %v4372
      %v4374 = vpop.f32.mrb[0].mxu0
      %v4375 = vpop.f32.mrb[0].mxu0
      %v4376 = vadd.f32 %v4215, %v4375
      %v4377 = vpop.f32.mrb[0].mxu0
      %4378 = vmatprep.mubr.bf16.mxu0 %v3270
      %4379 = vmatmul.mubr.bf16.gmra.mrb[0].mxu0 %v3188
      %v4380 = vpop.f32.mrb[0].mxu0
      %v4381 = vadd.f32 %v4220, %v4380
      %v4382 = vpop.f32.mrb[0].mxu0
      %v4383 = vpop.f32.mrb[0].mxu0
      %v4384 = vadd.f32 %v4223, %v4383
      %v4385 = vpop.f32.mrb[0].mxu0
      %4386 = vmatprep.mubr.bf16.mxu0 %v3273
      %4387 = vmatmul.mubr.bf16.gmra.mrb[0].mxu0 %v3200
      %v4388 = vpop.f32.mrb[0].mxu0
      %v4389 = vadd.f32 %v4228, %v4388
      %v4390 = vpop.f32.mrb[0].mxu0
      %v4391 = vpop.f32.mrb[0].mxu0
      %v4392 = vadd.f32 %v4231, %v4391
      %v4393 = vpop.f32.mrb[0].mxu0
      %4394 = vmatprep.mubr.bf16.mxu0 %v3276
      %4395 = vmatmul.mubr.bf16.gmra.mrb[0].mxu0 %v3212
      %v4396 = vpop.f32.mrb[0].mxu0
      %v4397 = vadd.f32 %v4236, %v4396
      %v4398 = vpop.f32.mrb[0].mxu0
      %v4399 = vpop.f32.mrb[0].mxu0
      %v4400 = vadd.f32 %v4239, %v4399
      %v4401 = vpop.f32.mrb[0].mxu0
      %4402 = vmatprep.mubr.bf16.mxu0 %v3317
      %4403 = vmatmul.mubr.bf16.gmra.mrb[0].mxu0 %v3313
      %v4404 = vpop.f32.mrb[0].mxu0
      %v4405 = vadd.f32 %v4244, %v4404
      %v4406 = vpop.f32.mrb[0].mxu0
      %v4407 = vpop.f32.mrb[0].mxu0
      %v4408 = vadd.f32 %v4247, %v4407
      %v4409 = vpop.f32.mrb[0].mxu0
      %4410 = vdwg.mxu0
      %4411 = vmatprep.subr.bf16.mxu0 0
      %4412 = vmatpush1.bf16.msra.mxu0 %v3832
      %4413 = vmatprep.subr.bf16.mxu0 0
      %4414 = vmatpush1.bf16.msra.mxu0 %v3833
      %4415 = vmatprep.subr.bf16.mxu0 0
      %4416 = vmatpush1.bf16.msra.mxu0 %v3834
      %4417 = vmatprep.subr.bf16.mxu0 0
      %4418 = vmatpush1.bf16.msra.mxu0 %v3835
      %4419 = vmatprep.subr.bf16.mxu0 0
      %4420 = vmatpush1.bf16.msra.mxu0 %v3836
      %4421 = vmatprep.subr.bf16.mxu0 0
      %4422 = vmatpush1.bf16.msra.mxu0 %v3837
      %4423 = vmatprep.subr.bf16.mxu0 0
      %4424 = vmatpush1.bf16.msra.mxu0 %v3838
      %4425 = vmatprep.subr.bf16.mxu0 0
      %4426 = vmatpush1.bf16.msra.mxu0 %v3839
      %4427 = vmatprep.subr.bf16.mxu0 0
      %4428 = vmatpush1.bf16.msra.mxu0 %v3840
      %4429 = vmatprep.subr.bf16.mxu0 0
      %4430 = vmatpush1.bf16.msra.mxu0 %v3841
      %4431 = vmatprep.subr.bf16.mxu0 0
      %4432 = vmatpush1.bf16.msra.mxu0 %v3842
      %4433 = vmatprep.subr.bf16.mxu0 0
      %4434 = vmatpush1.bf16.msra.mxu0 %v3843
      %4435 = vmatprep.subr.bf16.mxu0 0
      %4436 = vmatpush1.bf16.msra.mxu0 %v3844
      %4437 = vmatprep.subr.bf16.mxu0 0
      %4438 = vmatpush1.bf16.msra.mxu0 %v3845
      %4439 = vmatprep.subr.bf16.mxu0 0
      %4440 = vmatpush1.bf16.msra.mxu0 %v3846
      %4441 = vmatprep.subr.bf16.mxu0 0
      %4442 = vmatpush1.bf16.msra.mxu0 %v3847
      %4443 = vmatprep.mubr.bf16.mxu0 %v3056
      %4444 = vmatmul.mubr.bf16.gmra.mrb[0].mxu0 %v2943
      %v4445 = vpop.f32.mrb[0].mxu0
      %v4446 = vadd.f32 %v4285, %v4445
      %v4447 = vpop.f32.mrb[0].mxu0
      %v4448 = vpop.f32.mrb[0].mxu0
      %v4449 = vadd.f32 %v4288, %v4448
      %v4450 = vpop.f32.mrb[0].mxu0
      %4451 = vmatprep.mubr.bf16.mxu0 %v3068
      %4452 = vmatmul.mubr.bf16.gmra.mrb[0].mxu0 %v2944
      %v4453 = vpop.f32.mrb[0].mxu0
      %v4454 = vadd.f32 %v4293, %v4453
      %v4455 = vpop.f32.mrb[0].mxu0
      %v4456 = vpop.f32.mrb[0].mxu0
      %v4457 = vadd.f32 %v4296, %v4456
      %v4458 = vpop.f32.mrb[0].mxu0
      %4459 = vmatprep.mubr.bf16.mxu0 %v3080
      %4460 = vmatmul.mubr.bf16.gmra.mrb[0].mxu0 %v2945
      %v4461 = vpop.f32.mrb[0].mxu0
      %v4462 = vadd.f32 %v4301, %v4461
      %v4463 = vpop.f32.mrb[0].mxu0
      %v4464 = vpop.f32.mrb[0].mxu0
      %v4465 = vadd.f32 %v4304, %v4464
      %v4466 = vpop.f32.mrb[0].mxu0
      %4467 = vmatprep.mubr.bf16.mxu0 %v3092
      %4468 = vmatmul.mubr.bf16.gmra.mrb[0].mxu0 %v2946
      %v4469 = vpop.f32.mrb[0].mxu0
      %v4470 = vadd.f32 %v4309, %v4469
      %v4471 = vpop.f32.mrb[0].mxu0
      %v4472 = vpop.f32.mrb[0].mxu0
      %v4473 = vadd.f32 %v4312, %v4472
      %v4474 = vpop.f32.mrb[0].mxu0
      %4475 = vmatprep.mubr.bf16.mxu0 %v3104
      %4476 = vmatmul.mubr.bf16.gmra.mrb[0].mxu0 %v2947
      %v4477 = vpop.f32.mrb[0].mxu0
      %v4478 = vadd.f32 %v4317, %v4477
      %v4479 = vpop.f32.mrb[0].mxu0
      %v4480 = vpop.f32.mrb[0].mxu0
      %v4481 = vadd.f32 %v4320, %v4480
      %v4482 = vpop.f32.mrb[0].mxu0
      %4483 = vmatprep.mubr.bf16.mxu0 %v3116
      %4484 = vmatmul.mubr.bf16.gmra.mrb[0].mxu0 %v2948
      %v4485 = vpop.f32.mrb[0].mxu0
      %v4486 = vadd.f32 %v4325, %v4485
      %v4487 = vpop.f32.mrb[0].mxu0
      %v4488 = vpop.f32.mrb[0].mxu0
      %v4489 = vadd.f32 %v4328, %v4488
      %v4490 = vpop.f32.mrb[0].mxu0
      %4491 = vmatprep.mubr.bf16.mxu0 %v3128
      %4492 = vmatmul.mubr.bf16.gmra.mrb[0].mxu0 %v2949
      %v4493 = vpop.f32.mrb[0].mxu0
      %v4494 = vadd.f32 %v4333, %v4493
      %v4495 = vpop.f32.mrb[0].mxu0
      %v4496 = vpop.f32.mrb[0].mxu0
      %v4497 = vadd.f32 %v4336, %v4496
      %v4498 = vpop.f32.mrb[0].mxu0
      %4499 = vmatprep.mubr.bf16.mxu0 %v3140
      %4500 = vmatmul.mubr.bf16.gmra.mrb[0].mxu0 %v2950
      %v4501 = vpop.f32.mrb[0].mxu0
      %v4502 = vadd.f32 %v4341, %v4501
      %v4503 = vpop.f32.mrb[0].mxu0
      %v4504 = vpop.f32.mrb[0].mxu0
      %v4505 = vadd.f32 %v4344, %v4504
      %v4506 = vpop.f32.mrb[0].mxu0
      %4507 = vmatprep.mubr.bf16.mxu0 %v3152
      %4508 = vmatmul.mubr.bf16.gmra.mrb[0].mxu0 %v2951
      %v4509 = vpop.f32.mrb[0].mxu0
      %v4510 = vadd.f32 %v4349, %v4509
      %v4511 = vpop.f32.mrb[0].mxu0
      %v4512 = vpop.f32.mrb[0].mxu0
      %v4513 = vadd.f32 %v4352, %v4512
      %v4514 = vpop.f32.mrb[0].mxu0
      %4515 = vmatprep.mubr.bf16.mxu0 %v3164
      %4516 = vmatmul.mubr.bf16.gmra.mrb[0].mxu0 %v2952
      %v4517 = vpop.f32.mrb[0].mxu0
      %v4518 = vadd.f32 %v4357, %v4517
      %v4519 = vpop.f32.mrb[0].mxu0
      %v4520 = vpop.f32.mrb[0].mxu0
      %v4521 = vadd.f32 %v4360, %v4520
      %v4522 = vpop.f32.mrb[0].mxu0
      %4523 = vmatprep.mubr.bf16.mxu0 %v3176
      %4524 = vmatmul.mubr.bf16.gmra.mrb[0].mxu0 %v2953
      %v4525 = vpop.f32.mrb[0].mxu0
      %v4526 = vadd.f32 %v4365, %v4525
      %v4527 = vpop.f32.mrb[0].mxu0
      %v4528 = vpop.f32.mrb[0].mxu0
      %v4529 = vadd.f32 %v4368, %v4528
      %v4530 = vpop.f32.mrb[0].mxu0
      %4531 = vmatprep.mubr.bf16.mxu0 %v3188
      %4532 = vmatmul.mubr.bf16.gmra.mrb[0].mxu0 %v2954
      %v4533 = vpop.f32.mrb[0].mxu0
      %v4534 = vadd.f32 %v4373, %v4533
      %v4535 = vpop.f32.mrb[0].mxu0
      %v4536 = vpop.f32.mrb[0].mxu0
      %v4537 = vadd.f32 %v4376, %v4536
      %v4538 = vpop.f32.mrb[0].mxu0
      %4539 = vmatprep.mubr.bf16.mxu0 %v3200
      %4540 = vmatmul.mubr.bf16.gmra.mrb[0].mxu0 %v2955
      %v4541 = vpop.f32.mrb[0].mxu0
      %v4542 = vadd.f32 %v4381, %v4541
      %v4543 = vpop.f32.mrb[0].mxu0
      %v4544 = vpop.f32.mrb[0].mxu0
      %v4545 = vadd.f32 %v4384, %v4544
      %v4546 = vpop.f32.mrb[0].mxu0
      %4547 = vmatprep.mubr.bf16.mxu0 %v3212
      %4548 = vmatmul.mubr.bf16.gmra.mrb[0].mxu0 %v2956
      %v4549 = vpop.f32.mrb[0].mxu0
      %v4550 = vadd.f32 %v4389, %v4549
      %v4551 = vpop.f32.mrb[0].mxu0
      %v4552 = vpop.f32.mrb[0].mxu0
      %v4553 = vadd.f32 %v4392, %v4552
      %v4554 = vpop.f32.mrb[0].mxu0
      %4555 = vmatprep.mubr.bf16.mxu0 %v3313
      %4556 = vmatmul.mubr.bf16.gmra.mrb[0].mxu0 %v3297
      %v4557 = vpop.f32.mrb[0].mxu0
      %v4558 = vadd.f32 %v4397, %v4557
      %v4559 = vpop.f32.mrb[0].mxu0
      %v4560 = vpop.f32.mrb[0].mxu0
      %v4561 = vadd.f32 %v4400, %v4560
      %v4562 = vpop.f32.mrb[0].mxu0
      %4563 = vmatprep.mubr.bf16.mxu0 %v3339
      %4564 = vmatmul.mubr.bf16.gmra.mrb[0].mxu0 %v3323
      %v4565 = vpop.f32.mrb[0].mxu0
      %v4566 = vadd.f32 %v4405, %v4565
      %v4567 = vpop.f32.mrb[0].mxu0
      %v4568 = vpop.f32.mrb[0].mxu0
      %v4569 = vadd.f32 %v4408, %v4568
      %v4570 = vpop.f32.mrb[0].mxu0
      %4571 = vdwg.mxu0
      %4572 = vmatprep.subr.bf16.mxu0 0
      %4573 = vmatpush1.bf16.msra.mxu0 %v3848
      %4574 = vmatprep.subr.bf16.mxu0 0
      %4575 = vmatpush1.bf16.msra.mxu0 %v3849
      %4576 = vmatprep.subr.bf16.mxu0 0
      %4577 = vmatpush1.bf16.msra.mxu0 %v3850
      %4578 = vmatprep.subr.bf16.mxu0 0
      %4579 = vmatpush1.bf16.msra.mxu0 %v3851
      %4580 = vmatprep.subr.bf16.mxu0 0
      %4581 = vmatpush1.bf16.msra.mxu0 %v3852
      %4582 = vmatprep.subr.bf16.mxu0 0
      %4583 = vmatpush1.bf16.msra.mxu0 %v3853
      %4584 = vmatprep.subr.bf16.mxu0 0
      %4585 = vmatpush1.bf16.msra.mxu0 %v3854
      %4586 = vmatprep.subr.bf16.mxu0 0
      %4587 = vmatpush1.bf16.msra.mxu0 %v3855
      %4588 = vmatprep.subr.bf16.mxu0 0
      %4589 = vmatpush1.bf16.msra.mxu0 0
      %4590 = vmatprep.subr.bf16.mxu0 0
      %4591 = vmatpush1.bf16.msra.mxu0 0
      %4592 = vmatprep.subr.bf16.mxu0 0
      %4593 = vmatpush1.bf16.msra.mxu0 0
      %4594 = vmatprep.subr.bf16.mxu0 0
      %4595 = vmatpush1.bf16.msra.mxu0 0
      %4596 = vmatprep.subr.bf16.mxu0 0
      %4597 = vmatpush1.bf16.msra.mxu0 0
      %4598 = vmatprep.subr.bf16.mxu0 0
      %4599 = vmatpush1.bf16.msra.mxu0 0
      %4600 = vmatprep.subr.bf16.mxu0 0
      %4601 = vmatpush1.bf16.msra.mxu0 0
      %4602 = vmatprep.subr.bf16.mxu0 0
      %4603 = vmatpush1.bf16.msra.mxu0 0
      %4604 = vmatprep.mubr.bf16.mxu0 0
      %4605 = vmatmul.mubr.bf16.gmra.mrb[0].mxu0 %v3237
      %v4606 = vpop.f32.mrb[0].mxu0
      %v4607 = vadd.f32 %v4446, %v4606
      %v4608 = vpop.f32.mrb[0].mxu0
      %v4609 = vpop.f32.mrb[0].mxu0
      %v4610 = vadd.f32 %v4449, %v4609
      %v4611 = vpop.f32.mrb[0].mxu0
      %4612 = vmatprep.mubr.bf16.mxu0 0
      %4613 = vmatmul.mubr.bf16.gmra.mrb[0].mxu0 %v3240
      %v4614 = vpop.f32.mrb[0].mxu0
      %v4615 = vadd.f32 %v4454, %v4614
      %v4616 = vpop.f32.mrb[0].mxu0
      %v4617 = vpop.f32.mrb[0].mxu0
      %v4618 = vadd.f32 %v4457, %v4617
      %v4619 = vpop.f32.mrb[0].mxu0
      %4620 = vmatprep.mubr.bf16.mxu0 0
      %4621 = vmatmul.mubr.bf16.gmra.mrb[0].mxu0 %v3243
      %v4622 = vpop.f32.mrb[0].mxu0
      %v4623 = vadd.f32 %v4462, %v4622
      %v4624 = vpop.f32.mrb[0].mxu0
      %v4625 = vpop.f32.mrb[0].mxu0
      %v4626 = vadd.f32 %v4465, %v4625
      %v4627 = vpop.f32.mrb[0].mxu0
      %4628 = vmatprep.mubr.bf16.mxu0 0
      %4629 = vmatmul.mubr.bf16.gmra.mrb[0].mxu0 %v3246
      %v4630 = vpop.f32.mrb[0].mxu0
      %v4631 = vadd.f32 %v4470, %v4630
      %v4632 = vpop.f32.mrb[0].mxu0
      %v4633 = vpop.f32.mrb[0].mxu0
      %v4634 = vadd.f32 %v4473, %v4633
      %v4635 = vpop.f32.mrb[0].mxu0
      %4636 = vmatprep.mubr.bf16.mxu0 0
      %4637 = vmatmul.mubr.bf16.gmra.mrb[0].mxu0 %v3249
      %v4638 = vpop.f32.mrb[0].mxu0
      %v4639 = vadd.f32 %v4478, %v4638
      %v4640 = vpop.f32.mrb[0].mxu0
      %v4641 = vpop.f32.mrb[0].mxu0
      %v4642 = vadd.f32 %v4481, %v4641
      %v4643 = vpop.f32.mrb[0].mxu0
      %4644 = vmatprep.mubr.bf16.mxu0 0
      %4645 = vmatmul.mubr.bf16.gmra.mrb[0].mxu0 %v3252
      %v4646 = vpop.f32.mrb[0].mxu0
      %v4647 = vadd.f32 %v4486, %v4646
      %v4648 = vpop.f32.mrb[0].mxu0
      %v4649 = vpop.f32.mrb[0].mxu0
      %v4650 = vadd.f32 %v4489, %v4649
      %v4651 = vpop.f32.mrb[0].mxu0
      %4652 = vmatprep.mubr.bf16.mxu0 0
      %4653 = vmatmul.mubr.bf16.gmra.mrb[0].mxu0 %v3255
      %v4654 = vpop.f32.mrb[0].mxu0
      %v4655 = vadd.f32 %v4494, %v4654
      %v4656 = vpop.f32.mrb[0].mxu0
      %v4657 = vpop.f32.mrb[0].mxu0
      %v4658 = vadd.f32 %v4497, %v4657
      %v4659 = vpop.f32.mrb[0].mxu0
      %4660 = vmatprep.mubr.bf16.mxu0 0
      %4661 = vmatmul.mubr.bf16.gmra.mrb[0].mxu0 %v3258
      %v4662 = vpop.f32.mrb[0].mxu0
      %v4663 = vadd.f32 %v4502, %v4662
      %v4664 = vpop.f32.mrb[0].mxu0
      %v4665 = vpop.f32.mrb[0].mxu0
      %v4666 = vadd.f32 %v4505, %v4665
      %v4667 = vpop.f32.mrb[0].mxu0
      %4668 = vmatprep.mubr.bf16.mxu0 0
      %4669 = vmatmul.mubr.bf16.gmra.mrb[0].mxu0 %v3261
      %v4670 = vpop.f32.mrb[0].mxu0
      %v4671 = vadd.f32 %v4510, %v4670
      %v4672 = vpop.f32.mrb[0].mxu0
      %v4673 = vpop.f32.mrb[0].mxu0
      %v4674 = vadd.f32 %v4513, %v4673
      %v4675 = vpop.f32.mrb[0].mxu0
      %4676 = vmatprep.mubr.bf16.mxu0 0
      %4677 = vmatmul.mubr.bf16.gmra.mrb[0].mxu0 %v3264
      %v4678 = vpop.f32.mrb[0].mxu0
      %v4679 = vadd.f32 %v4518, %v4678
      %v4680 = vpop.f32.mrb[0].mxu0
      %v4681 = vpop.f32.mrb[0].mxu0
      %v4682 = vadd.f32 %v4521, %v4681
      %v4683 = vpop.f32.mrb[0].mxu0
      %4684 = vmatprep.mubr.bf16.mxu0 0
      %4685 = vmatmul.mubr.bf16.gmra.mrb[0].mxu0 %v3267
      %v4686 = vpop.f32.mrb[0].mxu0
      %v4687 = vadd.f32 %v4526, %v4686
      %v4688 = vpop.f32.mrb[0].mxu0
      %v4689 = vpop.f32.mrb[0].mxu0
      %v4690 = vadd.f32 %v4529, %v4689
      %v4691 = vpop.f32.mrb[0].mxu0
      %4692 = vmatprep.mubr.bf16.mxu0 0
      %4693 = vmatmul.mubr.bf16.gmra.mrb[0].mxu0 %v3270
      %v4694 = vpop.f32.mrb[0].mxu0
      %v4695 = vadd.f32 %v4534, %v4694
      %v4696 = vpop.f32.mrb[0].mxu0
      %v4697 = vpop.f32.mrb[0].mxu0
      %v4698 = vadd.f32 %v4537, %v4697
      %v4699 = vpop.f32.mrb[0].mxu0
      %4700 = vmatprep.mubr.bf16.mxu0 0
      %4701 = vmatmul.mubr.bf16.gmra.mrb[0].mxu0 %v3273
      %v4702 = vpop.f32.mrb[0].mxu0
      %v4703 = vadd.f32 %v4542, %v4702
      %v4704 = vpop.f32.mrb[0].mxu0
      %v4705 = vpop.f32.mrb[0].mxu0
      %v4706 = vadd.f32 %v4545, %v4705
      %v4707 = vpop.f32.mrb[0].mxu0
      %4708 = vmatprep.mubr.bf16.mxu0 0
      %4709 = vmatmul.mubr.bf16.gmra.mrb[0].mxu0 %v3276
      %v4710 = vpop.f32.mrb[0].mxu0
      %v4711 = vadd.f32 %v4550, %v4710
      %v4712 = vpop.f32.mrb[0].mxu0
      %v4713 = vpop.f32.mrb[0].mxu0
      %v4714 = vadd.f32 %v4553, %v4713
      %v4715 = vpop.f32.mrb[0].mxu0
      %4716 = vmatprep.mubr.bf16.mxu0 0
      %4717 = vmatmul.mubr.bf16.gmra.mrb[0].mxu0 %v3317
      %v4718 = vpop.f32.mrb[0].mxu0
      %v4719 = vadd.f32 %v4558, %v4718
      %v4720 = vpop.f32.mrb[0].mxu0
      %v4721 = vpop.f32.mrb[0].mxu0
      %v4722 = vadd.f32 %v4561, %v4721
      %v4723 = vpop.f32.mrb[0].mxu0
      %4724 = vmatprep.mubr.bf16.mxu0 0
      %4725 = vmatmul.mubr.bf16.gmra.mrb[0].mxu0 %v3343
      %v4726 = vpop.f32.mrb[0].mxu0
      %v4727 = vadd.f32 %v4566, %v4726
      %v4728 = vpop.f32.mrb[0].mxu0
      %v4729 = vpop.f32.mrb[0].mxu0
      %v4730 = vadd.f32 %v4569, %v4729
      %v4731 = vpop.f32.mrb[0].mxu0
      %4732 = vdwg.mxu0
      %vm4733 = vsmask.f32 3328
      %vm4734 = vsmask.f32 7440
      %vm4735 = vmor %vm4733, %vm4734
      %v4737 = vshrl.u32 %v229, 16
      %v4739 = vrot.slane %v4737, 4
      %v4740 = vshll.u32 %v229, 16
      %v4742 = vrot.slane %v4740, 5
      %v4743 = vor.u32 %v4739, %v4742
      %v4744 = vrot.slane %v4743, 4
      %v4746 = vshll.u32 %v230, 16
      %v4748 = vrot.slane %v4746, 5
      %v4749 = vsel %vm4735, %v4744, %v4748
      %v4750 = vshrl.u32 %v230, 16
      %v4752 = vrot.slane %v4750, 4
      %v4753 = vor.u32 %v4752, %v4748
      %v4754 = vrot.slane %v4753, 4
      %v4756 = vshll.u32 %v231, 16
      %v4758 = vrot.slane %v4756, 5
      %v4759 = vsel %vm4735, %v4754, %v4758
      %v4761 = vshrl.u32 %v232, 16
      %v4763 = vrot.slane %v4761, 4
      %v4764 = vshll.u32 %v232, 16
      %v4766 = vrot.slane %v4764, 5
      %v4767 = vor.u32 %v4763, %v4766
      %v4768 = vrot.slane %v4767, 4
      %v4770 = vshll.u32 %v233, 16
      %v4772 = vrot.slane %v4770, 5
      %v4773 = vsel %vm4735, %v4768, %v4772
      %v4774 = vshrl.u32 %v233, 16
      %v4776 = vrot.slane %v4774, 4
      %v4777 = vor.u32 %v4776, %v4772
      %v4778 = vrot.slane %v4777, 4
      %v4780 = vshll.u32 %v234, 16
      %v4782 = vrot.slane %v4780, 5
      %v4783 = vsel %vm4735, %v4778, %v4782
      %v4785 = vshrl.u32 %v235, 16
      %v4787 = vrot.slane %v4785, 4
      %v4788 = vshll.u32 %v235, 16
      %v4790 = vrot.slane %v4788, 5
      %v4791 = vor.u32 %v4787, %v4790
      %v4792 = vrot.slane %v4791, 4
      %v4794 = vshll.u32 %v236, 16
      %v4796 = vrot.slane %v4794, 5
      %v4797 = vsel %vm4735, %v4792, %v4796
      %v4798 = vshrl.u32 %v236, 16
      %v4800 = vrot.slane %v4798, 4
      %v4801 = vor.u32 %v4800, %v4796
      %v4802 = vrot.slane %v4801, 4
      %v4804 = vshll.u32 %v237, 16
      %v4806 = vrot.slane %v4804, 5
      %v4807 = vsel %vm4735, %v4802, %v4806
      %v4809 = vshrl.u32 %v238, 16
      %v4811 = vrot.slane %v4809, 4
      %v4812 = vshll.u32 %v238, 16
      %v4814 = vrot.slane %v4812, 5
      %v4815 = vor.u32 %v4811, %v4814
      %v4816 = vrot.slane %v4815, 4
      %v4818 = vshll.u32 %v239, 16
      %v4820 = vrot.slane %v4818, 5
      %v4821 = vsel %vm4735, %v4816, %v4820
      %v4822 = vshrl.u32 %v239, 16
      %v4824 = vrot.slane %v4822, 4
      %v4825 = vor.u32 %v4824, %v4820
      %v4826 = vrot.slane %v4825, 4
      %v4828 = vshll.u32 %v240, 16
      %v4830 = vrot.slane %v4828, 5
      %v4831 = vsel %vm4735, %v4826, %v4830
      %v4833 = vshrl.u32 %v241, 16
      %v4835 = vrot.slane %v4833, 4
      %v4836 = vshll.u32 %v241, 16
      %v4838 = vrot.slane %v4836, 5
      %v4839 = vor.u32 %v4835, %v4838
      %v4840 = vrot.slane %v4839, 4
      %v4842 = vshll.u32 %v242, 16
      %v4844 = vrot.slane %v4842, 5
      %v4845 = vsel %vm4735, %v4840, %v4844
      %v4846 = vshrl.u32 %v242, 16
      %v4848 = vrot.slane %v4846, 4
      %v4849 = vor.u32 %v4848, %v4844
      %v4850 = vrot.slane %v4849, 4
      %v4852 = vshll.u32 %v243, 16
      %v4854 = vrot.slane %v4852, 5
      %v4855 = vsel %vm4735, %v4850, %v4854
      %v4857 = vshrl.u32 %v244, 16
      %v4859 = vrot.slane %v4857, 4
      %v4860 = vshll.u32 %v244, 16
      %v4862 = vrot.slane %v4860, 5
      %v4863 = vor.u32 %v4859, %v4862
      %v4864 = vrot.slane %v4863, 4
      %v4866 = vshll.u32 %v245, 16
      %v4868 = vrot.slane %v4866, 5
      %v4869 = vsel %vm4735, %v4864, %v4868
      %v4870 = vshrl.u32 %v245, 16
      %v4872 = vrot.slane %v4870, 4
      %v4873 = vor.u32 %v4872, %v4868
      %v4874 = vrot.slane %v4873, 4
      %v4876 = vshll.u32 %v246, 16
      %v4878 = vrot.slane %v4876, 5
      %v4879 = vsel %vm4735, %v4874, %v4878
      %v4881 = vshrl.u32 %v247, 16
      %v4883 = vrot.slane %v4881, 4
      %v4884 = vshll.u32 %v247, 16
      %v4886 = vrot.slane %v4884, 5
      %v4887 = vor.u32 %v4883, %v4886
      %v4888 = vrot.slane %v4887, 4
      %v4890 = vshll.u32 %v248, 16
      %v4892 = vrot.slane %v4890, 5
      %v4893 = vsel %vm4735, %v4888, %v4892
      %v4894 = vshrl.u32 %v248, 16
      %v4896 = vrot.slane %v4894, 4
      %v4897 = vor.u32 %v4896, %v4892
      %v4898 = vrot.slane %v4897, 4
      %v4900 = vshll.u32 %v249, 16
      %v4902 = vrot.slane %v4900, 5
      %v4903 = vsel %vm4735, %v4898, %v4902
      %v4905 = vshrl.u32 %v250, 16
      %v4907 = vrot.slane %v4905, 4
      %v4908 = vshll.u32 %v250, 16
      %v4910 = vrot.slane %v4908, 5
      %v4911 = vor.u32 %v4907, %v4910
      %v4912 = vrot.slane %v4911, 4
      %v4914 = vshll.u32 %v251, 16
      %v4916 = vrot.slane %v4914, 5
      %v4917 = vsel %vm4735, %v4912, %v4916
      %v4918 = vshrl.u32 %v251, 16
      %v4920 = vrot.slane %v4918, 4
      %v4921 = vor.u32 %v4920, %v4916
      %v4922 = vrot.slane %v4921, 4
      %v4924 = vshll.u32 %v252, 16
      %v4926 = vrot.slane %v4924, 5
      %v4927 = vsel %vm4735, %v4922, %v4926
      %v4929 = vshrl.u32 %v253, 16
      %v4931 = vrot.slane %v4929, 4
      %v4932 = vshll.u32 %v253, 16
      %v4934 = vrot.slane %v4932, 5
      %v4935 = vor.u32 %v4931, %v4934
      %v4936 = vrot.slane %v4935, 4
      %v4938 = vshll.u32 %v254, 16
      %v4940 = vrot.slane %v4938, 5
      %v4941 = vsel %vm4735, %v4936, %v4940
      %v4942 = vshrl.u32 %v254, 16
      %v4944 = vrot.slane %v4942, 4
      %v4945 = vor.u32 %v4944, %v4940
      %v4946 = vrot.slane %v4945, 4
      %v4948 = vshll.u32 %v255, 16
      %v4950 = vrot.slane %v4948, 5
      %v4951 = vsel %vm4735, %v4946, %v4950
      %v4953 = vshrl.u32 %v256, 16
      %v4955 = vrot.slane %v4953, 4
      %v4956 = vshll.u32 %v256, 16
      %v4958 = vrot.slane %v4956, 5
      %v4959 = vor.u32 %v4955, %v4958
      %v4960 = vrot.slane %v4959, 4
      %v4962 = vshll.u32 %v257, 16
      %v4964 = vrot.slane %v4962, 5
      %v4965 = vsel %vm4735, %v4960, %v4964
      %v4966 = vshrl.u32 %v257, 16
      %v4968 = vrot.slane %v4966, 4
      %v4969 = vor.u32 %v4968, %v4964
      %v4970 = vrot.slane %v4969, 4
      %v4972 = vshll.u32 %v258, 16
      %v4974 = vrot.slane %v4972, 5
      %v4975 = vsel %vm4735, %v4970, %v4974
      %v4977 = vshrl.u32 %v259, 16
      %v4979 = vrot.slane %v4977, 4
      %v4980 = vshll.u32 %v259, 16
      %v4982 = vrot.slane %v4980, 5
      %v4983 = vor.u32 %v4979, %v4982
      %v4984 = vrot.slane %v4983, 4
      %v4986 = vshll.u32 %v260, 16
      %v4988 = vrot.slane %v4986, 5
      %v4989 = vsel %vm4735, %v4984, %v4988
      %v4990 = vshrl.u32 %v260, 16
      %v4992 = vrot.slane %v4990, 4
      %v4993 = vor.u32 %v4992, %v4988
      %v4994 = vrot.slane %v4993, 4
      %v4996 = vshll.u32 %v261, 16
      %v4998 = vrot.slane %v4996, 5
      %v4999 = vsel %vm4735, %v4994, %v4998
      %v5001 = vshrl.u32 %v262, 16
      %v5003 = vrot.slane %v5001, 4
      %v5004 = vshll.u32 %v262, 16
      %v5006 = vrot.slane %v5004, 5
      %v5007 = vor.u32 %v5003, %v5006
      %v5008 = vrot.slane %v5007, 4
      %v5010 = vshll.u32 %v263, 16
      %v5012 = vrot.slane %v5010, 5
      %v5013 = vsel %vm4735, %v5008, %v5012
      %v5014 = vshrl.u32 %v263, 16
      %v5016 = vrot.slane %v5014, 4
      %v5017 = vor.u32 %v5016, %v5012
      %v5018 = vrot.slane %v5017, 4
      %v5020 = vshll.u32 %v264, 16
      %v5022 = vrot.slane %v5020, 5
      %v5023 = vsel %vm4735, %v5018, %v5022
      %v5025 = vshrl.u32 %v265, 16
      %v5027 = vrot.slane %v5025, 4
      %v5028 = vshll.u32 %v265, 16
      %v5030 = vrot.slane %v5028, 5
      %v5031 = vor.u32 %v5027, %v5030
      %v5032 = vrot.slane %v5031, 4
      %v5034 = vshll.u32 %v266, 16
      %v5036 = vrot.slane %v5034, 5
      %v5037 = vsel %vm4735, %v5032, %v5036
      %v5038 = vshrl.u32 %v266, 16
      %v5040 = vrot.slane %v5038, 4
      %v5041 = vor.u32 %v5040, %v5036
      %v5042 = vrot.slane %v5041, 4
      %v5044 = vshll.u32 %v267, 16
      %v5046 = vrot.slane %v5044, 5
      %v5047 = vsel %vm4735, %v5042, %v5046
      %v5049 = vshrl.u32 %v268, 16
      %v5051 = vrot.slane %v5049, 4
      %v5052 = vshll.u32 %v268, 16
      %v5054 = vrot.slane %v5052, 5
      %v5055 = vor.u32 %v5051, %v5054
      %v5056 = vrot.slane %v5055, 4
      %v5058 = vshll.u32 %v269, 16
      %v5060 = vrot.slane %v5058, 5
      %v5061 = vsel %vm4735, %v5056, %v5060
      %v5062 = vshrl.u32 %v269, 16
      %v5064 = vrot.slane %v5062, 4
      %v5065 = vor.u32 %v5064, %v5060
      %v5066 = vrot.slane %v5065, 4
      %v5068 = vshll.u32 %v270, 16
      %v5070 = vrot.slane %v5068, 5
      %v5071 = vsel %vm4735, %v5066, %v5070
      %v5073 = vshrl.u32 %v271, 16
      %v5075 = vrot.slane %v5073, 4
      %v5076 = vshll.u32 %v271, 16
      %v5078 = vrot.slane %v5076, 5
      %v5079 = vor.u32 %v5075, %v5078
      %v5080 = vrot.slane %v5079, 4
      %v5082 = vshll.u32 %v272, 16
      %v5084 = vrot.slane %v5082, 5
      %v5085 = vsel %vm4735, %v5080, %v5084
      %v5086 = vshrl.u32 %v272, 16
      %v5088 = vrot.slane %v5086, 4
      %v5089 = vor.u32 %v5088, %v5084
      %v5090 = vrot.slane %v5089, 4
      %v5092 = vshll.u32 %v273, 16
      %v5094 = vrot.slane %v5092, 5
      %v5095 = vsel %vm4735, %v5090, %v5094
      %v5097 = vshrl.u32 %v274, 16
      %v5099 = vrot.slane %v5097, 4
      %v5100 = vshll.u32 %v274, 16
      %v5102 = vrot.slane %v5100, 5
      %v5103 = vor.u32 %v5099, %v5102
      %v5104 = vrot.slane %v5103, 4
      %v5106 = vshll.u32 %v275, 16
      %v5108 = vrot.slane %v5106, 5
      %v5109 = vsel %vm4735, %v5104, %v5108
      %v5110 = vshrl.u32 %v275, 16
      %v5112 = vrot.slane %v5110, 4
      %v5113 = vor.u32 %v5112, %v5108
      %v5114 = vrot.slane %v5113, 4
      %v5116 = vshll.u32 %v276, 16
      %v5118 = vrot.slane %v5116, 5
      %v5119 = vsel %vm4735, %v5114, %v5118
      %v5152 = vunpack.c.l.bf16 %v4749
      %v5153 = vunpack.c.l.bf16 %v4759
      %v5154 = vunpack.c.l.bf16 %v4773
      %v5155 = vunpack.c.l.bf16 %v4783
      %v5156 = vunpack.c.l.bf16 %v4797
      %v5157 = vunpack.c.l.bf16 %v4807
      %v5158 = vunpack.c.l.bf16 %v4821
      %v5159 = vunpack.c.l.bf16 %v4831
      %v5160 = vunpack.c.l.bf16 %v4845
      %v5161 = vunpack.c.l.bf16 %v4855
      %v5162 = vunpack.c.l.bf16 %v4869
      %v5163 = vunpack.c.l.bf16 %v4879
      %v5164 = vunpack.c.l.bf16 %v4893
      %v5165 = vunpack.c.l.bf16 %v4903
      %v5166 = vunpack.c.l.bf16 %v4917
      %v5167 = vunpack.c.l.bf16 %v4927
      %v5168 = vunpack.c.l.bf16 %v4941
      %v5169 = vunpack.c.l.bf16 %v4951
      %v5170 = vunpack.c.l.bf16 %v4965
      %v5171 = vunpack.c.l.bf16 %v4975
      %v5172 = vunpack.c.l.bf16 %v4989
      %v5173 = vunpack.c.l.bf16 %v4999
      %v5174 = vunpack.c.l.bf16 %v5013
      %v5175 = vunpack.c.l.bf16 %v5023
      %v5176 = vunpack.c.l.bf16 %v5037
      %v5177 = vunpack.c.l.bf16 %v5047
      %v5178 = vunpack.c.l.bf16 %v5061
      %v5179 = vunpack.c.l.bf16 %v5071
      %v5180 = vunpack.c.l.bf16 %v5085
      %v5181 = vunpack.c.l.bf16 %v5095
      %v5182 = vunpack.c.l.bf16 %v5109
      %v5183 = vunpack.c.l.bf16 %v5119
      %v5184 = vadd.f32 %v4607, %v5152
      %v5185 = vadd.f32 %v4610, %v5153
      %v5186 = vadd.f32 %v4615, %v5154
      %v5187 = vadd.f32 %v4618, %v5155
      %v5188 = vadd.f32 %v4623, %v5156
      %v5189 = vadd.f32 %v4626, %v5157
      %v5190 = vadd.f32 %v4631, %v5158
      %v5191 = vadd.f32 %v4634, %v5159
      %v5192 = vadd.f32 %v4639, %v5160
      %v5193 = vadd.f32 %v4642, %v5161
      %v5194 = vadd.f32 %v4647, %v5162
      %v5195 = vadd.f32 %v4650, %v5163
      %v5196 = vadd.f32 %v4655, %v5164
      %v5197 = vadd.f32 %v4658, %v5165
      %v5198 = vadd.f32 %v4663, %v5166
      %v5199 = vadd.f32 %v4666, %v5167
      %v5200 = vadd.f32 %v4671, %v5168
      %v5201 = vadd.f32 %v4674, %v5169
      %v5202 = vadd.f32 %v4679, %v5170
      %v5203 = vadd.f32 %v4682, %v5171
      %v5204 = vadd.f32 %v4687, %v5172
      %v5205 = vadd.f32 %v4690, %v5173
      %v5206 = vadd.f32 %v4695, %v5174
      %v5207 = vadd.f32 %v4698, %v5175
      %v5208 = vadd.f32 %v4703, %v5176
      %v5209 = vadd.f32 %v4706, %v5177
      %v5210 = vadd.f32 %v4711, %v5178
      %v5211 = vadd.f32 %v4714, %v5179
      %v5212 = vadd.f32 %v4719, %v5180
      %v5213 = vadd.f32 %v4722, %v5181
      %v5214 = vadd.f32 %v4727, %v5182
      %v5215 = vadd.f32 %v4730, %v5183
      %v5216 = vmax.f32 %v5184, 0.0
      %v5217 = vmax.f32 %v5185, 0.0
      %v5218 = vmax.f32 %v5186, 0.0
      %v5219 = vmax.f32 %v5187, 0.0
      %v5220 = vmax.f32 %v5188, 0.0
      %v5221 = vmax.f32 %v5189, 0.0
      %v5222 = vmax.f32 %v5190, 0.0
      %v5223 = vmax.f32 %v5191, 0.0
      %v5224 = vmax.f32 %v5192, 0.0
      %v5225 = vmax.f32 %v5193, 0.0
      %v5226 = vmax.f32 %v5194, 0.0
      %v5227 = vmax.f32 %v5195, 0.0
      %v5228 = vmax.f32 %v5196, 0.0
      %v5229 = vmax.f32 %v5197, 0.0
      %v5230 = vmax.f32 %v5198, 0.0
      %v5231 = vmax.f32 %v5199, 0.0
      %v5232 = vmax.f32 %v5200, 0.0
      %v5233 = vmax.f32 %v5201, 0.0
      %v5234 = vmax.f32 %v5202, 0.0
      %v5235 = vmax.f32 %v5203, 0.0
      %v5236 = vmax.f32 %v5204, 0.0
      %v5237 = vmax.f32 %v5205, 0.0
      %v5238 = vmax.f32 %v5206, 0.0
      %v5239 = vmax.f32 %v5207, 0.0
      %v5240 = vmax.f32 %v5208, 0.0
      %v5241 = vmax.f32 %v5209, 0.0
      %v5242 = vmax.f32 %v5210, 0.0
      %v5243 = vmax.f32 %v5211, 0.0
      %v5244 = vmax.f32 %v5212, 0.0
      %v5245 = vmax.f32 %v5213, 0.0
      %v5246 = vmax.f32 %v5214, 0.0
      %v5247 = vmax.f32 %v5215, 0.0
      %5248 = vst [vmem:[%s224] sm:$0xff] %v5216
      %5249 = vst [vmem:[%s224 + $0x8] sm:$0xff] %v5217
      %5250 = vst [vmem:[%s224 + $0x10] sm:$0xff] %v5218
      %5251 = vst [vmem:[%s224 + $0x18] sm:$0xff] %v5219
      %5252 = vst [vmem:[%s224 + $0x20] sm:$0xff] %v5220
      %5253 = vst [vmem:[%s224 + $0x28] sm:$0xff] %v5221
      %5254 = vst [vmem:[%s224 + $0x30] sm:$0xff] %v5222
      %5255 = vst [vmem:[%s224 + $0x38] sm:$0xff] %v5223
      %5256 = vst [vmem:[%s224 + $0x40] sm:$0xff] %v5224
      %5257 = vst [vmem:[%s224 + $0x48] sm:$0xff] %v5225
      %5258 = vst [vmem:[%s224 + $0x50] sm:$0xff] %v5226
      %5259 = vst [vmem:[%s224 + $0x58] sm:$0xff] %v5227
      %5260 = vst [vmem:[%s224 + $0x60] sm:$0xff] %v5228
      %5261 = vst [vmem:[%s224 + $0x68] sm:$0xff] %v5229
      %5262 = vst [vmem:[%s224 + $0x70] sm:$0xff] %v5230
      %5263 = vst [vmem:[%s224 + $0x78] sm:$0xff] %v5231
      %5264 = vst [vmem:[%s224 + $0x80] sm:$0xff] %v5232
      %5265 = vst [vmem:[%s224 + $0x88] sm:$0xff] %v5233
      %5266 = vst [vmem:[%s224 + $0x90] sm:$0xff] %v5234
      %5267 = vst [vmem:[%s224 + $0x98] sm:$0xff] %v5235
      %5268 = vst [vmem:[%s224 + $0xa0] sm:$0xff] %v5236
      %5269 = vst [vmem:[%s224 + $0xa8] sm:$0xff] %v5237
      %5270 = vst [vmem:[%s224 + $0xb0] sm:$0xff] %v5238
      %5271 = vst [vmem:[%s224 + $0xb8] sm:$0xff] %v5239
      %5272 = vst [vmem:[%s224 + $0xc0] sm:$0xff] %v5240
      %5273 = vst [vmem:[%s224 + $0xc8] sm:$0xff] %v5241
      %5274 = vst [vmem:[%s224 + $0xd0] sm:$0xff] %v5242
      %5275 = vst [vmem:[%s224 + $0xd8] sm:$0xff] %v5243
      %5276 = vst [vmem:[%s224 + $0xe0] sm:$0xff] %v5244
      %5277 = vst [vmem:[%s224 + $0xe8] sm:$0xff] %v5245
      %5278 = vst [vmem:[%s224 + $0xf0] sm:$0xff] %v5246
      %5279 = vst [vmem:[%s224 + $0xf8] sm:$0xff] %v5247
      %p5280 = scmp.lt.s32.totalorder %s16, 1
      %s5281 = scalar_select %p5280, %s16, 1
      %s5282 = smul.addr %s5281, 32
      %s5283 = smul.addr %s5282, 8
      %s5284 = scalar_lea.vmem %s5, %s5283
      // Predicated region
      $region41: #{basic_block_pallas.1} parent=39 // pred_check
        %p5285 = pneg %p144
      $region42: #{basic_block_pallas.1} parent=39 // pred_check_branch
        %5287 = sbr.rel (%p5285) target = $region44
      $region43: #{basic_block_pallas.1} parent=39 // pred_region
        _
      $region44: #{basic_block_pallas.1} parent=39 // pred_fallthru
        _
    $region40: #{basic_block_pallas.1} parent=5 // pred_fallthru
      _
    %p5288 = scmp.le.s32.totalorder 2, %s11
    // Predicated region
    $region45: #{basic_block_pallas.1} parent=5 // pred_check
      %p5289 = pneg %p5288
    $region46: #{basic_block_pallas.1} parent=5 // pred_check_branch
      %5291 = sbr.rel (%p5289) target = $region48
    $region47: #{basic_block_pallas.1} parent=5 // pred_region
      %s5292 = ssub.s32 %s11, 2
      // Predicated region
      $region49: #{basic_block_pallas.1} parent=47 // pred_check
        %p5293 = pneg %p150
      $region50: #{basic_block_pallas.1} parent=47 // pred_check_branch
        %5295 = sbr.rel (%p5293) target = $region52
      $region51: #{basic_block_pallas.1} parent=47 // pred_region
        %p5296 = scmp.lt.s32.totalorder %s17, 1
        %s5297 = scalar_select %p5296, %s17, 1
        %s5298 = smul.addr %s5297, 32
        %s5299 = smul.addr %s5298, 8
        %s5300 = scalar_lea.vmem %s5, %s5299
      $region52: #{basic_block_pallas.1} parent=47 // pred_fallthru
        _
    $region48: #{basic_block_pallas.1} parent=5 // pred_fallthru
      _
  $region6: #{basic_block_pallas.1} parent=0 // loop_footer
    %s15 = sadd.s32 1, %s11
  $region7: #{basic_block_pallas.1} parent=0 // loop_footer_branch
    %10 = sbr.rel target = $region3
  $region8: #{basic_block_pallas.1} parent=0 // loop_exit
    _

</llo_original>
